<compile_context>
chip_gen: v5e
topology: v5e:2x2
jax: 0.10.0
libtpu: 0.0.40
codegen_flags: <defaults>
</compile_context>

<pallas_src>
import functools

import jax
import jax.numpy as jnp
from jax.experimental import pallas as pl
from jax.experimental.pallas import tpu as pltpu


def _conv3x3_flat(act, w, b, col_first, col_last, n, width, relu):
    """One 3x3 'same' conv as a single im2col matmul on (C, H*W)-flattened values.

    act: (Cin, n) bf16   w: (Cout, 9*Cin) bf16   b: (Cout, 1) f32
    returns (Cout, n) f32
    """
    c = act.shape[0]
    zpad = jnp.zeros((c, width + 1), act.dtype)
    apad = jnp.concatenate([zpad, act, zpad], axis=1)          # (c, n + 2*W + 2)
    taps = []
    for dy in range(3):
        for dx in range(3):
            off = dy * width + dx                              # shift (dy-1, dx-1) in flat index
            t = apad[:, off:off + n]                           # (c, n) bf16
            if dx == 0:                                        # reads column w-1: zero at w == 0
                t = jnp.where(col_first, 0.0, t)
            elif dx == 2:                                      # reads column w+1: zero at w == W-1
                t = jnp.where(col_last, 0.0, t)
            taps.append(t)
    patches = jnp.concatenate(taps, axis=0)                    # (9*c, n) bf16
    acc = jnp.dot(w, patches, preferred_element_type=jnp.float32)   # MXU, (Cout, n) f32
    acc = acc + b                                              # lane-dense f32 epilogue
    if relu:
        acc = jnp.maximum(acc, 0.0)
    return acc


def _fused_restoration_kernel(x_ref, w1_ref, b1_ref, w2_ref, b2_ref, w3_ref, b3_ref,
                              w4_ref, b4_ref, o_ref, *, width):
    n = o_ref.shape[-1]                                        # H * W (flattened pixels)

    # Per-column edge masks, shared by all layers / taps (lane-indexed).
    col = jax.lax.broadcasted_iota(jnp.int32, (1, n), 1) % width
    col_first = col == 0
    col_last = col == width - 1

    # Input image: (3, n) f32 -> bf16, channel-padded 3 -> 8 (matching zero weight cols).
    x = x_ref[...].astype(jnp.bfloat16)
    x = jnp.concatenate([x, jnp.zeros((5, n), jnp.bfloat16)], axis=0)    # (8, n)

    a = _conv3x3_flat(x, w1_ref[...], b1_ref[...], col_first, col_last, n, width, True)
    a = a.astype(jnp.bfloat16)                                 # (64, n)
    a = _conv3x3_flat(a, w2_ref[...], b2_ref[...], col_first, col_last, n, width, True)
    a = a.astype(jnp.bfloat16)
    a = _conv3x3_flat(a, w3_ref[...], b3_ref[...], col_first, col_last, n, width, True)
    a = a.astype(jnp.bfloat16)
    out = _conv3x3_flat(a, w4_ref[...], b4_ref[...], col_first, col_last, n, width, False)
    o_ref[...] = out[0:3, :]                                   # drop the 5 padded output rows


def _compiler_params():
    kwargs = dict(dimension_semantics=("parallel",))
    try:
        cap = getattr(pltpu.get_tpu_info(), "vmem_capacity_bytes", None)
        if cap:
            # ~3/4 of physical VMEM: ~96 MiB on v5e/v6e, ~48 MiB on v7x.
            kwargs["vmem_limit_bytes"] = int(min(cap * 3 // 4, 100 * 2 ** 20))
    except Exception:
        pass
    return pltpu.CompilerParams(**kwargs)


def image_restoration_forward(x_nchw, prepared):
    """Forward matching the PyTorch module. x_nchw: (B,3,H,W) f32 -> (B,3,H,W) f32."""
    w1, b1, w2, b2, w3, b3, w4, b4 = prepared
    B, C, H, W = x_nchw.shape
    n = H * W
    x_flat = x_nchw.reshape(B, C, n)                           # free row-major view (no copy)

    out_flat = pl.pallas_call(
        functools.partial(_fused_restoration_kernel, width=W),
        out_shape=jax.ShapeDtypeStruct((B, 3, n), jnp.float32),
        grid=(B,),
        in_specs=[
            pl.BlockSpec((None, C, n), lambda b: (b, 0, 0)),   # input image (batch-squeezed)
            pl.BlockSpec((64, 72), lambda b: (0, 0)),          # conv1 weight (resident)
            pl.BlockSpec((64, 1), lambda b: (0, 0)),
            pl.BlockSpec((64, 576), lambda b: (0, 0)),         # conv2
            pl.BlockSpec((64, 1), lambda b: (0, 0)),
            pl.BlockSpec((64, 576), lambda b: (0, 0)),         # conv3
            pl.BlockSpec((64, 1), lambda b: (0, 0)),
            pl.BlockSpec((8, 576), lambda b: (0, 0)),          # conv4 (slim, 3->8 rows)
            pl.BlockSpec((8, 1), lambda b: (0, 0)),
        ],
        out_specs=pl.BlockSpec((None, 3, n), lambda b: (b, 0, 0)),
        compiler_params=_compiler_params(),
    )(x_flat, w1, b1, w2, b2, w3, b3, w4, b4)

    return out_flat.reshape(B, 3, H, W)                        # free view back to NCHW


def init_params(key):
    """Deterministic synthetic parameters (PyTorch OIHW layout), fan-in scaled."""
    shapes = [
        (64, 3, 3, 3),    # conv1
        (64, 64, 3, 3),   # conv2
        (64, 64, 3, 3),   # conv3
        (3, 64, 3, 3),    # conv4
    ]
    params = []
    for i, shp in enumerate(shapes):
        kw, kb = jax.random.split(jax.random.fold_in(key, i))
        fan_in = shp[1] * shp[2] * shp[3]
        bound = 1.0 / jnp.sqrt(fan_in)
        w = jax.random.uniform(kw, shp, jnp.float32, -bound, bound)
        b = jax.random.uniform(kb, (shp[0],), jnp.float32, -bound, bound)
        params.append((w, b))
    return params


def prepare_params(params):
    """One-time repack (outside jit): OIHW -> (Cout, 9*Cin) bf16, bias -> (Cout,1) f32."""
    def pack_w(w_oihw, cin_pad=None, cout_pad=None):
        w = jnp.transpose(w_oihw, (0, 2, 3, 1))                # (O, KH, KW, I)
        if cin_pad is not None:
            w = jnp.pad(w, ((0, 0), (0, 0), (0, 0), (0, cin_pad - w.shape[3])))
        o = w.shape[0]
        w = w.reshape(o, -1)                                   # columns ordered (ky, kx, cin)
        if cout_pad is not None:
            w = jnp.pad(w, ((0, cout_pad - o), (0, 0)))
        return w.astype(jnp.bfloat16)

    def pack_b(b, cout_pad=None):
        if cout_pad is not None:
            b = jnp.pad(b, (0, cout_pad - b.shape[0]))
        return b.reshape(-1, 1).astype(jnp.float32)

    (w1, b1), (w2, b2), (w3, b3), (w4, b4) = params
    return (pack_w(w1, cin_pad=8), pack_b(b1),                 # (64, 72),  (64, 1)
            pack_w(w2),            pack_b(b2),                 # (64, 576), (64, 1)
            pack_w(w3),            pack_b(b3),                 # (64, 576), (64, 1)
            pack_w(w4, cout_pad=8), pack_b(b4, cout_pad=8))    # (8, 576),  (8, 1)


def _reference_forward(x_nchw, params):
    """Pure-JAX reference (lax conv, f32) for the correctness check."""
    x = x_nchw
    relu_flags = [True, True, True, False]
    for (w, b), relu in zip(params, relu_flags):
        x = jax.lax.conv_general_dilated(
            x, w, window_strides=(1, 1), padding=((1, 1), (1, 1)),
            dimension_numbers=("NCHW", "OIHW", "NCHW"))
        x = x + b[None, :, None, None]
        if relu:
            x = jnp.maximum(x, 0.0)
    return x


if __name__ == "__main__":
    key = jax.random.PRNGKey(0)
    k_x, k_p = jax.random.split(key)

    B, C, H, W = 2, 3, 16, 16
    x = jax.random.normal(k_x, (B, C, H, W), jnp.float32)
    params = init_params(k_p)
    prepared = prepare_params(params)          # one-time weight repack, outside jit

    fwd = jax.jit(image_restoration_forward)
    out = jax.block_until_ready(fwd(x, prepared))

    ref = _reference_forward(x, params)
    assert out.shape == (B, C, H, W)
    # bf16 MXU operands / bf16 inter-layer activations (f32 accumulation) -> small
    # deviation from the pure-f32 reference.
    max_err = float(jnp.max(jnp.abs(out - ref)))
    assert jnp.allclose(out, ref, atol=3e-2, rtol=3e-2), max_err

    print("KERNEL_OK")
</pallas_src>

<mosaic_0001>
module attributes {stable_mosaic.version = 11 : i64} {
  func.func @_fused_restoration_kernel(%arg0: i32, %arg1: memref<1x3x256xf32, #tpu.memory_space<vmem>>, %arg2: memref<64x72xbf16, #tpu.memory_space<vmem>>, %arg3: memref<64x1xf32, #tpu.memory_space<vmem>>, %arg4: memref<64x576xbf16, #tpu.memory_space<vmem>>, %arg5: memref<64x1xf32, #tpu.memory_space<vmem>>, %arg6: memref<64x576xbf16, #tpu.memory_space<vmem>>, %arg7: memref<64x1xf32, #tpu.memory_space<vmem>>, %arg8: memref<8x576xbf16, #tpu.memory_space<vmem>>, %arg9: memref<8x1xf32, #tpu.memory_space<vmem>>, %arg10: memref<1x3x256xf32, #tpu.memory_space<vmem>>) attributes {dimension_semantics = [#tpu.dimension_semantics<parallel>], iteration_bounds = array<i64: 2>, scalar_prefetch = 0 : i64, scratch_operands = 0 : i64, tpu.core_type = #tpu.core_type<tc>, window_params = [{transform_indices = @transform_0, window_bounds = array<i64: 1, 3, 256>}, {pipeline_mode = #tpu.pipeline_mode<synchronous>, transform_indices = @transform_1, window_bounds = array<i64: 64, 72>}, {pipeline_mode = #tpu.pipeline_mode<synchronous>, transform_indices = @transform_2, window_bounds = array<i64: 64, 1>}, {pipeline_mode = #tpu.pipeline_mode<synchronous>, transform_indices = @transform_3, window_bounds = array<i64: 64, 576>}, {pipeline_mode = #tpu.pipeline_mode<synchronous>, transform_indices = @transform_4, window_bounds = array<i64: 64, 1>}, {pipeline_mode = #tpu.pipeline_mode<synchronous>, transform_indices = @transform_5, window_bounds = array<i64: 64, 576>}, {pipeline_mode = #tpu.pipeline_mode<synchronous>, transform_indices = @transform_6, window_bounds = array<i64: 64, 1>}, {pipeline_mode = #tpu.pipeline_mode<synchronous>, transform_indices = @transform_7, window_bounds = array<i64: 8, 576>}, {pipeline_mode = #tpu.pipeline_mode<synchronous>, transform_indices = @transform_8, window_bounds = array<i64: 8, 1>}, {transform_indices = @transform_9, window_bounds = array<i64: 1, 3, 256>}]} {
    %0 = tpu.iota {dimensions = array<i32: 1>} : vector<1x256xi32>
    %c16_i32 = arith.constant 16 : i32
    %c0_i32 = arith.constant 0 : i32
    %1 = arith.cmpi eq, %c16_i32, %c0_i32 : i32
    %c1_i32 = arith.constant 1 : i32
    %2 = arith.select %1, %c1_i32, %c16_i32 : i32
    %3 = vector.broadcast %2 : i32 to vector<1x256xi32>
    %4 = arith.remsi %0, %3 : vector<1x256xi32>
    %c0_i32_0 = arith.constant 0 : i32
    %5 = vector.broadcast %c0_i32_0 : i32 to vector<1x256xi32>
    %6 = arith.cmpi ne, %4, %5 : vector<1x256xi32>
    %c0_i32_1 = arith.constant 0 : i32
    %7 = vector.broadcast %c0_i32_1 : i32 to vector<1x256xi32>
    %8 = arith.cmpi slt, %4, %7 : vector<1x256xi32>
    %c0_i32_2 = arith.constant 0 : i32
    %9 = arith.cmpi slt, %2, %c0_i32_2 : i32
    %10 = vector.broadcast %9 : i1 to vector<1x256xi1>
    %11 = vector.broadcast %10 : vector<1x256xi1> to vector<1x256xi1>
    %12 = arith.xori %8, %11 : vector<1x256xi1>
    %13 = arith.andi %12, %6 : vector<1x256xi1>
    %14 = vector.broadcast %2 : i32 to vector<1x256xi32>
    %15 = arith.addi %4, %14 : vector<1x256xi32>
    %16 = arith.select %13, %15, %4 : vector<1x256xi1>, vector<1x256xi32>
    %c0_i32_3 = arith.constant 0 : i32
    %17 = vector.broadcast %c0_i32_3 : i32 to vector<1x256xi32>
    %18 = arith.cmpi eq, %16, %17 : vector<1x256xi32>
    %c15_i32 = arith.constant 15 : i32
    %19 = vector.broadcast %c15_i32 : i32 to vector<1x256xi32>
    %20 = arith.cmpi eq, %16, %19 : vector<1x256xi32>
    %c0 = arith.constant 0 : index
    %c0_4 = arith.constant 0 : index
    %c0_5 = arith.constant 0 : index
    %21 = vector.load %arg1[%c0, %c0_4, %c0_5] : memref<1x3x256xf32, #tpu.memory_space<vmem>>, vector<1x3x256xf32>
    %22 = vector.shape_cast %21 : vector<1x3x256xf32> to vector<3x256xf32>
    %23 = arith.truncf %22 : vector<3x256xf32> to vector<3x256xbf16>
    %cst = arith.constant 0.000000e+00 : bf16
    %24 = vector.broadcast %cst : bf16 to vector<5x256xbf16>
    %25 = tpu.concatenate %23, %24 in 0 : vector<3x256xbf16>, vector<5x256xbf16> -> vector<8x256xbf16>
    %c0_6 = arith.constant 0 : index
    %c0_7 = arith.constant 0 : index
    %26 = vector.load %arg2[%c0_6, %c0_7] : memref<64x72xbf16, #tpu.memory_space<vmem>>, vector<64x72xbf16>
    %c0_8 = arith.constant 0 : index
    %c0_9 = arith.constant 0 : index
    %27 = vector.load %arg3[%c0_8, %c0_9] : memref<64x1xf32, #tpu.memory_space<vmem>>, vector<64x1xf32>
    %cst_10 = arith.constant 0.000000e+00 : bf16
    %28 = vector.broadcast %cst_10 : bf16 to vector<8x17xbf16>
    %29 = tpu.concatenate %28, %25, %28 in 1 : vector<8x17xbf16>, vector<8x256xbf16>, vector<8x17xbf16> -> vector<8x290xbf16>
    %30 = vector.extract_strided_slice %29 {offsets = [0, 0], sizes = [8, 256], strides = [1, 1]} : vector<8x290xbf16> to vector<8x256xbf16>
    %cst_11 = arith.constant 0.000000e+00 : f32
    %31 = arith.truncf %cst_11 : f32 to bf16
    %32 = vector.shape_cast %18 : vector<1x256xi1> to vector<1x256xi1>
    %33 = vector.broadcast %32 : vector<1x256xi1> to vector<8x256xi1>
    %34 = vector.broadcast %31 : bf16 to vector<8x256xbf16>
    %35 = arith.select %33, %34, %30 : vector<8x256xi1>, vector<8x256xbf16>
    %36 = vector.extract_strided_slice %29 {offsets = [0, 1], sizes = [8, 256], strides = [1, 1]} : vector<8x290xbf16> to vector<8x256xbf16>
    %37 = vector.extract_strided_slice %29 {offsets = [0, 2], sizes = [8, 256], strides = [1, 1]} : vector<8x290xbf16> to vector<8x256xbf16>
    %cst_12 = arith.constant 0.000000e+00 : f32
    %38 = arith.truncf %cst_12 : f32 to bf16
    %39 = vector.shape_cast %20 : vector<1x256xi1> to vector<1x256xi1>
    %40 = vector.broadcast %39 : vector<1x256xi1> to vector<8x256xi1>
    %41 = vector.broadcast %38 : bf16 to vector<8x256xbf16>
    %42 = arith.select %40, %41, %37 : vector<8x256xi1>, vector<8x256xbf16>
    %43 = vector.extract_strided_slice %29 {offsets = [0, 16], sizes = [8, 256], strides = [1, 1]} : vector<8x290xbf16> to vector<8x256xbf16>
    %cst_13 = arith.constant 0.000000e+00 : f32
    %44 = arith.truncf %cst_13 : f32 to bf16
    %45 = vector.shape_cast %18 : vector<1x256xi1> to vector<1x256xi1>
    %46 = vector.broadcast %45 : vector<1x256xi1> to vector<8x256xi1>
    %47 = vector.broadcast %44 : bf16 to vector<8x256xbf16>
    %48 = arith.select %46, %47, %43 : vector<8x256xi1>, vector<8x256xbf16>
    %49 = vector.extract_strided_slice %29 {offsets = [0, 17], sizes = [8, 256], strides = [1, 1]} : vector<8x290xbf16> to vector<8x256xbf16>
    %50 = vector.extract_strided_slice %29 {offsets = [0, 18], sizes = [8, 256], strides = [1, 1]} : vector<8x290xbf16> to vector<8x256xbf16>
    %cst_14 = arith.constant 0.000000e+00 : f32
    %51 = arith.truncf %cst_14 : f32 to bf16
    %52 = vector.shape_cast %20 : vector<1x256xi1> to vector<1x256xi1>
    %53 = vector.broadcast %52 : vector<1x256xi1> to vector<8x256xi1>
    %54 = vector.broadcast %51 : bf16 to vector<8x256xbf16>
    %55 = arith.select %53, %54, %50 : vector<8x256xi1>, vector<8x256xbf16>
    %56 = vector.extract_strided_slice %29 {offsets = [0, 32], sizes = [8, 256], strides = [1, 1]} : vector<8x290xbf16> to vector<8x256xbf16>
    %cst_15 = arith.constant 0.000000e+00 : f32
    %57 = arith.truncf %cst_15 : f32 to bf16
    %58 = vector.shape_cast %18 : vector<1x256xi1> to vector<1x256xi1>
    %59 = vector.broadcast %58 : vector<1x256xi1> to vector<8x256xi1>
    %60 = vector.broadcast %57 : bf16 to vector<8x256xbf16>
    %61 = arith.select %59, %60, %56 : vector<8x256xi1>, vector<8x256xbf16>
    %62 = vector.extract_strided_slice %29 {offsets = [0, 33], sizes = [8, 256], strides = [1, 1]} : vector<8x290xbf16> to vector<8x256xbf16>
    %63 = vector.extract_strided_slice %29 {offsets = [0, 34], sizes = [8, 256], strides = [1, 1]} : vector<8x290xbf16> to vector<8x256xbf16>
    %cst_16 = arith.constant 0.000000e+00 : f32
    %64 = arith.truncf %cst_16 : f32 to bf16
    %65 = vector.shape_cast %20 : vector<1x256xi1> to vector<1x256xi1>
    %66 = vector.broadcast %65 : vector<1x256xi1> to vector<8x256xi1>
    %67 = vector.broadcast %64 : bf16 to vector<8x256xbf16>
    %68 = arith.select %66, %67, %63 : vector<8x256xi1>, vector<8x256xbf16>
    %69 = tpu.concatenate %35, %36, %42, %48, %49, %55, %61, %62, %68 in 0 : vector<8x256xbf16>, vector<8x256xbf16>, vector<8x256xbf16>, vector<8x256xbf16>, vector<8x256xbf16>, vector<8x256xbf16>, vector<8x256xbf16>, vector<8x256xbf16>, vector<8x256xbf16> -> vector<72x256xbf16>
    %cst_17 = arith.constant dense<0.000000e+00> : vector<64x256xf32>
    %70 = tpu.matmul %26, %69, %cst_17 {dimension_numbers = #tpu.dot_dimension_numbers<[1], [0], [0], [1], [0, 0, 1, 1], [], []>} : vector<64x72xbf16>, vector<72x256xbf16>, vector<64x256xf32> -> vector<64x256xf32>
    %71 = vector.broadcast %27 : vector<64x1xf32> to vector<64x256xf32>
    %72 = arith.addf %70, %71 : vector<64x256xf32>
    %cst_18 = arith.constant 0.000000e+00 : f32
    %73 = vector.broadcast %cst_18 : f32 to vector<64x256xf32>
    %74 = arith.maximumf %72, %73 : vector<64x256xf32>
    %75 = arith.truncf %74 : vector<64x256xf32> to vector<64x256xbf16>
    %c0_19 = arith.constant 0 : index
    %c0_20 = arith.constant 0 : index
    %76 = vector.load %arg4[%c0_19, %c0_20] : memref<64x576xbf16, #tpu.memory_space<vmem>>, vector<64x576xbf16>
    %c0_21 = arith.constant 0 : index
    %c0_22 = arith.constant 0 : index
    %77 = vector.load %arg5[%c0_21, %c0_22] : memref<64x1xf32, #tpu.memory_space<vmem>>, vector<64x1xf32>
    %cst_23 = arith.constant 0.000000e+00 : bf16
    %78 = vector.broadcast %cst_23 : bf16 to vector<64x17xbf16>
    %79 = tpu.concatenate %78, %75, %78 in 1 : vector<64x17xbf16>, vector<64x256xbf16>, vector<64x17xbf16> -> vector<64x290xbf16>
    %80 = vector.extract_strided_slice %79 {offsets = [0, 0], sizes = [64, 256], strides = [1, 1]} : vector<64x290xbf16> to vector<64x256xbf16>
    %cst_24 = arith.constant 0.000000e+00 : f32
    %81 = arith.truncf %cst_24 : f32 to bf16
    %82 = vector.shape_cast %18 : vector<1x256xi1> to vector<1x256xi1>
    %83 = vector.broadcast %82 : vector<1x256xi1> to vector<64x256xi1>
    %84 = vector.broadcast %81 : bf16 to vector<64x256xbf16>
    %85 = arith.select %83, %84, %80 : vector<64x256xi1>, vector<64x256xbf16>
    %86 = vector.extract_strided_slice %79 {offsets = [0, 1], sizes = [64, 256], strides = [1, 1]} : vector<64x290xbf16> to vector<64x256xbf16>
    %87 = vector.extract_strided_slice %79 {offsets = [0, 2], sizes = [64, 256], strides = [1, 1]} : vector<64x290xbf16> to vector<64x256xbf16>
    %cst_25 = arith.constant 0.000000e+00 : f32
    %88 = arith.truncf %cst_25 : f32 to bf16
    %89 = vector.shape_cast %20 : vector<1x256xi1> to vector<1x256xi1>
    %90 = vector.broadcast %89 : vector<1x256xi1> to vector<64x256xi1>
    %91 = vector.broadcast %88 : bf16 to vector<64x256xbf16>
    %92 = arith.select %90, %91, %87 : vector<64x256xi1>, vector<64x256xbf16>
    %93 = vector.extract_strided_slice %79 {offsets = [0, 16], sizes = [64, 256], strides = [1, 1]} : vector<64x290xbf16> to vector<64x256xbf16>
    %cst_26 = arith.constant 0.000000e+00 : f32
    %94 = arith.truncf %cst_26 : f32 to bf16
    %95 = vector.shape_cast %18 : vector<1x256xi1> to vector<1x256xi1>
    %96 = vector.broadcast %95 : vector<1x256xi1> to vector<64x256xi1>
    %97 = vector.broadcast %94 : bf16 to vector<64x256xbf16>
    %98 = arith.select %96, %97, %93 : vector<64x256xi1>, vector<64x256xbf16>
    %99 = vector.extract_strided_slice %79 {offsets = [0, 17], sizes = [64, 256], strides = [1, 1]} : vector<64x290xbf16> to vector<64x256xbf16>
    %100 = vector.extract_strided_slice %79 {offsets = [0, 18], sizes = [64, 256], strides = [1, 1]} : vector<64x290xbf16> to vector<64x256xbf16>
    %cst_27 = arith.constant 0.000000e+00 : f32
    %101 = arith.truncf %cst_27 : f32 to bf16
    %102 = vector.shape_cast %20 : vector<1x256xi1> to vector<1x256xi1>
    %103 = vector.broadcast %102 : vector<1x256xi1> to vector<64x256xi1>
    %104 = vector.broadcast %101 : bf16 to vector<64x256xbf16>
    %105 = arith.select %103, %104, %100 : vector<64x256xi1>, vector<64x256xbf16>
    %106 = vector.extract_strided_slice %79 {offsets = [0, 32], sizes = [64, 256], strides = [1, 1]} : vector<64x290xbf16> to vector<64x256xbf16>
    %cst_28 = arith.constant 0.000000e+00 : f32
    %107 = arith.truncf %cst_28 : f32 to bf16
    %108 = vector.shape_cast %18 : vector<1x256xi1> to vector<1x256xi1>
    %109 = vector.broadcast %108 : vector<1x256xi1> to vector<64x256xi1>
    %110 = vector.broadcast %107 : bf16 to vector<64x256xbf16>
    %111 = arith.select %109, %110, %106 : vector<64x256xi1>, vector<64x256xbf16>
    %112 = vector.extract_strided_slice %79 {offsets = [0, 33], sizes = [64, 256], strides = [1, 1]} : vector<64x290xbf16> to vector<64x256xbf16>
    %113 = vector.extract_strided_slice %79 {offsets = [0, 34], sizes = [64, 256], strides = [1, 1]} : vector<64x290xbf16> to vector<64x256xbf16>
    %cst_29 = arith.constant 0.000000e+00 : f32
    %114 = arith.truncf %cst_29 : f32 to bf16
    %115 = vector.shape_cast %20 : vector<1x256xi1> to vector<1x256xi1>
    %116 = vector.broadcast %115 : vector<1x256xi1> to vector<64x256xi1>
    %117 = vector.broadcast %114 : bf16 to vector<64x256xbf16>
    %118 = arith.select %116, %117, %113 : vector<64x256xi1>, vector<64x256xbf16>
    %119 = tpu.concatenate %85, %86, %92, %98, %99, %105, %111, %112, %118 in 0 : vector<64x256xbf16>, vector<64x256xbf16>, vector<64x256xbf16>, vector<64x256xbf16>, vector<64x256xbf16>, vector<64x256xbf16>, vector<64x256xbf16>, vector<64x256xbf16>, vector<64x256xbf16> -> vector<576x256xbf16>
    %cst_30 = arith.constant dense<0.000000e+00> : vector<64x256xf32>
    %120 = tpu.matmul %76, %119, %cst_30 {dimension_numbers = #tpu.dot_dimension_numbers<[1], [0], [0], [1], [0, 0, 1, 1], [], []>} : vector<64x576xbf16>, vector<576x256xbf16>, vector<64x256xf32> -> vector<64x256xf32>
    %121 = vector.broadcast %77 : vector<64x1xf32> to vector<64x256xf32>
    %122 = arith.addf %120, %121 : vector<64x256xf32>
    %cst_31 = arith.constant 0.000000e+00 : f32
    %123 = vector.broadcast %cst_31 : f32 to vector<64x256xf32>
    %124 = arith.maximumf %122, %123 : vector<64x256xf32>
    %125 = arith.truncf %124 : vector<64x256xf32> to vector<64x256xbf16>
    %c0_32 = arith.constant 0 : index
    %c0_33 = arith.constant 0 : index
    %126 = vector.load %arg6[%c0_32, %c0_33] : memref<64x576xbf16, #tpu.memory_space<vmem>>, vector<64x576xbf16>
    %c0_34 = arith.constant 0 : index
    %c0_35 = arith.constant 0 : index
    %127 = vector.load %arg7[%c0_34, %c0_35] : memref<64x1xf32, #tpu.memory_space<vmem>>, vector<64x1xf32>
    %cst_36 = arith.constant 0.000000e+00 : bf16
    %128 = vector.broadcast %cst_36 : bf16 to vector<64x17xbf16>
    %129 = tpu.concatenate %128, %125, %128 in 1 : vector<64x17xbf16>, vector<64x256xbf16>, vector<64x17xbf16> -> vector<64x290xbf16>
    %130 = vector.extract_strided_slice %129 {offsets = [0, 0], sizes = [64, 256], strides = [1, 1]} : vector<64x290xbf16> to vector<64x256xbf16>
    %cst_37 = arith.constant 0.000000e+00 : f32
    %131 = arith.truncf %cst_37 : f32 to bf16
    %132 = vector.shape_cast %18 : vector<1x256xi1> to vector<1x256xi1>
    %133 = vector.broadcast %132 : vector<1x256xi1> to vector<64x256xi1>
    %134 = vector.broadcast %131 : bf16 to vector<64x256xbf16>
    %135 = arith.select %133, %134, %130 : vector<64x256xi1>, vector<64x256xbf16>
    %136 = vector.extract_strided_slice %129 {offsets = [0, 1], sizes = [64, 256], strides = [1, 1]} : vector<64x290xbf16> to vector<64x256xbf16>
    %137 = vector.extract_strided_slice %129 {offsets = [0, 2], sizes = [64, 256], strides = [1, 1]} : vector<64x290xbf16> to vector<64x256xbf16>
    %cst_38 = arith.constant 0.000000e+00 : f32
    %138 = arith.truncf %cst_38 : f32 to bf16
    %139 = vector.shape_cast %20 : vector<1x256xi1> to vector<1x256xi1>
    %140 = vector.broadcast %139 : vector<1x256xi1> to vector<64x256xi1>
    %141 = vector.broadcast %138 : bf16 to vector<64x256xbf16>
    %142 = arith.select %140, %141, %137 : vector<64x256xi1>, vector<64x256xbf16>
    %143 = vector.extract_strided_slice %129 {offsets = [0, 16], sizes = [64, 256], strides = [1, 1]} : vector<64x290xbf16> to vector<64x256xbf16>
    %cst_39 = arith.constant 0.000000e+00 : f32
    %144 = arith.truncf %cst_39 : f32 to bf16
    %145 = vector.shape_cast %18 : vector<1x256xi1> to vector<1x256xi1>
    %146 = vector.broadcast %145 : vector<1x256xi1> to vector<64x256xi1>
    %147 = vector.broadcast %144 : bf16 to vector<64x256xbf16>
    %148 = arith.select %146, %147, %143 : vector<64x256xi1>, vector<64x256xbf16>
    %149 = vector.extract_strided_slice %129 {offsets = [0, 17], sizes = [64, 256], strides = [1, 1]} : vector<64x290xbf16> to vector<64x256xbf16>
    %150 = vector.extract_strided_slice %129 {offsets = [0, 18], sizes = [64, 256], strides = [1, 1]} : vector<64x290xbf16> to vector<64x256xbf16>
    %cst_40 = arith.constant 0.000000e+00 : f32
    %151 = arith.truncf %cst_40 : f32 to bf16
    %152 = vector.shape_cast %20 : vector<1x256xi1> to vector<1x256xi1>
    %153 = vector.broadcast %152 : vector<1x256xi1> to vector<64x256xi1>
    %154 = vector.broadcast %151 : bf16 to vector<64x256xbf16>
    %155 = arith.select %153, %154, %150 : vector<64x256xi1>, vector<64x256xbf16>
    %156 = vector.extract_strided_slice %129 {offsets = [0, 32], sizes = [64, 256], strides = [1, 1]} : vector<64x290xbf16> to vector<64x256xbf16>
    %cst_41 = arith.constant 0.000000e+00 : f32
    %157 = arith.truncf %cst_41 : f32 to bf16
    %158 = vector.shape_cast %18 : vector<1x256xi1> to vector<1x256xi1>
    %159 = vector.broadcast %158 : vector<1x256xi1> to vector<64x256xi1>
    %160 = vector.broadcast %157 : bf16 to vector<64x256xbf16>
    %161 = arith.select %159, %160, %156 : vector<64x256xi1>, vector<64x256xbf16>
    %162 = vector.extract_strided_slice %129 {offsets = [0, 33], sizes = [64, 256], strides = [1, 1]} : vector<64x290xbf16> to vector<64x256xbf16>
    %163 = vector.extract_strided_slice %129 {offsets = [0, 34], sizes = [64, 256], strides = [1, 1]} : vector<64x290xbf16> to vector<64x256xbf16>
    %cst_42 = arith.constant 0.000000e+00 : f32
    %164 = arith.truncf %cst_42 : f32 to bf16
    %165 = vector.shape_cast %20 : vector<1x256xi1> to vector<1x256xi1>
    %166 = vector.broadcast %165 : vector<1x256xi1> to vector<64x256xi1>
    %167 = vector.broadcast %164 : bf16 to vector<64x256xbf16>
    %168 = arith.select %166, %167, %163 : vector<64x256xi1>, vector<64x256xbf16>
    %169 = tpu.concatenate %135, %136, %142, %148, %149, %155, %161, %162, %168 in 0 : vector<64x256xbf16>, vector<64x256xbf16>, vector<64x256xbf16>, vector<64x256xbf16>, vector<64x256xbf16>, vector<64x256xbf16>, vector<64x256xbf16>, vector<64x256xbf16>, vector<64x256xbf16> -> vector<576x256xbf16>
    %cst_43 = arith.constant dense<0.000000e+00> : vector<64x256xf32>
    %170 = tpu.matmul %126, %169, %cst_43 {dimension_numbers = #tpu.dot_dimension_numbers<[1], [0], [0], [1], [0, 0, 1, 1], [], []>} : vector<64x576xbf16>, vector<576x256xbf16>, vector<64x256xf32> -> vector<64x256xf32>
    %171 = vector.broadcast %127 : vector<64x1xf32> to vector<64x256xf32>
    %172 = arith.addf %170, %171 : vector<64x256xf32>
    %cst_44 = arith.constant 0.000000e+00 : f32
    %173 = vector.broadcast %cst_44 : f32 to vector<64x256xf32>
    %174 = arith.maximumf %172, %173 : vector<64x256xf32>
    %175 = arith.truncf %174 : vector<64x256xf32> to vector<64x256xbf16>
    %c0_45 = arith.constant 0 : index
    %c0_46 = arith.constant 0 : index
    %176 = vector.load %arg8[%c0_45, %c0_46] : memref<8x576xbf16, #tpu.memory_space<vmem>>, vector<8x576xbf16>
    %c0_47 = arith.constant 0 : index
    %c0_48 = arith.constant 0 : index
    %177 = vector.load %arg9[%c0_47, %c0_48] : memref<8x1xf32, #tpu.memory_space<vmem>>, vector<8x1xf32>
    %cst_49 = arith.constant 0.000000e+00 : bf16
    %178 = vector.broadcast %cst_49 : bf16 to vector<64x17xbf16>
    %179 = tpu.concatenate %178, %175, %178 in 1 : vector<64x17xbf16>, vector<64x256xbf16>, vector<64x17xbf16> -> vector<64x290xbf16>
    %180 = vector.extract_strided_slice %179 {offsets = [0, 0], sizes = [64, 256], strides = [1, 1]} : vector<64x290xbf16> to vector<64x256xbf16>
    %cst_50 = arith.constant 0.000000e+00 : f32
    %181 = arith.truncf %cst_50 : f32 to bf16
    %182 = vector.shape_cast %18 : vector<1x256xi1> to vector<1x256xi1>
    %183 = vector.broadcast %182 : vector<1x256xi1> to vector<64x256xi1>
    %184 = vector.broadcast %181 : bf16 to vector<64x256xbf16>
    %185 = arith.select %183, %184, %180 : vector<64x256xi1>, vector<64x256xbf16>
    %186 = vector.extract_strided_slice %179 {offsets = [0, 1], sizes = [64, 256], strides = [1, 1]} : vector<64x290xbf16> to vector<64x256xbf16>
    %187 = vector.extract_strided_slice %179 {offsets = [0, 2], sizes = [64, 256], strides = [1, 1]} : vector<64x290xbf16> to vector<64x256xbf16>
    %cst_51 = arith.constant 0.000000e+00 : f32
    %188 = arith.truncf %cst_51 : f32 to bf16
    %189 = vector.shape_cast %20 : vector<1x256xi1> to vector<1x256xi1>
    %190 = vector.broadcast %189 : vector<1x256xi1> to vector<64x256xi1>
    %191 = vector.broadcast %188 : bf16 to vector<64x256xbf16>
    %192 = arith.select %190, %191, %187 : vector<64x256xi1>, vector<64x256xbf16>
    %193 = vector.extract_strided_slice %179 {offsets = [0, 16], sizes = [64, 256], strides = [1, 1]} : vector<64x290xbf16> to vector<64x256xbf16>
    %cst_52 = arith.constant 0.000000e+00 : f32
    %194 = arith.truncf %cst_52 : f32 to bf16
    %195 = vector.shape_cast %18 : vector<1x256xi1> to vector<1x256xi1>
    %196 = vector.broadcast %195 : vector<1x256xi1> to vector<64x256xi1>
    %197 = vector.broadcast %194 : bf16 to vector<64x256xbf16>
    %198 = arith.select %196, %197, %193 : vector<64x256xi1>, vector<64x256xbf16>
    %199 = vector.extract_strided_slice %179 {offsets = [0, 17], sizes = [64, 256], strides = [1, 1]} : vector<64x290xbf16> to vector<64x256xbf16>
    %200 = vector.extract_strided_slice %179 {offsets = [0, 18], sizes = [64, 256], strides = [1, 1]} : vector<64x290xbf16> to vector<64x256xbf16>
    %cst_53 = arith.constant 0.000000e+00 : f32
    %201 = arith.truncf %cst_53 : f32 to bf16
    %202 = vector.shape_cast %20 : vector<1x256xi1> to vector<1x256xi1>
    %203 = vector.broadcast %202 : vector<1x256xi1> to vector<64x256xi1>
    %204 = vector.broadcast %201 : bf16 to vector<64x256xbf16>
    %205 = arith.select %203, %204, %200 : vector<64x256xi1>, vector<64x256xbf16>
    %206 = vector.extract_strided_slice %179 {offsets = [0, 32], sizes = [64, 256], strides = [1, 1]} : vector<64x290xbf16> to vector<64x256xbf16>
    %cst_54 = arith.constant 0.000000e+00 : f32
    %207 = arith.truncf %cst_54 : f32 to bf16
    %208 = vector.shape_cast %18 : vector<1x256xi1> to vector<1x256xi1>
    %209 = vector.broadcast %208 : vector<1x256xi1> to vector<64x256xi1>
    %210 = vector.broadcast %207 : bf16 to vector<64x256xbf16>
    %211 = arith.select %209, %210, %206 : vector<64x256xi1>, vector<64x256xbf16>
    %212 = vector.extract_strided_slice %179 {offsets = [0, 33], sizes = [64, 256], strides = [1, 1]} : vector<64x290xbf16> to vector<64x256xbf16>
    %213 = vector.extract_strided_slice %179 {offsets = [0, 34], sizes = [64, 256], strides = [1, 1]} : vector<64x290xbf16> to vector<64x256xbf16>
    %cst_55 = arith.constant 0.000000e+00 : f32
    %214 = arith.truncf %cst_55 : f32 to bf16
    %215 = vector.shape_cast %20 : vector<1x256xi1> to vector<1x256xi1>
    %216 = vector.broadcast %215 : vector<1x256xi1> to vector<64x256xi1>
    %217 = vector.broadcast %214 : bf16 to vector<64x256xbf16>
    %218 = arith.select %216, %217, %213 : vector<64x256xi1>, vector<64x256xbf16>
    %219 = tpu.concatenate %185, %186, %192, %198, %199, %205, %211, %212, %218 in 0 : vector<64x256xbf16>, vector<64x256xbf16>, vector<64x256xbf16>, vector<64x256xbf16>, vector<64x256xbf16>, vector<64x256xbf16>, vector<64x256xbf16>, vector<64x256xbf16>, vector<64x256xbf16> -> vector<576x256xbf16>
    %cst_56 = arith.constant dense<0.000000e+00> : vector<8x256xf32>
    %220 = tpu.matmul %176, %219, %cst_56 {dimension_numbers = #tpu.dot_dimension_numbers<[1], [0], [0], [1], [0, 0, 1, 1], [], []>} : vector<8x576xbf16>, vector<576x256xbf16>, vector<8x256xf32> -> vector<8x256xf32>
    %221 = vector.broadcast %177 : vector<8x1xf32> to vector<8x256xf32>
    %222 = arith.addf %220, %221 : vector<8x256xf32>
    %223 = vector.extract_strided_slice %222 {offsets = [0, 0], sizes = [3, 256], strides = [1, 1]} : vector<8x256xf32> to vector<3x256xf32>
    %c0_57 = arith.constant 0 : index
    %c0_58 = arith.constant 0 : index
    %c0_59 = arith.constant 0 : index
    %224 = vector.load %arg10[%c0_57, %c0_58, %c0_59] : memref<1x3x256xf32, #tpu.memory_space<vmem>>, vector<1x3x256xf32>
    %225 = vector.shape_cast %224 : vector<1x3x256xf32> to vector<3x256xf32>
    %226 = vector.shape_cast %223 : vector<3x256xf32> to vector<1x3x256xf32>
    tpu.vector_store %arg10[%c0_57, %c0_58, %c0_59], %226 {strides = array<i32>} : memref<1x3x256xf32, #tpu.memory_space<vmem>>, vector<1x3x256xf32>,
    return
  }
  func.func @transform_0(%arg0: i32) -> (i32, i32, i32) {
    %c0_i32 = arith.constant 0 : i32
    %c0_i32_0 = arith.constant 0 : i32
    %c0_i32_1 = arith.constant 0 : i32
    return %arg0, %c0_i32, %c0_i32_0 : i32, i32, i32
  }
  func.func @transform_1(%arg0: i32) -> (i32, i32) {
    %c0_i32 = arith.constant 0 : i32
    %c0_i32_0 = arith.constant 0 : i32
    %c0_i32_1 = arith.constant 0 : i32
    return %c0_i32, %c0_i32_0 : i32, i32
  }
  func.func @transform_2(%arg0: i32) -> (i32, i32) {
    %c0_i32 = arith.constant 0 : i32
    %c0_i32_0 = arith.constant 0 : i32
    %c0_i32_1 = arith.constant 0 : i32
    return %c0_i32, %c0_i32_0 : i32, i32
  }
  func.func @transform_3(%arg0: i32) -> (i32, i32) {
    %c0_i32 = arith.constant 0 : i32
    %c0_i32_0 = arith.constant 0 : i32
    %c0_i32_1 = arith.constant 0 : i32
    return %c0_i32, %c0_i32_0 : i32, i32
  }
  func.func @transform_4(%arg0: i32) -> (i32, i32) {
    %c0_i32 = arith.constant 0 : i32
    %c0_i32_0 = arith.constant 0 : i32
    %c0_i32_1 = arith.constant 0 : i32
    return %c0_i32, %c0_i32_0 : i32, i32
  }
  func.func @transform_5(%arg0: i32) -> (i32, i32) {
    %c0_i32 = arith.constant 0 : i32
    %c0_i32_0 = arith.constant 0 : i32
    %c0_i32_1 = arith.constant 0 : i32
    return %c0_i32, %c0_i32_0 : i32, i32
  }
  func.func @transform_6(%arg0: i32) -> (i32, i32) {
    %c0_i32 = arith.constant 0 : i32
    %c0_i32_0 = arith.constant 0 : i32
    %c0_i32_1 = arith.constant 0 : i32
    return %c0_i32, %c0_i32_0 : i32, i32
  }
  func.func @transform_7(%arg0: i32) -> (i32, i32) {
    %c0_i32 = arith.constant 0 : i32
    %c0_i32_0 = arith.constant 0 : i32
    %c0_i32_1 = arith.constant 0 : i32
    return %c0_i32, %c0_i32_0 : i32, i32
  }
  func.func @transform_8(%arg0: i32) -> (i32, i32) {
    %c0_i32 = arith.constant 0 : i32
    %c0_i32_0 = arith.constant 0 : i32
    %c0_i32_1 = arith.constant 0 : i32
    return %c0_i32, %c0_i32_0 : i32, i32
  }
  func.func @transform_9(%arg0: i32) -> (i32, i32, i32) {
    %c0_i32 = arith.constant 0 : i32
    %c0_i32_0 = arith.constant 0 : i32
    %c0_i32_1 = arith.constant 0 : i32
    return %arg0, %c0_i32, %c0_i32_0 : i32, i32, i32
  }
}

</mosaic_0001>

<llo_original>
// kernel: image_restoration_forward.1
$region0: #{image_restoration_forward.1}
  #allocation0 [shape = 'u32[]', space=smem, size = 0x4, offset = 0x4, fixed_abs, tag = 'smem constant byte address 0x4 - core index']
  #allocation1 [shape = 'u32[72,128]{1,0:T(1,128)}', space=vmem, size = 0x9000, scoped, tag = 'internal scratch']
  %s0 = inlined_call_operand.vmem [shape: f32[2,3,256], index: 0, kind: input, shape index: {}]
  %s1 = inlined_call_operand.vmem [shape: bf16[64,72], index: 1, kind: input, shape index: {}]
  %s2 = inlined_call_operand.vmem [shape: f32[64,1], index: 2, kind: input, shape index: {}]
  %s3 = inlined_call_operand.vmem [shape: bf16[64,576], index: 3, kind: input, shape index: {}]
  %s4 = inlined_call_operand.vmem [shape: f32[64,1], index: 4, kind: input, shape index: {}]
  %s5 = inlined_call_operand.hbm [shape: bf16[64,576], index: 5, kind: input, shape index: {}]
  %s6 = inlined_call_operand.vmem [shape: f32[64,1], index: 6, kind: input, shape index: {}]
  %s7 = inlined_call_operand.vmem [shape: bf16[8,576], index: 7, kind: input, shape index: {}]
  %s8 = inlined_call_operand.vmem [shape: f32[8,1], index: 8, kind: input, shape index: {}]
  %s9 = inlined_call_operand.vmem [shape: f32[2,3,256], index: 9, kind: output, shape index: {}]
  %s10 = sld [smem:[#allocation0]]
  $region73: #{image_restoration_forward.1} parent=0
    _
  %s12 = ssub.s32 1, %s10
  %s13 = scalar_select 0, %s12, %s10
  $region1: #{image_restoration_forward.1} parent=0
    #allocation2 [shape = 'u8[81920]{0}', space=vmem, size = 0x14000, scoped, tag = 'input window, operand 5, single buffered']
    #allocation3 [shape = 's32[2]{0}', space=sflag, size = 0x8, scoped, tag = 'scoped memory for image_restoration_forward.1']
    %14 = vsyncpa [#allocation3], 0
    loop: start=0, step=1, limit=4
    $region2: #{image_restoration_forward.1} parent=1 // loop_pre_header
      _
    $region3: #{image_restoration_forward.1} parent=1 // loop_header
      %s16 = sphi 0, %s20
      %p17 = scmp.ge.s32.totalorder %s16, 4
      %s26 = sphi 0, %s28
      %s29 = sphi 0, %s26
      %s30 = sphi 0, %s29
      %s46 = sphi 0, %s30
      %s50 = sphi 0, %s50
      %s52 = sphi 0, %s50
      %s53 = sphi 0, %s52
      %s67 = sphi 0, %s53
      %s71 = sphi 0, %s71
      %s73 = sphi 0, %s71
      %s74 = sphi 0, %s73
      %s88 = sphi 0, %s74
      %s92 = sphi 0, %s92
      %s94 = sphi 0, %s92
      %s95 = sphi 0, %s94
      %s109 = sphi 0, %s95
      %s113 = sphi 0, %s113
      %s115 = sphi 0, %s113
      %s116 = sphi 0, %s115
      %s130 = sphi 0, %s116
      %s134 = sphi 0, %s134
      %s136 = sphi 0, %s134
      %s137 = sphi 0, %s136
      %s151 = sphi 0, %s137
      %s155 = sphi 0, %s155
      %s157 = sphi 0, %s155
      %s158 = sphi 0, %s157
      %s172 = sphi 0, %s158
      %s176 = sphi 0, %s176
      %s178 = sphi 0, %s176
      %s179 = sphi 0, %s178
      %s193 = sphi 0, %s179
      %s197 = sphi 0, %s197
      %s199 = sphi 0, %s197
      %s200 = sphi 0, %s199
      %s214 = sphi 0, %s200
      %s220 = sphi 0, %s222
      %s223 = sphi 0, %s220
      %s224 = sphi 0, %s223
      %s240 = sphi 0, %s224
    $region4: #{image_restoration_forward.1} parent=1 // loop_header_branch
      %19 = sbr.rel (%p17) target = $region8
    $region5: #{image_restoration_forward.1} parent=1 // loop_body
      %s21 = ssub.s32 %s16, 1
      %s22 = ssub.s32 %s16, 2
      %s23 = sadd.s32 %s16, 1
      %s24 = ssub.s32 %s16, %s23
      %p25 = scmp.eq.s32.totalorder %s24, 0
      %s27 = sadd.s32 %s26, 1
      %s28 = scalar_select %p25, %s26, %s27
      %p31 = pneg %p25
      %p32 = scmp.eq.s32.totalorder %s16, 1
      %p33 = por %p31, %p32
      %p34 = scmp.ne.s32.totalorder %s26, %s29
      %p35 = scmp.eq.s32.totalorder %s16, 0
      %p36 = por %p34, %p35
      %p37 = scmp.ne.s32.totalorder %s26, %s29
      %p38 = scmp.eq.s32.totalorder %s21, 1
      %p39 = por %p37, %p38
      %p40 = scmp.ne.s32.totalorder %s29, %s30
      %p41 = scmp.eq.s32.totalorder %s21, 0
      %p42 = por %p40, %p41
      %p43 = scmp.ne.s32.totalorder %s29, %s30
      %p44 = scmp.eq.s32.totalorder %s22, 1
      %p45 = por %p43, %p44
      %p47 = scmp.ne.s32.totalorder %s30, %s46
      %p48 = scmp.eq.s32.totalorder %s22, 0
      %p49 = por %p47, %p48
      %s51 = sadd.s32 %s50, 1
      %p54 = scmp.eq.s32.totalorder %s16, 1
      %p55 = scmp.ne.s32.totalorder %s50, %s52
      %p56 = scmp.eq.s32.totalorder %s16, 0
      %p57 = por %p55, %p56
      %p58 = scmp.ne.s32.totalorder %s50, %s52
      %p59 = scmp.eq.s32.totalorder %s21, 1
      %p60 = por %p58, %p59
      %p61 = scmp.ne.s32.totalorder %s52, %s53
      %p62 = scmp.eq.s32.totalorder %s21, 0
      %p63 = por %p61, %p62
      %p64 = scmp.ne.s32.totalorder %s52, %s53
      %p65 = scmp.eq.s32.totalorder %s22, 1
      %p66 = por %p64, %p65
      %p68 = scmp.ne.s32.totalorder %s53, %s67
      %p69 = scmp.eq.s32.totalorder %s22, 0
      %p70 = por %p68, %p69
      %s72 = sadd.s32 %s71, 1
      %p75 = scmp.eq.s32.totalorder %s16, 1
      %p76 = scmp.ne.s32.totalorder %s71, %s73
      %p77 = scmp.eq.s32.totalorder %s16, 0
      %p78 = por %p76, %p77
      %p79 = scmp.ne.s32.totalorder %s71, %s73
      %p80 = scmp.eq.s32.totalorder %s21, 1
      %p81 = por %p79, %p80
      %p82 = scmp.ne.s32.totalorder %s73, %s74
      %p83 = scmp.eq.s32.totalorder %s21, 0
      %p84 = por %p82, %p83
      %p85 = scmp.ne.s32.totalorder %s73, %s74
      %p86 = scmp.eq.s32.totalorder %s22, 1
      %p87 = por %p85, %p86
      %p89 = scmp.ne.s32.totalorder %s74, %s88
      %p90 = scmp.eq.s32.totalorder %s22, 0
      %p91 = por %p89, %p90
      %s93 = sadd.s32 %s92, 1
      %p96 = scmp.eq.s32.totalorder %s16, 1
      %p97 = scmp.ne.s32.totalorder %s92, %s94
      %p98 = scmp.eq.s32.totalorder %s16, 0
      %p99 = por %p97, %p98
      %p100 = scmp.ne.s32.totalorder %s92, %s94
      %p101 = scmp.eq.s32.totalorder %s21, 1
      %p102 = por %p100, %p101
      %p103 = scmp.ne.s32.totalorder %s94, %s95
      %p104 = scmp.eq.s32.totalorder %s21, 0
      %p105 = por %p103, %p104
      %p106 = scmp.ne.s32.totalorder %s94, %s95
      %p107 = scmp.eq.s32.totalorder %s22, 1
      %p108 = por %p106, %p107
      %p110 = scmp.ne.s32.totalorder %s95, %s109
      %p111 = scmp.eq.s32.totalorder %s22, 0
      %p112 = por %p110, %p111
      %s114 = sadd.s32 %s113, 1
      %p117 = scmp.eq.s32.totalorder %s16, 1
      %p118 = scmp.ne.s32.totalorder %s113, %s115
      %p119 = scmp.eq.s32.totalorder %s16, 0
      %p120 = por %p118, %p119
      %p121 = scmp.ne.s32.totalorder %s113, %s115
      %p122 = scmp.eq.s32.totalorder %s21, 1
      %p123 = por %p121, %p122
      %p124 = scmp.ne.s32.totalorder %s115, %s116
      %p125 = scmp.eq.s32.totalorder %s21, 0
      %p126 = por %p124, %p125
      %p127 = scmp.ne.s32.totalorder %s115, %s116
      %p128 = scmp.eq.s32.totalorder %s22, 1
      %p129 = por %p127, %p128
      %p131 = scmp.ne.s32.totalorder %s116, %s130
      %p132 = scmp.eq.s32.totalorder %s22, 0
      %p133 = por %p131, %p132
      %s135 = sadd.s32 %s134, 1
      %p138 = scmp.eq.s32.totalorder %s16, 1
      %p139 = scmp.ne.s32.totalorder %s134, %s136
      %p140 = scmp.eq.s32.totalorder %s16, 0
      %p141 = por %p139, %p140
      %p142 = scmp.ne.s32.totalorder %s134, %s136
      %p143 = scmp.eq.s32.totalorder %s21, 1
      %p144 = por %p142, %p143
      %p145 = scmp.ne.s32.totalorder %s136, %s137
      %p146 = scmp.eq.s32.totalorder %s21, 0
      %p147 = por %p145, %p146
      %p148 = scmp.ne.s32.totalorder %s136, %s137
      %p149 = scmp.eq.s32.totalorder %s22, 1
      %p150 = por %p148, %p149
      %p152 = scmp.ne.s32.totalorder %s137, %s151
      %p153 = scmp.eq.s32.totalorder %s22, 0
      %p154 = por %p152, %p153
      %s156 = sadd.s32 %s155, 1
      %p159 = scmp.eq.s32.totalorder %s16, 1
      %p160 = scmp.ne.s32.totalorder %s155, %s157
      %p161 = scmp.eq.s32.totalorder %s16, 0
      %p162 = por %p160, %p161
      %p163 = scmp.ne.s32.totalorder %s155, %s157
      %p164 = scmp.eq.s32.totalorder %s21, 1
      %p165 = por %p163, %p164
      %p166 = scmp.ne.s32.totalorder %s157, %s158
      %p167 = scmp.eq.s32.totalorder %s21, 0
      %p168 = por %p166, %p167
      %p169 = scmp.ne.s32.totalorder %s157, %s158
      %p170 = scmp.eq.s32.totalorder %s22, 1
      %p171 = por %p169, %p170
      %p173 = scmp.ne.s32.totalorder %s158, %s172
      %p174 = scmp.eq.s32.totalorder %s22, 0
      %p175 = por %p173, %p174
      %s177 = sadd.s32 %s176, 1
      %p180 = scmp.eq.s32.totalorder %s16, 1
      %p181 = scmp.ne.s32.totalorder %s176, %s178
      %p182 = scmp.eq.s32.totalorder %s16, 0
      %p183 = por %p181, %p182
      %p184 = scmp.ne.s32.totalorder %s176, %s178
      %p185 = scmp.eq.s32.totalorder %s21, 1
      %p186 = por %p184, %p185
      %p187 = scmp.ne.s32.totalorder %s178, %s179
      %p188 = scmp.eq.s32.totalorder %s21, 0
      %p189 = por %p187, %p188
      %p190 = scmp.ne.s32.totalorder %s178, %s179
      %p191 = scmp.eq.s32.totalorder %s22, 1
      %p192 = por %p190, %p191
      %p194 = scmp.ne.s32.totalorder %s179, %s193
      %p195 = scmp.eq.s32.totalorder %s22, 0
      %p196 = por %p194, %p195
      %s198 = sadd.s32 %s197, 1
      %p201 = scmp.eq.s32.totalorder %s16, 1
      %p202 = scmp.ne.s32.totalorder %s197, %s199
      %p203 = scmp.eq.s32.totalorder %s16, 0
      %p204 = por %p202, %p203
      %p205 = scmp.ne.s32.totalorder %s197, %s199
      %p206 = scmp.eq.s32.totalorder %s21, 1
      %p207 = por %p205, %p206
      %p208 = scmp.ne.s32.totalorder %s199, %s200
      %p209 = scmp.eq.s32.totalorder %s21, 0
      %p210 = por %p208, %p209
      %p211 = scmp.ne.s32.totalorder %s199, %s200
      %p212 = scmp.eq.s32.totalorder %s22, 1
      %p213 = por %p211, %p212
      %p215 = scmp.ne.s32.totalorder %s200, %s214
      %p216 = scmp.eq.s32.totalorder %s22, 0
      %p217 = por %p215, %p216
      %s218 = ssub.s32 %s16, %s23
      %p219 = scmp.eq.s32.totalorder %s218, 0
      %s221 = sadd.s32 %s220, 1
      %s222 = scalar_select %p219, %s220, %s221
      %p225 = pneg %p219
      %p226 = scmp.eq.s32.totalorder %s16, 1
      %p227 = por %p225, %p226
      %p228 = scmp.ne.s32.totalorder %s220, %s223
      %p229 = scmp.eq.s32.totalorder %s16, 0
      %p230 = por %p228, %p229
      %p231 = scmp.ne.s32.totalorder %s220, %s223
      %p232 = scmp.eq.s32.totalorder %s21, 1
      %p233 = por %p231, %p232
      %p234 = scmp.ne.s32.totalorder %s223, %s224
      %p235 = scmp.eq.s32.totalorder %s21, 0
      %p236 = por %p234, %p235
      %p237 = scmp.ne.s32.totalorder %s223, %s224
      %p238 = scmp.eq.s32.totalorder %s22, 1
      %p239 = por %p237, %p238
      %p241 = scmp.ne.s32.totalorder %s224, %s240
      %p242 = scmp.eq.s32.totalorder %s22, 0
      %p243 = por %p241, %p242
      %p244 = scmp.le.s32.totalorder 1, %s16
      %p245 = scmp.lt.s32.totalorder %s16, 3
      %p246 = pnand %p244, %p245
      %p247 = pneg %p246
      // Predicated region
      $region9: #{image_restoration_forward.1} parent=5 // pred_check
        _
      $region10: #{image_restoration_forward.1} parent=5 // pred_check_branch
        %249 = sbr.rel (%p246) target = $region12
      $region11: #{image_restoration_forward.1} parent=5 // pred_region
        %s250 = ssub.s32 %s16, 1
        // Predicated region
        $region13: #{image_restoration_forward.1} parent=11 // pred_check
          %p251 = pneg %p63
        $region14: #{image_restoration_forward.1} parent=11 // pred_check_branch
          %253 = sbr.rel (%p251) target = $region16
        $region15: #{image_restoration_forward.1} parent=11 // pred_region
          _
        $region16: #{image_restoration_forward.1} parent=11 // pred_fallthru
          _
        // Predicated region
        $region17: #{image_restoration_forward.1} parent=11 // pred_check
          %p254 = pneg %p84
        $region18: #{image_restoration_forward.1} parent=11 // pred_check_branch
          %256 = sbr.rel (%p254) target = $region20
        $region19: #{image_restoration_forward.1} parent=11 // pred_region
          _
        $region20: #{image_restoration_forward.1} parent=11 // pred_fallthru
          _
        // Predicated region
        $region21: #{image_restoration_forward.1} parent=11 // pred_check
          %p257 = pneg %p105
        $region22: #{image_restoration_forward.1} parent=11 // pred_check_branch
          %259 = sbr.rel (%p257) target = $region24
        $region23: #{image_restoration_forward.1} parent=11 // pred_region
          _
        $region24: #{image_restoration_forward.1} parent=11 // pred_fallthru
          _
        // Predicated region
        $region25: #{image_restoration_forward.1} parent=11 // pred_check
          %p260 = pneg %p126
        $region26: #{image_restoration_forward.1} parent=11 // pred_check_branch
          %262 = sbr.rel (%p260) target = $region28
        $region27: #{image_restoration_forward.1} parent=11 // pred_region
          _
        $region28: #{image_restoration_forward.1} parent=11 // pred_fallthru
          _
        // Predicated region
        $region29: #{image_restoration_forward.1} parent=11 // pred_check
          %p263 = pneg %p147
        $region30: #{image_restoration_forward.1} parent=11 // pred_check_branch
          %265 = sbr.rel (%p263) target = $region32
        $region31: #{image_restoration_forward.1} parent=11 // pred_region
          %267 = vsyncadd [#allocation3], 0
          %s268 = sshll.u32 %s5, 4
          %s269 = int_to_ptr.hbm [resolvable:$true] %s268
          %s270 = sshll.u32 [#allocation2], 4
          %s271 = int_to_ptr.vmem [resolvable:$true] %s270
          %276 = dma.hbm_to_vmem [thread:$0]  %s269, 2560, %s271, [#allocation3], 320, 320, 20
        $region32: #{image_restoration_forward.1} parent=11 // pred_fallthru
          _
        // Predicated region
        $region33: #{image_restoration_forward.1} parent=11 // pred_check
          %p277 = pneg %p168
        $region34: #{image_restoration_forward.1} parent=11 // pred_check_branch
          %279 = sbr.rel (%p277) target = $region36
        $region35: #{image_restoration_forward.1} parent=11 // pred_region
          _
        $region36: #{image_restoration_forward.1} parent=11 // pred_fallthru
          _
        // Predicated region
        $region37: #{image_restoration_forward.1} parent=11 // pred_check
          %p280 = pneg %p189
        $region38: #{image_restoration_forward.1} parent=11 // pred_check_branch
          %282 = sbr.rel (%p280) target = $region40
        $region39: #{image_restoration_forward.1} parent=11 // pred_region
          _
        $region40: #{image_restoration_forward.1} parent=11 // pred_fallthru
          _
        // Predicated region
        $region41: #{image_restoration_forward.1} parent=11 // pred_check
          %p283 = pneg %p210
        $region42: #{image_restoration_forward.1} parent=11 // pred_check_branch
          %285 = sbr.rel (%p283) target = $region44
        $region43: #{image_restoration_forward.1} parent=11 // pred_region
          _
        $region44: #{image_restoration_forward.1} parent=11 // pred_fallthru
          _
      $region12: #{image_restoration_forward.1} parent=5 // pred_fallthru
        _
      %p286 = scmp.lt.s32.totalorder %s16, 2
      // Predicated region
      $region45: #{image_restoration_forward.1} parent=5 // pred_check
        %p287 = pneg %p286
      $region46: #{image_restoration_forward.1} parent=5 // pred_check_branch
        %289 = sbr.rel (%p287) target = $region48
      $region47: #{image_restoration_forward.1} parent=5 // pred_region
        // Predicated region
        $region49: #{image_restoration_forward.1} parent=47 // pred_check
          %p290 = pneg %p36
        $region50: #{image_restoration_forward.1} parent=47 // pred_check_branch
          %292 = sbr.rel (%p290) target = $region52
        $region51: #{image_restoration_forward.1} parent=47 // pred_region
          %p293 = scmp.lt.s32.totalorder %s16, 1
          %s294 = scalar_select %p293, %s16, 1
          %s295 = smul.addr %s294, 2
          %s296 = smul.addr %s295, 4
          %s297 = scalar_lea.vmem %s0, %s296
        $region52: #{image_restoration_forward.1} parent=47 // pred_fallthru
          _
      $region48: #{image_restoration_forward.1} parent=5 // pred_fallthru
        _
      %p298 = scmp.le.s32.totalorder 1, %s16
      %p299 = scmp.lt.s32.totalorder %s16, 3
      %p300 = pnand %p298, %p299
      %p301 = pneg %p300
      // Predicated region
      $region53: #{image_restoration_forward.1} parent=5 // pred_check
        _
      $region54: #{image_restoration_forward.1} parent=5 // pred_check_branch
        %303 = sbr.rel (%p300) target = $region56
      $region55: #{image_restoration_forward.1} parent=5 // pred_region
        %s304 = ssub.s32 %s16, 1
        // Predicated region
        $region57: #{image_restoration_forward.1} parent=55 // pred_check
          %p305 = pneg %p147
        $region58: #{image_restoration_forward.1} parent=55 // pred_check_branch
          %307 = sbr.rel (%p305) target = $region60
        $region59: #{image_restoration_forward.1} parent=55 // pred_region
          %309 = dma.done [#allocation3], 2560
        $region60: #{image_restoration_forward.1} parent=55 // pred_fallthru
          _
        %p310 = scmp.lt.s32.totalorder %s21, 1
        %s311 = scalar_select %p310, %s21, 1
        %s312 = smul.addr %s311, 2
        %s313 = smul.addr %s312, 4
        %s314 = scalar_lea.vmem %s0, %s313
        %p315 = pneg %p42
        %p316 = pneg %p39
        %p317 = pneg %p63
        %p318 = pneg %p60
        %p319 = pneg %p84
        %p320 = pneg %p81
        %p321 = pneg %p105
        %p322 = pneg %p102
        %p323 = pneg %p126
        %p324 = pneg %p123
        %p325 = pneg %p147
        %p326 = pneg %p144
        %p327 = pneg %p168
        %p328 = pneg %p165
        %p329 = pneg %p189
        %p330 = pneg %p186
        %p331 = pneg %p210
        %p332 = pneg %p207
        %p333 = pneg %p236
        %p334 = pneg %p233
        %p335 = scmp.lt.s32.totalorder %s21, 1
        %s336 = scalar_select %p335, %s21, 1
        %s337 = smul.addr %s336, 2
        %s338 = smul.addr %s337, 4
        %s339 = scalar_lea.vmem %s9, %s338
        %p340 = scmp.lt.s32.totalorder %s21, 1
        %s341 = scalar_select %p340, %s21, 1
        %s342 = smul.addr %s341, 2
        %s343 = smul.addr %s342, 4
        %s344 = scalar_lea.vmem %s0, %s343
        %p345 = scmp.lt.s32.totalorder %s21, 1
        %s346 = scalar_select %p345, %s21, 1
        %s347 = smul.addr %s346, 2
        %s348 = smul.addr %s347, 4
        %s349 = scalar_lea.vmem %s9, %s348
        %v353 = vlaneseq
        %v354 = vand.u32 %v353, 127
        %v355 = vadd.s32 %v354, 128
        %vm356 = vcmp.lt.s32.totalorder %v354, 0
        %v357 = vsub.s32 0, %v354
        %v358 = vsel %vm356, %v357, %v354
        %v359 = vshrl.u32 %v358, 4
        %v360 = vand.u32 %v358, 15
        %v361 = vsub.s32 0, %v360
        %v362 = vsel %vm356, %v361, %v360
        %vm363 = vcmp.lt.s32.totalorder %v355, 0
        %v364 = vsub.s32 0, %v355
        %v365 = vsel %vm363, %v364, %v355
        %v366 = vshrl.u32 %v365, 4
        %v367 = vand.u32 %v365, 15
        %v368 = vsub.s32 0, %v367
        %v369 = vsel %vm363, %v368, %v367
        %vm370 = vcmp.ne.s32.totalorder %v362, 0
        %vm371 = vcmp.ne.s32.totalorder %v369, 0
        %vm372 = vcmp.lt.s32.totalorder %v362, 0
        %vm373 = vcmp.lt.s32.totalorder %v369, 0
        %vm374 = vmand %vm372, %vm370
        %vm375 = vmand %vm373, %vm371
        %v376 = vadd.s32 %v362, 16
        %v377 = vadd.s32 %v369, 16
        %v378 = vsel %vm374, %v376, %v362
        %v379 = vsel %vm375, %v377, %v369
        %vm380 = vcmp.eq.s32.totalorder %v378, 0
        %vm381 = vcmp.eq.s32.totalorder %v379, 0
        %vm382 = vcmp.eq.s32.totalorder %v378, 15
        %vm383 = vcmp.eq.s32.totalorder %v379, 15
        %v384 = vld [vmem:[%s344] sm:$0x77]
        %386 = vst [vmem:[#allocation1] ss:$2 sm:$0xff] %v384
        %v387 = vld.sshfl [vmem:[#allocation1] sm:$0xff pattern:$0x75316420]
        %v388 = vld.sshfl [vmem:[#allocation1 + $0x8] sm:$0xff pattern:$0x75316420]
        %v391 = vpack.c.bf16 %v388, %v387
        %v393 = vunpack.c.l.b16 %v391
        %v394 = vunpack.c.h.b16 %v391
        %v395 = vpack.c.b16 %v393, %v393
        %v396 = vpack.c.b16 %v394, %v394
        %vm399 = vcmask 1041408
        %vm400 = vsmask.f32 1280
        %vm401 = vmand %vm399, %vm400
        %v402 = vsel %vm401, %v395, 0
        %v403 = vsel %vm401, %v396, 0
        %v404 = vld [vmem:[%s1] sm:$0xf]
        %v405 = vld [vmem:[%s1 + $0x4] sm:$0xf]
        %v406 = vld [vmem:[%s1 + $0x8] sm:$0xf]
        %v407 = vld [vmem:[%s1 + $0xc] sm:$0xf]
        %v408 = vld [vmem:[%s1 + $0x10] sm:$0xf]
        %v409 = vld [vmem:[%s1 + $0x14] sm:$0xf]
        %v410 = vld [vmem:[%s1 + $0x18] sm:$0xf]
        %v411 = vld [vmem:[%s1 + $0x1c] sm:$0xf]
        %v412 = vld [vmem:[%s2] sm:$0xff]
        %v413 = vld [vmem:[%s2 + $0x8] sm:$0xff]
        %v414 = vld [vmem:[%s2 + $0x10] sm:$0xff]
        %v415 = vld [vmem:[%s2 + $0x18] sm:$0xff]
        %v416 = vld [vmem:[%s2 + $0x20] sm:$0xff]
        %v417 = vld [vmem:[%s2 + $0x28] sm:$0xff]
        %v418 = vld [vmem:[%s2 + $0x30] sm:$0xff]
        %v419 = vld [vmem:[%s2 + $0x38] sm:$0xff]
        %422 = vrot.lane.b32.xlu0 %v402, 17
        %v423 = vpop.permute.xlu0 %422
        %424 = vrot.lane.b32.xlu0 %v403, 17
        %v425 = vpop.permute.xlu0 %424
        %vm426 = vcmask 138240
        %v427 = vsel %vm426, %v423, %v425
        %vm429 = vcmask 138240
        %v432 = vsel %vm429, 0, %v423
        %v435 = vsel %vm429, %v425, 0
        %v437 = vsel %vm380, 1, 0
        %v438 = vsel %vm381, 1, 0
        %vm439 = vcmp.eq.s32.totalorder %v437, 1
        %vm440 = vcmp.eq.s32.totalorder %v438, 1
        %vm441 = vmpackc.low %vm440, %vm439
        %v442 = vsel %vm441, 65537, 0
        %v443 = vperm.slane %v442, 0
        %v444 = vperm.slane %v442, 4
        %v445 = vunpack.c.l.b16 %v443
        %v446 = vunpack.c.h.b16 %v443
        %v447 = vunpack.c.l.b16 0
        %v448 = vunpack.c.h.b16 0
        %vm449 = vcmp.ne.s32.totalorder %v445, %v447
        %vm450 = vcmp.ne.s32.totalorder %v446, %v448
        %vm451 = vmpackc.low %vm450, %vm449
        %v452 = vunpack.c.l.b16 %v444
        %v453 = vunpack.c.h.b16 %v444
        %v454 = vunpack.c.l.b16 0
        %v455 = vunpack.c.h.b16 0
        %vm456 = vcmp.ne.s32.totalorder %v452, %v454
        %vm457 = vcmp.ne.s32.totalorder %v453, %v455
        %vm458 = vmpackc.low %vm457, %vm456
        %v459 = vsel %vm451, 0, %v432
        %v460 = vsel %vm458, 0, %v427
        %v461 = vsel %vm382, 1, 0
        %v462 = vsel %vm383, 1, 0
        %vm463 = vcmp.eq.s32.totalorder %v461, 1
        %vm464 = vcmp.eq.s32.totalorder %v462, 1
        %vm465 = vmpackc.low %vm464, %vm463
        %v466 = vsel %vm465, 65537, 0
        %v467 = vperm.slane %v466, 0
        %v468 = vperm.slane %v466, 4
        %469 = vrot.lane.b32.xlu0 %v467, 2
        %v470 = vpop.permute.xlu0 %469
        %471 = vrot.lane.b32.xlu0 %v468, 2
        %v472 = vpop.permute.xlu0 %471
        %vm473 = vcmask 15360
        %v474 = vsel %vm473, %v470, %v472
        %v475 = vunpack.c.l.b16 %v470
        %v476 = vunpack.c.h.b16 %v470
        %v477 = vunpack.c.l.b16 0
        %v478 = vunpack.c.h.b16 0
        %vm479 = vcmp.ne.s32.totalorder %v475, %v477
        %vm480 = vcmp.ne.s32.totalorder %v476, %v478
        %vm481 = vmpackc.low %vm480, %vm479
        %v482 = vunpack.c.l.b16 %v474
        %v483 = vunpack.c.h.b16 %v474
        %v484 = vunpack.c.l.b16 0
        %v485 = vunpack.c.h.b16 0
        %vm486 = vcmp.ne.s32.totalorder %v482, %v484
        %vm487 = vcmp.ne.s32.totalorder %v483, %v485
        %vm488 = vmpackc.low %vm487, %vm486
        %v489 = vunpack.c.l.b16 %v472
        %v490 = vunpack.c.h.b16 %v472
        %v491 = vunpack.c.l.b16 0
        %v492 = vunpack.c.h.b16 0
        %vm493 = vcmp.ne.s32.totalorder %v489, %v491
        %vm494 = vcmp.ne.s32.totalorder %v490, %v492
        %vm495 = vmpackc.low %vm494, %vm493
        %v496 = vsel %vm481, 0, %v432
        %v497 = vsel %vm488, 0, %v427
        %v498 = vsel %vm495, 0, %v435
        %499 = vrot.lane.b32.xlu0 %v443, 16
        %v500 = vpop.permute.xlu0 %499
        %501 = vrot.lane.b32.xlu0 %v444, 16
        %v502 = vpop.permute.xlu0 %501
        %vm503 = vcmask 130048
        %v504 = vsel %vm503, %v500, %v502
        %v505 = vunpack.c.l.b16 %v500
        %v506 = vunpack.c.h.b16 %v500
        %v507 = vunpack.c.l.b16 0
        %v508 = vunpack.c.h.b16 0
        %vm509 = vcmp.ne.s32.totalorder %v505, %v507
        %vm510 = vcmp.ne.s32.totalorder %v506, %v508
        %vm511 = vmpackc.low %vm510, %vm509
        %v512 = vunpack.c.l.b16 %v504
        %v513 = vunpack.c.h.b16 %v504
        %v514 = vunpack.c.l.b16 0
        %v515 = vunpack.c.h.b16 0
        %vm516 = vcmp.ne.s32.totalorder %v512, %v514
        %vm517 = vcmp.ne.s32.totalorder %v513, %v515
        %vm518 = vmpackc.low %vm517, %vm516
        %v519 = vunpack.c.l.b16 %v502
        %v520 = vunpack.c.h.b16 %v502
        %v521 = vunpack.c.l.b16 0
        %v522 = vunpack.c.h.b16 0
        %vm523 = vcmp.ne.s32.totalorder %v519, %v521
        %vm524 = vcmp.ne.s32.totalorder %v520, %v522
        %vm525 = vmpackc.low %vm524, %vm523
        %v526 = vsel %vm511, 0, %v432
        %v527 = vsel %vm518, 0, %v427
        %v528 = vsel %vm525, 0, %v435
        %529 = vrot.lane.b32.xlu0 %v467, 18
        %v530 = vpop.permute.xlu0 %529
        %531 = vrot.lane.b32.xlu0 %v468, 18
        %v532 = vpop.permute.xlu0 %531
        %vm533 = vcmask 146432
        %v534 = vsel %vm533, %v530, %v532
        %v535 = vunpack.c.l.b16 %v530
        %v536 = vunpack.c.h.b16 %v530
        %v537 = vunpack.c.l.b16 0
        %v538 = vunpack.c.h.b16 0
        %vm539 = vcmp.ne.s32.totalorder %v535, %v537
        %vm540 = vcmp.ne.s32.totalorder %v536, %v538
        %vm541 = vmpackc.low %vm540, %vm539
        %v542 = vunpack.c.l.b16 %v534
        %v543 = vunpack.c.h.b16 %v534
        %v544 = vunpack.c.l.b16 0
        %v545 = vunpack.c.h.b16 0
        %vm546 = vcmp.ne.s32.totalorder %v542, %v544
        %vm547 = vcmp.ne.s32.totalorder %v543, %v545
        %vm548 = vmpackc.low %vm547, %vm546
        %v549 = vunpack.c.l.b16 %v532
        %v550 = vunpack.c.h.b16 %v532
        %v551 = vunpack.c.l.b16 0
        %v552 = vunpack.c.h.b16 0
        %vm553 = vcmp.ne.s32.totalorder %v549, %v551
        %vm554 = vcmp.ne.s32.totalorder %v550, %v552
        %vm555 = vmpackc.low %vm554, %vm553
        %v556 = vsel %vm541, 0, %v432
        %v557 = vsel %vm548, 0, %v427
        %v558 = vsel %vm555, 0, %v435
        %559 = vrot.lane.b32.xlu0 %v443, 32
        %v560 = vpop.permute.xlu0 %559
        %561 = vrot.lane.b32.xlu0 %v444, 32
        %v562 = vpop.permute.xlu0 %561
        %vm563 = vcmask 261120
        %v564 = vsel %vm563, %v560, %v562
        %v565 = vunpack.c.l.b16 %v560
        %v566 = vunpack.c.h.b16 %v560
        %v567 = vunpack.c.l.b16 0
        %v568 = vunpack.c.h.b16 0
        %vm569 = vcmp.ne.s32.totalorder %v565, %v567
        %vm570 = vcmp.ne.s32.totalorder %v566, %v568
        %vm571 = vmpackc.low %vm570, %vm569
        %v572 = vunpack.c.l.b16 %v564
        %v573 = vunpack.c.h.b16 %v564
        %v574 = vunpack.c.l.b16 0
        %v575 = vunpack.c.h.b16 0
        %vm576 = vcmp.ne.s32.totalorder %v572, %v574
        %vm577 = vcmp.ne.s32.totalorder %v573, %v575
        %vm578 = vmpackc.low %vm577, %vm576
        %v579 = vunpack.c.l.b16 %v562
        %v580 = vunpack.c.h.b16 %v562
        %v581 = vunpack.c.l.b16 0
        %v582 = vunpack.c.h.b16 0
        %vm583 = vcmp.ne.s32.totalorder %v579, %v581
        %vm584 = vcmp.ne.s32.totalorder %v580, %v582
        %vm585 = vmpackc.low %vm584, %vm583
        %v586 = vsel %vm571, 0, %v432
        %v587 = vsel %vm578, 0, %v427
        %v588 = vsel %vm585, 0, %v435
        %589 = vrot.lane.b32.xlu0 %v467, 34
        %v590 = vpop.permute.xlu0 %589
        %591 = vrot.lane.b32.xlu0 %v468, 34
        %v592 = vpop.permute.xlu0 %591
        %vm593 = vcmask 277504
        %v594 = vsel %vm593, %v590, %v592
        %v595 = vunpack.c.l.b16 %v590
        %v596 = vunpack.c.h.b16 %v590
        %v597 = vunpack.c.l.b16 0
        %v598 = vunpack.c.h.b16 0
        %vm599 = vcmp.ne.s32.totalorder %v595, %v597
        %vm600 = vcmp.ne.s32.totalorder %v596, %v598
        %vm601 = vmpackc.low %vm600, %vm599
        %v602 = vunpack.c.l.b16 %v594
        %v603 = vunpack.c.h.b16 %v594
        %v604 = vunpack.c.l.b16 0
        %v605 = vunpack.c.h.b16 0
        %vm606 = vcmp.ne.s32.totalorder %v602, %v604
        %vm607 = vcmp.ne.s32.totalorder %v603, %v605
        %vm608 = vmpackc.low %vm607, %vm606
        %v609 = vunpack.c.l.b16 %v592
        %v610 = vunpack.c.h.b16 %v592
        %v611 = vunpack.c.l.b16 0
        %v612 = vunpack.c.h.b16 0
        %vm613 = vcmp.ne.s32.totalorder %v609, %v611
        %vm614 = vcmp.ne.s32.totalorder %v610, %v612
        %vm615 = vmpackc.low %vm614, %vm613
        %v616 = vsel %vm601, 0, %v432
        %v617 = vsel %vm608, 0, %v427
        %v618 = vsel %vm615, 0, %v435
        %v621 = vrot.slane %v432, 4
        %v622 = vrot.slane %v427, 4
        %v623 = vrot.slane %v435, 4
        %624 = vrot.lane.b32.xlu0 %v621, 127
        %v625 = vpop.permute.xlu0 %624
        %626 = vrot.lane.b32.xlu0 %v622, 127
        %v627 = vpop.permute.xlu0 %626
        %628 = vrot.lane.b32.xlu0 %v623, 127
        %v629 = vpop.permute.xlu0 %628
        %vm630 = vcmask 1039360
        %v631 = vsel %vm630, %v625, %v627
        %v632 = vsel %vm630, %v627, %v629
        %636 = vrot.lane.b32.xlu0 %v496, 126
        %v637 = vpop.permute.xlu0 %636
        %638 = vrot.lane.b32.xlu0 %v497, 126
        %v639 = vpop.permute.xlu0 %638
        %640 = vrot.lane.b32.xlu0 %v498, 126
        %v641 = vpop.permute.xlu0 %640
        %vm642 = vcmask 1031168
        %v643 = vsel %vm642, %v637, %v639
        %v644 = vsel %vm642, %v639, %v641
        %v648 = vrot.slane %v526, 4
        %v649 = vrot.slane %v527, 4
        %v650 = vrot.slane %v528, 4
        %651 = vrot.lane.b32.xlu0 %v648, 112
        %v652 = vpop.permute.xlu0 %651
        %653 = vrot.lane.b32.xlu0 %v649, 112
        %v654 = vpop.permute.xlu0 %653
        %655 = vrot.lane.b32.xlu0 %v650, 112
        %v656 = vpop.permute.xlu0 %655
        %vm657 = vcmask 916480
        %v658 = vsel %vm657, %v652, %v654
        %v659 = vsel %vm657, %v654, %v656
        %660 = vrot.lane.b32.xlu0 %v432, 111
        %v661 = vpop.permute.xlu0 %660
        %662 = vrot.lane.b32.xlu0 %v427, 111
        %v663 = vpop.permute.xlu0 %662
        %664 = vrot.lane.b32.xlu0 %v435, 111
        %v665 = vpop.permute.xlu0 %664
        %vm666 = vcmask 908288
        %v667 = vsel %vm666, %v661, %v663
        %v668 = vsel %vm666, %v663, %v665
        %v672 = vrot.slane %v556, 4
        %v673 = vrot.slane %v557, 4
        %v674 = vrot.slane %v558, 4
        %675 = vrot.lane.b32.xlu0 %v672, 110
        %v676 = vpop.permute.xlu0 %675
        %677 = vrot.lane.b32.xlu0 %v673, 110
        %v678 = vpop.permute.xlu0 %677
        %679 = vrot.lane.b32.xlu0 %v674, 110
        %v680 = vpop.permute.xlu0 %679
        %vm681 = vcmask 900096
        %v682 = vsel %vm681, %v676, %v678
        %v683 = vsel %vm681, %v678, %v680
        %687 = vrot.lane.b32.xlu0 %v586, 96
        %v688 = vpop.permute.xlu0 %687
        %689 = vrot.lane.b32.xlu0 %v587, 96
        %v690 = vpop.permute.xlu0 %689
        %691 = vrot.lane.b32.xlu0 %v588, 96
        %v692 = vpop.permute.xlu0 %691
        %vm693 = vcmask 785408
        %v694 = vsel %vm693, %v688, %v690
        %v695 = vsel %vm693, %v690, %v692
        %696 = vrot.lane.b32.xlu0 %v621, 95
        %v697 = vpop.permute.xlu0 %696
        %698 = vrot.lane.b32.xlu0 %v622, 95
        %v699 = vpop.permute.xlu0 %698
        %700 = vrot.lane.b32.xlu0 %v623, 95
        %v701 = vpop.permute.xlu0 %700
        %vm702 = vcmask 777216
        %v703 = vsel %vm702, %v697, %v699
        %v704 = vsel %vm702, %v699, %v701
        %708 = vrot.lane.b32.xlu0 %v616, 94
        %v709 = vpop.permute.xlu0 %708
        %710 = vrot.lane.b32.xlu0 %v617, 94
        %v711 = vpop.permute.xlu0 %710
        %712 = vrot.lane.b32.xlu0 %v618, 94
        %v713 = vpop.permute.xlu0 %712
        %vm714 = vcmask 769024
        %v715 = vsel %vm714, %v709, %v711
        %v716 = vsel %vm714, %v711, %v713
        %vm717 = vcmask 1043456
        %v720 = vsel %vm717, %v459, %v631
        %v724 = vsel %vm717, %v460, %v632
        %v728 = vsel %vm717, %v643, %v658
        %v732 = vsel %vm717, %v644, %v659
        %v736 = vsel %vm717, %v667, %v682
        %v740 = vsel %vm717, %v668, %v683
        %v744 = vsel %vm717, %v694, %v703
        %v748 = vsel %vm717, %v695, %v704
        %751 = vset.pattern.permute.xlu0 0
        %752 = vperm.xlu0 %751, %v412
        %v753 = vpop.permute.xlu0 %752
        %756 = vset.pattern.permute.xlu0 0
        %757 = vperm.xlu0 %756, %v413
        %v758 = vpop.permute.xlu0 %757
        %761 = vset.pattern.permute.xlu0 0
        %762 = vperm.xlu0 %761, %v414
        %v763 = vpop.permute.xlu0 %762
        %766 = vset.pattern.permute.xlu0 0
        %767 = vperm.xlu0 %766, %v415
        %v768 = vpop.permute.xlu0 %767
        %771 = vset.pattern.permute.xlu0 0
        %772 = vperm.xlu0 %771, %v416
        %v773 = vpop.permute.xlu0 %772
        %776 = vset.pattern.permute.xlu0 0
        %777 = vperm.xlu0 %776, %v417
        %v778 = vpop.permute.xlu0 %777
        %781 = vset.pattern.permute.xlu0 0
        %782 = vperm.xlu0 %781, %v418
        %v783 = vpop.permute.xlu0 %782
        %786 = vset.pattern.permute.xlu0 0
        %787 = vperm.xlu0 %786, %v419
        %v788 = vpop.permute.xlu0 %787
        %v798 = vunpack.c.l.b16 %v404
        %v799 = vunpack.c.l.b16 %v405
        %v800 = vunpack.c.l.b16 %v406
        %v801 = vunpack.c.l.b16 %v407
        %v802 = vunpack.c.l.b16 %v408
        %v803 = vunpack.c.l.b16 %v409
        %v804 = vunpack.c.l.b16 %v410
        %v805 = vunpack.c.l.b16 %v411
        %v806 = vpack.c.b16 %v799, %v798
        %v807 = vpack.c.b16 %v801, %v800
        %v808 = vpack.c.b16 %v803, %v802
        %v809 = vpack.c.b16 %v805, %v804
        %vm810 = vcmask 588800
        %v812 = vsel %vm810, %v806, 0
        %v815 = vsel %vm810, %v807, 0
        %v818 = vsel %vm810, %v808, 0
        %v821 = vsel %vm810, %v809, 0
        %v824 = vsel %vm717, %v715, 0
        %v827 = vsel %vm717, %v716, 0
        %829 = vmatpush.bf16.msra.mxu0 0
        %830 = vmatpush.bf16.msra.mxu0 0
        %831 = vmatpush.bf16.msra.mxu0 0
        %832 = vmatpush.bf16.msra.mxu0 %v824
        %833 = vmatpush.bf16.msra.mxu0 %v744
        %834 = vmatpush.bf16.msra.mxu0 %v736
        %835 = vmatpush.bf16.msra.mxu0 %v728
        %836 = vmatpush.bf16.msra.mxu0 %v720
        %837 = vmatmul.bf16.gmra.mxu0 %v812
        %v838 = vpop.f32.mrf.mxu0
        %v839 = vadd.f32 %v753, %v838
        %v840 = vpop.f32.mrf.mxu0
        %v841 = vadd.f32 %v758, %v840
        %842 = vmatmul.bf16.gmra.mxu0 %v815
        %v843 = vpop.f32.mrf.mxu0
        %v844 = vadd.f32 %v763, %v843
        %v845 = vpop.f32.mrf.mxu0
        %v846 = vadd.f32 %v768, %v845
        %847 = vmatmul.bf16.gmra.mxu0 %v818
        %v848 = vpop.f32.mrf.mxu0
        %v849 = vadd.f32 %v773, %v848
        %v850 = vpop.f32.mrf.mxu0
        %v851 = vadd.f32 %v778, %v850
        %852 = vmatmul.bf16.gmra.mxu0 %v821
        %v853 = vpop.f32.mrf.mxu0
        %v854 = vadd.f32 %v783, %v853
        %v855 = vpop.f32.mrf.mxu0
        %v856 = vadd.f32 %v788, %v855
        %857 = vdwg.mxu0
        %858 = vmatpush.bf16.msra.mxu0 0
        %859 = vmatpush.bf16.msra.mxu0 0
        %860 = vmatpush.bf16.msra.mxu0 0
        %861 = vmatpush.bf16.msra.mxu0 %v827
        %862 = vmatpush.bf16.msra.mxu0 %v748
        %863 = vmatpush.bf16.msra.mxu0 %v740
        %864 = vmatpush.bf16.msra.mxu0 %v732
        %865 = vmatpush.bf16.msra.mxu0 %v724
        %866 = vmatmul.bf16.gmra.mxu0 %v812
        %v867 = vpop.f32.mrf.mxu0
        %v868 = vadd.f32 %v753, %v867
        %v869 = vpop.f32.mrf.mxu0
        %v870 = vadd.f32 %v758, %v869
        %871 = vmatmul.bf16.gmra.mxu0 %v815
        %v872 = vpop.f32.mrf.mxu0
        %v873 = vadd.f32 %v763, %v872
        %v874 = vpop.f32.mrf.mxu0
        %v875 = vadd.f32 %v768, %v874
        %876 = vmatmul.bf16.gmra.mxu0 %v818
        %v877 = vpop.f32.mrf.mxu0
        %v878 = vadd.f32 %v773, %v877
        %v879 = vpop.f32.mrf.mxu0
        %v880 = vadd.f32 %v778, %v879
        %881 = vmatmul.bf16.gmra.mxu0 %v821
        %v882 = vpop.f32.mrf.mxu0
        %v883 = vadd.f32 %v783, %v882
        %v884 = vpop.f32.mrf.mxu0
        %v885 = vadd.f32 %v788, %v884
        %886 = vdwg.mxu0
        %v887 = vmax.f32 %v839, 0.0
        %v888 = vmax.f32 %v868, 0.0
        %v889 = vmax.f32 %v841, 0.0
        %v890 = vmax.f32 %v870, 0.0
        %v891 = vmax.f32 %v844, 0.0
        %v892 = vmax.f32 %v873, 0.0
        %v893 = vmax.f32 %v846, 0.0
        %v894 = vmax.f32 %v875, 0.0
        %v895 = vmax.f32 %v849, 0.0
        %v896 = vmax.f32 %v878, 0.0
        %v897 = vmax.f32 %v851, 0.0
        %v898 = vmax.f32 %v880, 0.0
        %v899 = vmax.f32 %v854, 0.0
        %v900 = vmax.f32 %v883, 0.0
        %v901 = vmax.f32 %v856, 0.0
        %v902 = vmax.f32 %v885, 0.0
        %v903 = vpack.c.bf16 %v888, %v887
        %v904 = vpack.c.bf16 %v890, %v889
        %v905 = vpack.c.bf16 %v892, %v891
        %v906 = vpack.c.bf16 %v894, %v893
        %v907 = vpack.c.bf16 %v896, %v895
        %v908 = vpack.c.bf16 %v898, %v897
        %v909 = vpack.c.bf16 %v900, %v899
        %v910 = vpack.c.bf16 %v902, %v901
        %v911 = vld [vmem:[%s3] sm:$0xff]
        %v912 = vld [vmem:[%s3 + $0x8] sm:$0xff]
        %v913 = vld [vmem:[%s3 + $0x10] sm:$0xf]
        %v914 = vld [vmem:[%s3 + $0x14] sm:$0xff]
        %v915 = vld [vmem:[%s3 + $0x1c] sm:$0xff]
        %v916 = vld [vmem:[%s3 + $0x24] sm:$0xf]
        %v917 = vld [vmem:[%s3 + $0x28] sm:$0xff]
        %v918 = vld [vmem:[%s3 + $0x30] sm:$0xff]
        %v919 = vld [vmem:[%s3 + $0x38] sm:$0xf]
        %v920 = vld [vmem:[%s3 + $0x3c] sm:$0xff]
        %v921 = vld [vmem:[%s3 + $0x44] sm:$0xff]
        %v922 = vld [vmem:[%s3 + $0x4c] sm:$0xf]
        %v923 = vld [vmem:[%s3 + $0x50] sm:$0xff]
        %v924 = vld [vmem:[%s3 + $0x58] sm:$0xff]
        %v925 = vld [vmem:[%s3 + $0x60] sm:$0xf]
        %v926 = vld [vmem:[%s3 + $0x64] sm:$0xff]
        %v927 = vld [vmem:[%s3 + $0x6c] sm:$0xff]
        %v928 = vld [vmem:[%s3 + $0x74] sm:$0xf]
        %v929 = vld [vmem:[%s3 + $0x78] sm:$0xff]
        %v930 = vld [vmem:[%s3 + $0x80] sm:$0xff]
        %v931 = vld [vmem:[%s3 + $0x88] sm:$0xf]
        %v932 = vld [vmem:[%s3 + $0x8c] sm:$0xff]
        %v933 = vld [vmem:[%s3 + $0x94] sm:$0xff]
        %v934 = vld [vmem:[%s3 + $0x9c] sm:$0xf]
        %v935 = vld [vmem:[%s4] sm:$0xff]
        %v936 = vld [vmem:[%s4 + $0x8] sm:$0xff]
        %v937 = vld [vmem:[%s4 + $0x10] sm:$0xff]
        %v938 = vld [vmem:[%s4 + $0x18] sm:$0xff]
        %v939 = vld [vmem:[%s4 + $0x20] sm:$0xff]
        %v940 = vld [vmem:[%s4 + $0x28] sm:$0xff]
        %v941 = vld [vmem:[%s4 + $0x30] sm:$0xff]
        %v942 = vld [vmem:[%s4 + $0x38] sm:$0xff]
        %v951 = vunpack.c.l.b16 %v903
        %v952 = vunpack.c.h.b16 %v903
        %v953 = vunpack.c.l.b16 %v904
        %v954 = vunpack.c.h.b16 %v904
        %v955 = vunpack.c.l.b16 %v905
        %v956 = vunpack.c.h.b16 %v905
        %v957 = vunpack.c.l.b16 %v906
        %v958 = vunpack.c.h.b16 %v906
        %v959 = vunpack.c.l.b16 %v907
        %v960 = vunpack.c.h.b16 %v907
        %v961 = vunpack.c.l.b16 %v908
        %v962 = vunpack.c.h.b16 %v908
        %v963 = vunpack.c.l.b16 %v909
        %v964 = vunpack.c.h.b16 %v909
        %v965 = vunpack.c.l.b16 %v910
        %v966 = vunpack.c.h.b16 %v910
        %v967 = vpack.c.b16 %v953, %v951
        %v968 = vpack.c.b16 %v954, %v952
        %v969 = vpack.c.b16 %v957, %v955
        %v970 = vpack.c.b16 %v958, %v956
        %v971 = vpack.c.b16 %v961, %v959
        %v972 = vpack.c.b16 %v962, %v960
        %v973 = vpack.c.b16 %v965, %v963
        %v974 = vpack.c.b16 %v966, %v964
        %975 = vrot.lane.b32.xlu0 %v967, 17
        %v976 = vpop.permute.xlu0 %975
        %977 = vrot.lane.b32.xlu0 %v968, 17
        %v978 = vpop.permute.xlu0 %977
        %979 = vrot.lane.b32.xlu0 %v969, 17
        %v980 = vpop.permute.xlu0 %979
        %981 = vrot.lane.b32.xlu0 %v970, 17
        %v982 = vpop.permute.xlu0 %981
        %983 = vrot.lane.b32.xlu0 %v971, 17
        %v984 = vpop.permute.xlu0 %983
        %985 = vrot.lane.b32.xlu0 %v972, 17
        %v986 = vpop.permute.xlu0 %985
        %987 = vrot.lane.b32.xlu0 %v973, 17
        %v988 = vpop.permute.xlu0 %987
        %989 = vrot.lane.b32.xlu0 %v974, 17
        %v990 = vpop.permute.xlu0 %989
        %v991 = vsel %vm426, %v976, %v978
        %v992 = vsel %vm426, %v980, %v982
        %v993 = vsel %vm426, %v984, %v986
        %v994 = vsel %vm426, %v988, %v990
        %v1000 = vsel %vm429, 0, %v976
        %v1003 = vsel %vm429, 0, %v980
        %v1006 = vsel %vm429, 0, %v984
        %v1009 = vsel %vm429, 0, %v988
        %v1012 = vsel %vm429, %v978, 0
        %v1015 = vsel %vm429, %v982, 0
        %v1018 = vsel %vm429, %v986, 0
        %v1021 = vsel %vm429, %v990, 0
        %v1023 = vsel %vm451, 0, %v1000
        %v1024 = vsel %vm458, 0, %v991
        %v1025 = vsel %vm451, 0, %v1003
        %v1026 = vsel %vm458, 0, %v992
        %v1027 = vsel %vm451, 0, %v1006
        %v1028 = vsel %vm458, 0, %v993
        %v1029 = vsel %vm451, 0, %v1009
        %v1030 = vsel %vm458, 0, %v994
        %v1031 = vsel %vm481, 0, %v1000
        %v1032 = vsel %vm488, 0, %v991
        %v1033 = vsel %vm495, 0, %v1012
        %v1034 = vsel %vm481, 0, %v1003
        %v1035 = vsel %vm488, 0, %v992
        %v1036 = vsel %vm495, 0, %v1015
        %v1037 = vsel %vm481, 0, %v1006
        %v1038 = vsel %vm488, 0, %v993
        %v1039 = vsel %vm495, 0, %v1018
        %v1040 = vsel %vm481, 0, %v1009
        %v1041 = vsel %vm488, 0, %v994
        %v1042 = vsel %vm495, 0, %v1021
        %v1043 = vsel %vm511, 0, %v1000
        %v1044 = vsel %vm518, 0, %v991
        %v1045 = vsel %vm525, 0, %v1012
        %v1046 = vsel %vm511, 0, %v1003
        %v1047 = vsel %vm518, 0, %v992
        %v1048 = vsel %vm525, 0, %v1015
        %v1049 = vsel %vm511, 0, %v1006
        %v1050 = vsel %vm518, 0, %v993
        %v1051 = vsel %vm525, 0, %v1018
        %v1052 = vsel %vm511, 0, %v1009
        %v1053 = vsel %vm518, 0, %v994
        %v1054 = vsel %vm525, 0, %v1021
        %v1055 = vsel %vm541, 0, %v1000
        %v1056 = vsel %vm548, 0, %v991
        %v1057 = vsel %vm555, 0, %v1012
        %v1058 = vsel %vm541, 0, %v1003
        %v1059 = vsel %vm548, 0, %v992
        %v1060 = vsel %vm555, 0, %v1015
        %v1061 = vsel %vm541, 0, %v1006
        %v1062 = vsel %vm548, 0, %v993
        %v1063 = vsel %vm555, 0, %v1018
        %v1064 = vsel %vm541, 0, %v1009
        %v1065 = vsel %vm548, 0, %v994
        %v1066 = vsel %vm555, 0, %v1021
        %v1067 = vsel %vm571, 0, %v1000
        %v1068 = vsel %vm578, 0, %v991
        %v1069 = vsel %vm585, 0, %v1012
        %v1070 = vsel %vm571, 0, %v1003
        %v1071 = vsel %vm578, 0, %v992
        %v1072 = vsel %vm585, 0, %v1015
        %v1073 = vsel %vm571, 0, %v1006
        %v1074 = vsel %vm578, 0, %v993
        %v1075 = vsel %vm585, 0, %v1018
        %v1076 = vsel %vm571, 0, %v1009
        %v1077 = vsel %vm578, 0, %v994
        %v1078 = vsel %vm585, 0, %v1021
        %v1079 = vsel %vm601, 0, %v1000
        %v1080 = vsel %vm608, 0, %v991
        %v1081 = vsel %vm615, 0, %v1012
        %v1082 = vsel %vm601, 0, %v1003
        %v1083 = vsel %vm608, 0, %v992
        %v1084 = vsel %vm615, 0, %v1015
        %v1085 = vsel %vm601, 0, %v1006
        %v1086 = vsel %vm608, 0, %v993
        %v1087 = vsel %vm615, 0, %v1018
        %v1088 = vsel %vm601, 0, %v1009
        %v1089 = vsel %vm608, 0, %v994
        %v1090 = vsel %vm615, 0, %v1021
        %1099 = vrot.lane.b32.xlu0 %v1000, 127
        %v1100 = vpop.permute.xlu0 %1099
        %1101 = vrot.lane.b32.xlu0 %v991, 127
        %v1102 = vpop.permute.xlu0 %1101
        %1103 = vrot.lane.b32.xlu0 %v1012, 127
        %v1104 = vpop.permute.xlu0 %1103
        %1105 = vrot.lane.b32.xlu0 %v1003, 127
        %v1106 = vpop.permute.xlu0 %1105
        %1107 = vrot.lane.b32.xlu0 %v992, 127
        %v1108 = vpop.permute.xlu0 %1107
        %1109 = vrot.lane.b32.xlu0 %v1015, 127
        %v1110 = vpop.permute.xlu0 %1109
        %1111 = vrot.lane.b32.xlu0 %v1006, 127
        %v1112 = vpop.permute.xlu0 %1111
        %1113 = vrot.lane.b32.xlu0 %v993, 127
        %v1114 = vpop.permute.xlu0 %1113
        %1115 = vrot.lane.b32.xlu0 %v1018, 127
        %v1116 = vpop.permute.xlu0 %1115
        %1117 = vrot.lane.b32.xlu0 %v1009, 127
        %v1118 = vpop.permute.xlu0 %1117
        %1119 = vrot.lane.b32.xlu0 %v994, 127
        %v1120 = vpop.permute.xlu0 %1119
        %1121 = vrot.lane.b32.xlu0 %v1021, 127
        %v1122 = vpop.permute.xlu0 %1121
        %v1123 = vsel %vm630, %v1100, %v1102
        %v1124 = vsel %vm630, %v1102, %v1104
        %v1125 = vsel %vm630, %v1106, %v1108
        %v1126 = vsel %vm630, %v1108, %v1110
        %v1127 = vsel %vm630, %v1112, %v1114
        %v1128 = vsel %vm630, %v1114, %v1116
        %v1129 = vsel %vm630, %v1118, %v1120
        %v1130 = vsel %vm630, %v1120, %v1122
        %1151 = vrot.lane.b32.xlu0 %v1031, 126
        %v1152 = vpop.permute.xlu0 %1151
        %1153 = vrot.lane.b32.xlu0 %v1032, 126
        %v1154 = vpop.permute.xlu0 %1153
        %1155 = vrot.lane.b32.xlu0 %v1033, 126
        %v1156 = vpop.permute.xlu0 %1155
        %1157 = vrot.lane.b32.xlu0 %v1034, 126
        %v1158 = vpop.permute.xlu0 %1157
        %1159 = vrot.lane.b32.xlu0 %v1035, 126
        %v1160 = vpop.permute.xlu0 %1159
        %1161 = vrot.lane.b32.xlu0 %v1036, 126
        %v1162 = vpop.permute.xlu0 %1161
        %1163 = vrot.lane.b32.xlu0 %v1037, 126
        %v1164 = vpop.permute.xlu0 %1163
        %1165 = vrot.lane.b32.xlu0 %v1038, 126
        %v1166 = vpop.permute.xlu0 %1165
        %1167 = vrot.lane.b32.xlu0 %v1039, 126
        %v1168 = vpop.permute.xlu0 %1167
        %1169 = vrot.lane.b32.xlu0 %v1040, 126
        %v1170 = vpop.permute.xlu0 %1169
        %1171 = vrot.lane.b32.xlu0 %v1041, 126
        %v1172 = vpop.permute.xlu0 %1171
        %1173 = vrot.lane.b32.xlu0 %v1042, 126
        %v1174 = vpop.permute.xlu0 %1173
        %v1175 = vsel %vm642, %v1152, %v1154
        %v1176 = vsel %vm642, %v1154, %v1156
        %v1177 = vsel %vm642, %v1158, %v1160
        %v1178 = vsel %vm642, %v1160, %v1162
        %v1179 = vsel %vm642, %v1164, %v1166
        %v1180 = vsel %vm642, %v1166, %v1168
        %v1181 = vsel %vm642, %v1170, %v1172
        %v1182 = vsel %vm642, %v1172, %v1174
        %1203 = vrot.lane.b32.xlu0 %v1043, 112
        %v1204 = vpop.permute.xlu0 %1203
        %1205 = vrot.lane.b32.xlu0 %v1044, 112
        %v1206 = vpop.permute.xlu0 %1205
        %1207 = vrot.lane.b32.xlu0 %v1045, 112
        %v1208 = vpop.permute.xlu0 %1207
        %1209 = vrot.lane.b32.xlu0 %v1046, 112
        %v1210 = vpop.permute.xlu0 %1209
        %1211 = vrot.lane.b32.xlu0 %v1047, 112
        %v1212 = vpop.permute.xlu0 %1211
        %1213 = vrot.lane.b32.xlu0 %v1048, 112
        %v1214 = vpop.permute.xlu0 %1213
        %1215 = vrot.lane.b32.xlu0 %v1049, 112
        %v1216 = vpop.permute.xlu0 %1215
        %1217 = vrot.lane.b32.xlu0 %v1050, 112
        %v1218 = vpop.permute.xlu0 %1217
        %1219 = vrot.lane.b32.xlu0 %v1051, 112
        %v1220 = vpop.permute.xlu0 %1219
        %1221 = vrot.lane.b32.xlu0 %v1052, 112
        %v1222 = vpop.permute.xlu0 %1221
        %1223 = vrot.lane.b32.xlu0 %v1053, 112
        %v1224 = vpop.permute.xlu0 %1223
        %1225 = vrot.lane.b32.xlu0 %v1054, 112
        %v1226 = vpop.permute.xlu0 %1225
        %v1227 = vsel %vm657, %v1204, %v1206
        %v1228 = vsel %vm657, %v1206, %v1208
        %v1229 = vsel %vm657, %v1210, %v1212
        %v1230 = vsel %vm657, %v1212, %v1214
        %v1231 = vsel %vm657, %v1216, %v1218
        %v1232 = vsel %vm657, %v1218, %v1220
        %v1233 = vsel %vm657, %v1222, %v1224
        %v1234 = vsel %vm657, %v1224, %v1226
        %1243 = vrot.lane.b32.xlu0 %v1000, 111
        %v1244 = vpop.permute.xlu0 %1243
        %1245 = vrot.lane.b32.xlu0 %v991, 111
        %v1246 = vpop.permute.xlu0 %1245
        %1247 = vrot.lane.b32.xlu0 %v1012, 111
        %v1248 = vpop.permute.xlu0 %1247
        %1249 = vrot.lane.b32.xlu0 %v1003, 111
        %v1250 = vpop.permute.xlu0 %1249
        %1251 = vrot.lane.b32.xlu0 %v992, 111
        %v1252 = vpop.permute.xlu0 %1251
        %1253 = vrot.lane.b32.xlu0 %v1015, 111
        %v1254 = vpop.permute.xlu0 %1253
        %1255 = vrot.lane.b32.xlu0 %v1006, 111
        %v1256 = vpop.permute.xlu0 %1255
        %1257 = vrot.lane.b32.xlu0 %v993, 111
        %v1258 = vpop.permute.xlu0 %1257
        %1259 = vrot.lane.b32.xlu0 %v1018, 111
        %v1260 = vpop.permute.xlu0 %1259
        %1261 = vrot.lane.b32.xlu0 %v1009, 111
        %v1262 = vpop.permute.xlu0 %1261
        %1263 = vrot.lane.b32.xlu0 %v994, 111
        %v1264 = vpop.permute.xlu0 %1263
        %1265 = vrot.lane.b32.xlu0 %v1021, 111
        %v1266 = vpop.permute.xlu0 %1265
        %v1267 = vsel %vm666, %v1244, %v1246
        %v1268 = vsel %vm666, %v1246, %v1248
        %v1269 = vsel %vm666, %v1250, %v1252
        %v1270 = vsel %vm666, %v1252, %v1254
        %v1271 = vsel %vm666, %v1256, %v1258
        %v1272 = vsel %vm666, %v1258, %v1260
        %v1273 = vsel %vm666, %v1262, %v1264
        %v1274 = vsel %vm666, %v1264, %v1266
        %1295 = vrot.lane.b32.xlu0 %v1055, 110
        %v1296 = vpop.permute.xlu0 %1295
        %1297 = vrot.lane.b32.xlu0 %v1056, 110
        %v1298 = vpop.permute.xlu0 %1297
        %1299 = vrot.lane.b32.xlu0 %v1057, 110
        %v1300 = vpop.permute.xlu0 %1299
        %1301 = vrot.lane.b32.xlu0 %v1058, 110
        %v1302 = vpop.permute.xlu0 %1301
        %1303 = vrot.lane.b32.xlu0 %v1059, 110
        %v1304 = vpop.permute.xlu0 %1303
        %1305 = vrot.lane.b32.xlu0 %v1060, 110
        %v1306 = vpop.permute.xlu0 %1305
        %1307 = vrot.lane.b32.xlu0 %v1061, 110
        %v1308 = vpop.permute.xlu0 %1307
        %1309 = vrot.lane.b32.xlu0 %v1062, 110
        %v1310 = vpop.permute.xlu0 %1309
        %1311 = vrot.lane.b32.xlu0 %v1063, 110
        %v1312 = vpop.permute.xlu0 %1311
        %1313 = vrot.lane.b32.xlu0 %v1064, 110
        %v1314 = vpop.permute.xlu0 %1313
        %1315 = vrot.lane.b32.xlu0 %v1065, 110
        %v1316 = vpop.permute.xlu0 %1315
        %1317 = vrot.lane.b32.xlu0 %v1066, 110
        %v1318 = vpop.permute.xlu0 %1317
        %v1319 = vsel %vm681, %v1296, %v1298
        %v1320 = vsel %vm681, %v1298, %v1300
        %v1321 = vsel %vm681, %v1302, %v1304
        %v1322 = vsel %vm681, %v1304, %v1306
        %v1323 = vsel %vm681, %v1308, %v1310
        %v1324 = vsel %vm681, %v1310, %v1312
        %v1325 = vsel %vm681, %v1314, %v1316
        %v1326 = vsel %vm681, %v1316, %v1318
        %1347 = vrot.lane.b32.xlu0 %v1067, 96
        %v1348 = vpop.permute.xlu0 %1347
        %1349 = vrot.lane.b32.xlu0 %v1068, 96
        %v1350 = vpop.permute.xlu0 %1349
        %1351 = vrot.lane.b32.xlu0 %v1069, 96
        %v1352 = vpop.permute.xlu0 %1351
        %1353 = vrot.lane.b32.xlu0 %v1070, 96
        %v1354 = vpop.permute.xlu0 %1353
        %1355 = vrot.lane.b32.xlu0 %v1071, 96
        %v1356 = vpop.permute.xlu0 %1355
        %1357 = vrot.lane.b32.xlu0 %v1072, 96
        %v1358 = vpop.permute.xlu0 %1357
        %1359 = vrot.lane.b32.xlu0 %v1073, 96
        %v1360 = vpop.permute.xlu0 %1359
        %1361 = vrot.lane.b32.xlu0 %v1074, 96
        %v1362 = vpop.permute.xlu0 %1361
        %1363 = vrot.lane.b32.xlu0 %v1075, 96
        %v1364 = vpop.permute.xlu0 %1363
        %1365 = vrot.lane.b32.xlu0 %v1076, 96
        %v1366 = vpop.permute.xlu0 %1365
        %1367 = vrot.lane.b32.xlu0 %v1077, 96
        %v1368 = vpop.permute.xlu0 %1367
        %1369 = vrot.lane.b32.xlu0 %v1078, 96
        %v1370 = vpop.permute.xlu0 %1369
        %v1371 = vsel %vm693, %v1348, %v1350
        %v1372 = vsel %vm693, %v1350, %v1352
        %v1373 = vsel %vm693, %v1354, %v1356
        %v1374 = vsel %vm693, %v1356, %v1358
        %v1375 = vsel %vm693, %v1360, %v1362
        %v1376 = vsel %vm693, %v1362, %v1364
        %v1377 = vsel %vm693, %v1366, %v1368
        %v1378 = vsel %vm693, %v1368, %v1370
        %1387 = vrot.lane.b32.xlu0 %v1000, 95
        %v1388 = vpop.permute.xlu0 %1387
        %1389 = vrot.lane.b32.xlu0 %v991, 95
        %v1390 = vpop.permute.xlu0 %1389
        %1391 = vrot.lane.b32.xlu0 %v1012, 95
        %v1392 = vpop.permute.xlu0 %1391
        %1393 = vrot.lane.b32.xlu0 %v1003, 95
        %v1394 = vpop.permute.xlu0 %1393
        %1395 = vrot.lane.b32.xlu0 %v992, 95
        %v1396 = vpop.permute.xlu0 %1395
        %1397 = vrot.lane.b32.xlu0 %v1015, 95
        %v1398 = vpop.permute.xlu0 %1397
        %1399 = vrot.lane.b32.xlu0 %v1006, 95
        %v1400 = vpop.permute.xlu0 %1399
        %1401 = vrot.lane.b32.xlu0 %v993, 95
        %v1402 = vpop.permute.xlu0 %1401
        %1403 = vrot.lane.b32.xlu0 %v1018, 95
        %v1404 = vpop.permute.xlu0 %1403
        %1405 = vrot.lane.b32.xlu0 %v1009, 95
        %v1406 = vpop.permute.xlu0 %1405
        %1407 = vrot.lane.b32.xlu0 %v994, 95
        %v1408 = vpop.permute.xlu0 %1407
        %1409 = vrot.lane.b32.xlu0 %v1021, 95
        %v1410 = vpop.permute.xlu0 %1409
        %v1411 = vsel %vm702, %v1388, %v1390
        %v1412 = vsel %vm702, %v1390, %v1392
        %v1413 = vsel %vm702, %v1394, %v1396
        %v1414 = vsel %vm702, %v1396, %v1398
        %v1415 = vsel %vm702, %v1400, %v1402
        %v1416 = vsel %vm702, %v1402, %v1404
        %v1417 = vsel %vm702, %v1406, %v1408
        %v1418 = vsel %vm702, %v1408, %v1410
        %1439 = vrot.lane.b32.xlu0 %v1079, 94
        %v1440 = vpop.permute.xlu0 %1439
        %1441 = vrot.lane.b32.xlu0 %v1080, 94
        %v1442 = vpop.permute.xlu0 %1441
        %1443 = vrot.lane.b32.xlu0 %v1081, 94
        %v1444 = vpop.permute.xlu0 %1443
        %1445 = vrot.lane.b32.xlu0 %v1082, 94
        %v1446 = vpop.permute.xlu0 %1445
        %1447 = vrot.lane.b32.xlu0 %v1083, 94
        %v1448 = vpop.permute.xlu0 %1447
        %1449 = vrot.lane.b32.xlu0 %v1084, 94
        %v1450 = vpop.permute.xlu0 %1449
        %1451 = vrot.lane.b32.xlu0 %v1085, 94
        %v1452 = vpop.permute.xlu0 %1451
        %1453 = vrot.lane.b32.xlu0 %v1086, 94
        %v1454 = vpop.permute.xlu0 %1453
        %1455 = vrot.lane.b32.xlu0 %v1087, 94
        %v1456 = vpop.permute.xlu0 %1455
        %1457 = vrot.lane.b32.xlu0 %v1088, 94
        %v1458 = vpop.permute.xlu0 %1457
        %1459 = vrot.lane.b32.xlu0 %v1089, 94
        %v1460 = vpop.permute.xlu0 %1459
        %1461 = vrot.lane.b32.xlu0 %v1090, 94
        %v1462 = vpop.permute.xlu0 %1461
        %v1463 = vsel %vm714, %v1440, %v1442
        %v1464 = vsel %vm714, %v1442, %v1444
        %v1465 = vsel %vm714, %v1446, %v1448
        %v1466 = vsel %vm714, %v1448, %v1450
        %v1467 = vsel %vm714, %v1452, %v1454
        %v1468 = vsel %vm714, %v1454, %v1456
        %v1469 = vsel %vm714, %v1458, %v1460
        %v1470 = vsel %vm714, %v1460, %v1462
        %1480 = vset.pattern.permute.xlu0 0
        %1481 = vperm.xlu0 %1480, %v935
        %v1482 = vpop.permute.xlu0 %1481
        %1485 = vset.pattern.permute.xlu0 0
        %1486 = vperm.xlu0 %1485, %v936
        %v1487 = vpop.permute.xlu0 %1486
        %1490 = vset.pattern.permute.xlu0 0
        %1491 = vperm.xlu0 %1490, %v937
        %v1492 = vpop.permute.xlu0 %1491
        %1495 = vset.pattern.permute.xlu0 0
        %1496 = vperm.xlu0 %1495, %v938
        %v1497 = vpop.permute.xlu0 %1496
        %1500 = vset.pattern.permute.xlu0 0
        %1501 = vperm.xlu0 %1500, %v939
        %v1502 = vpop.permute.xlu0 %1501
        %1505 = vset.pattern.permute.xlu0 0
        %1506 = vperm.xlu0 %1505, %v940
        %v1507 = vpop.permute.xlu0 %1506
        %1510 = vset.pattern.permute.xlu0 0
        %1511 = vperm.xlu0 %1510, %v941
        %v1512 = vpop.permute.xlu0 %1511
        %1515 = vset.pattern.permute.xlu0 0
        %1516 = vperm.xlu0 %1515, %v942
        %v1517 = vpop.permute.xlu0 %1516
        %v1543 = vunpack.c.l.b16 %v911
        %v1544 = vunpack.c.h.b16 %v911
        %v1545 = vunpack.c.l.b16 %v912
        %v1546 = vunpack.c.h.b16 %v912
        %v1547 = vunpack.c.l.b16 %v913
        %v1548 = vunpack.c.l.b16 %v914
        %v1549 = vunpack.c.h.b16 %v914
        %v1550 = vunpack.c.l.b16 %v915
        %v1551 = vunpack.c.h.b16 %v915
        %v1552 = vunpack.c.l.b16 %v916
        %v1553 = vunpack.c.l.b16 %v917
        %v1554 = vunpack.c.h.b16 %v917
        %v1555 = vunpack.c.l.b16 %v918
        %v1556 = vunpack.c.h.b16 %v918
        %v1557 = vunpack.c.l.b16 %v919
        %v1558 = vunpack.c.l.b16 %v920
        %v1559 = vunpack.c.h.b16 %v920
        %v1560 = vunpack.c.l.b16 %v921
        %v1561 = vunpack.c.h.b16 %v921
        %v1562 = vunpack.c.l.b16 %v922
        %v1563 = vunpack.c.l.b16 %v923
        %v1564 = vunpack.c.h.b16 %v923
        %v1565 = vunpack.c.l.b16 %v924
        %v1566 = vunpack.c.h.b16 %v924
        %v1567 = vunpack.c.l.b16 %v925
        %v1568 = vunpack.c.l.b16 %v926
        %v1569 = vunpack.c.h.b16 %v926
        %v1570 = vunpack.c.l.b16 %v927
        %v1571 = vunpack.c.h.b16 %v927
        %v1572 = vunpack.c.l.b16 %v928
        %v1573 = vunpack.c.l.b16 %v929
        %v1574 = vunpack.c.h.b16 %v929
        %v1575 = vunpack.c.l.b16 %v930
        %v1576 = vunpack.c.h.b16 %v930
        %v1577 = vunpack.c.l.b16 %v931
        %v1578 = vunpack.c.l.b16 %v932
        %v1579 = vunpack.c.h.b16 %v932
        %v1580 = vunpack.c.l.b16 %v933
        %v1581 = vunpack.c.h.b16 %v933
        %v1582 = vunpack.c.l.b16 %v934
        %v1583 = vpack.c.b16 %v1548, %v1543
        %v1584 = vpack.c.b16 %v1549, %v1544
        %v1585 = vpack.c.b16 %v1550, %v1545
        %v1586 = vpack.c.b16 %v1551, %v1546
        %v1587 = vpack.c.b16 %v1552, %v1547
        %v1588 = vpack.c.b16 %v1558, %v1553
        %v1589 = vpack.c.b16 %v1559, %v1554
        %v1590 = vpack.c.b16 %v1560, %v1555
        %v1591 = vpack.c.b16 %v1561, %v1556
        %v1592 = vpack.c.b16 %v1562, %v1557
        %v1593 = vpack.c.b16 %v1568, %v1563
        %v1594 = vpack.c.b16 %v1569, %v1564
        %v1595 = vpack.c.b16 %v1570, %v1565
        %v1596 = vpack.c.b16 %v1571, %v1566
        %v1597 = vpack.c.b16 %v1572, %v1567
        %v1598 = vpack.c.b16 %v1578, %v1573
        %v1599 = vpack.c.b16 %v1579, %v1574
        %v1600 = vpack.c.b16 %v1580, %v1575
        %v1601 = vpack.c.b16 %v1581, %v1576
        %v1602 = vpack.c.b16 %v1582, %v1577
        %vm1619 = vcmask 523264
        %v1621 = vsel %vm1619, %v1587, 0
        %v1624 = vsel %vm1619, %v1592, 0
        %v1627 = vsel %vm1619, %v1597, 0
        %v1630 = vsel %vm1619, %v1602, 0
        %1632 = vmatpush.bf16.msra.mxu0 %v1129
        %1633 = vmatpush.bf16.msra.mxu0 %v1127
        %1634 = vmatpush.bf16.msra.mxu0 %v1125
        %1635 = vmatpush.bf16.msra.mxu0 %v1123
        %1636 = vmatpush.bf16.msra.mxu0 %v1029
        %1637 = vmatpush.bf16.msra.mxu0 %v1027
        %1638 = vmatpush.bf16.msra.mxu0 %v1025
        %1639 = vmatpush.bf16.msra.mxu0 %v1023
        %1640 = vmatmul.bf16.gmra.mxu0 %v1583
        %v1641 = vpop.f32.mrf.mxu0
        %v1642 = vadd.f32 %v1482, %v1641
        %v1643 = vpop.f32.mrf.mxu0
        %v1644 = vadd.f32 %v1487, %v1643
        %1645 = vmatmul.bf16.gmra.mxu0 %v1588
        %v1646 = vpop.f32.mrf.mxu0
        %v1647 = vadd.f32 %v1492, %v1646
        %v1648 = vpop.f32.mrf.mxu0
        %v1649 = vadd.f32 %v1497, %v1648
        %1650 = vmatmul.bf16.gmra.mxu0 %v1593
        %v1651 = vpop.f32.mrf.mxu0
        %v1652 = vadd.f32 %v1502, %v1651
        %v1653 = vpop.f32.mrf.mxu0
        %v1654 = vadd.f32 %v1507, %v1653
        %1655 = vmatmul.bf16.gmra.mxu0 %v1598
        %v1656 = vpop.f32.mrf.mxu0
        %v1657 = vadd.f32 %v1512, %v1656
        %v1658 = vpop.f32.mrf.mxu0
        %v1659 = vadd.f32 %v1517, %v1658
        %1660 = vdwg.mxu0
        %1661 = vmatpush.bf16.msra.mxu0 %v1233
        %1662 = vmatpush.bf16.msra.mxu0 %v1231
        %1663 = vmatpush.bf16.msra.mxu0 %v1229
        %1664 = vmatpush.bf16.msra.mxu0 %v1227
        %1665 = vmatpush.bf16.msra.mxu0 %v1181
        %1666 = vmatpush.bf16.msra.mxu0 %v1179
        %1667 = vmatpush.bf16.msra.mxu0 %v1177
        %1668 = vmatpush.bf16.msra.mxu0 %v1175
        %1669 = vmatmul.bf16.gmra.mxu0 %v1584
        %v1670 = vpop.f32.mrf.mxu0
        %v1671 = vadd.f32 %v1642, %v1670
        %v1672 = vpop.f32.mrf.mxu0
        %v1673 = vadd.f32 %v1644, %v1672
        %1674 = vmatmul.bf16.gmra.mxu0 %v1589
        %v1675 = vpop.f32.mrf.mxu0
        %v1676 = vadd.f32 %v1647, %v1675
        %v1677 = vpop.f32.mrf.mxu0
        %v1678 = vadd.f32 %v1649, %v1677
        %1679 = vmatmul.bf16.gmra.mxu0 %v1594
        %v1680 = vpop.f32.mrf.mxu0
        %v1681 = vadd.f32 %v1652, %v1680
        %v1682 = vpop.f32.mrf.mxu0
        %v1683 = vadd.f32 %v1654, %v1682
        %1684 = vmatmul.bf16.gmra.mxu0 %v1599
        %v1685 = vpop.f32.mrf.mxu0
        %v1686 = vadd.f32 %v1657, %v1685
        %v1687 = vpop.f32.mrf.mxu0
        %v1688 = vadd.f32 %v1659, %v1687
        %1689 = vdwg.mxu0
        %1690 = vmatpush.bf16.msra.mxu0 %v1325
        %1691 = vmatpush.bf16.msra.mxu0 %v1323
        %1692 = vmatpush.bf16.msra.mxu0 %v1321
        %1693 = vmatpush.bf16.msra.mxu0 %v1319
        %1694 = vmatpush.bf16.msra.mxu0 %v1273
        %1695 = vmatpush.bf16.msra.mxu0 %v1271
        %1696 = vmatpush.bf16.msra.mxu0 %v1269
        %1697 = vmatpush.bf16.msra.mxu0 %v1267
        %1698 = vmatmul.bf16.gmra.mxu0 %v1585
        %v1699 = vpop.f32.mrf.mxu0
        %v1700 = vadd.f32 %v1671, %v1699
        %v1701 = vpop.f32.mrf.mxu0
        %v1702 = vadd.f32 %v1673, %v1701
        %1703 = vmatmul.bf16.gmra.mxu0 %v1590
        %v1704 = vpop.f32.mrf.mxu0
        %v1705 = vadd.f32 %v1676, %v1704
        %v1706 = vpop.f32.mrf.mxu0
        %v1707 = vadd.f32 %v1678, %v1706
        %1708 = vmatmul.bf16.gmra.mxu0 %v1595
        %v1709 = vpop.f32.mrf.mxu0
        %v1710 = vadd.f32 %v1681, %v1709
        %v1711 = vpop.f32.mrf.mxu0
        %v1712 = vadd.f32 %v1683, %v1711
        %1713 = vmatmul.bf16.gmra.mxu0 %v1600
        %v1714 = vpop.f32.mrf.mxu0
        %v1715 = vadd.f32 %v1686, %v1714
        %v1716 = vpop.f32.mrf.mxu0
        %v1717 = vadd.f32 %v1688, %v1716
        %1718 = vdwg.mxu0
        %1719 = vmatpush.bf16.msra.mxu0 %v1417
        %1720 = vmatpush.bf16.msra.mxu0 %v1415
        %1721 = vmatpush.bf16.msra.mxu0 %v1413
        %1722 = vmatpush.bf16.msra.mxu0 %v1411
        %1723 = vmatpush.bf16.msra.mxu0 %v1377
        %1724 = vmatpush.bf16.msra.mxu0 %v1375
        %1725 = vmatpush.bf16.msra.mxu0 %v1373
        %1726 = vmatpush.bf16.msra.mxu0 %v1371
        %1727 = vmatmul.bf16.gmra.mxu0 %v1586
        %v1728 = vpop.f32.mrf.mxu0
        %v1729 = vadd.f32 %v1700, %v1728
        %v1730 = vpop.f32.mrf.mxu0
        %v1731 = vadd.f32 %v1702, %v1730
        %1732 = vmatmul.bf16.gmra.mxu0 %v1591
        %v1733 = vpop.f32.mrf.mxu0
        %v1734 = vadd.f32 %v1705, %v1733
        %v1735 = vpop.f32.mrf.mxu0
        %v1736 = vadd.f32 %v1707, %v1735
        %1737 = vmatmul.bf16.gmra.mxu0 %v1596
        %v1738 = vpop.f32.mrf.mxu0
        %v1739 = vadd.f32 %v1710, %v1738
        %v1740 = vpop.f32.mrf.mxu0
        %v1741 = vadd.f32 %v1712, %v1740
        %1742 = vmatmul.bf16.gmra.mxu0 %v1601
        %v1743 = vpop.f32.mrf.mxu0
        %v1744 = vadd.f32 %v1715, %v1743
        %v1745 = vpop.f32.mrf.mxu0
        %v1746 = vadd.f32 %v1717, %v1745
        %1747 = vdwg.mxu0
        %1748 = vmatpush.bf16.msra.mxu0 0
        %1749 = vmatpush.bf16.msra.mxu0 0
        %1750 = vmatpush.bf16.msra.mxu0 0
        %1751 = vmatpush.bf16.msra.mxu0 0
        %1752 = vmatpush.bf16.msra.mxu0 %v1469
        %1753 = vmatpush.bf16.msra.mxu0 %v1467
        %1754 = vmatpush.bf16.msra.mxu0 %v1465
        %1755 = vmatpush.bf16.msra.mxu0 %v1463
        %1756 = vmatmul.bf16.gmra.mxu0 %v1621
        %v1757 = vpop.f32.mrf.mxu0
        %v1758 = vadd.f32 %v1729, %v1757
        %v1759 = vpop.f32.mrf.mxu0
        %v1760 = vadd.f32 %v1731, %v1759
        %1761 = vmatmul.bf16.gmra.mxu0 %v1624
        %v1762 = vpop.f32.mrf.mxu0
        %v1763 = vadd.f32 %v1734, %v1762
        %v1764 = vpop.f32.mrf.mxu0
        %v1765 = vadd.f32 %v1736, %v1764
        %1766 = vmatmul.bf16.gmra.mxu0 %v1627
        %v1767 = vpop.f32.mrf.mxu0
        %v1768 = vadd.f32 %v1739, %v1767
        %v1769 = vpop.f32.mrf.mxu0
        %v1770 = vadd.f32 %v1741, %v1769
        %1771 = vmatmul.bf16.gmra.mxu0 %v1630
        %v1772 = vpop.f32.mrf.mxu0
        %v1773 = vadd.f32 %v1744, %v1772
        %v1774 = vpop.f32.mrf.mxu0
        %v1775 = vadd.f32 %v1746, %v1774
        %1776 = vdwg.mxu0
        %1777 = vmatpush.bf16.msra.mxu0 %v1130
        %1778 = vmatpush.bf16.msra.mxu0 %v1128
        %1779 = vmatpush.bf16.msra.mxu0 %v1126
        %1780 = vmatpush.bf16.msra.mxu0 %v1124
        %1781 = vmatpush.bf16.msra.mxu0 %v1030
        %1782 = vmatpush.bf16.msra.mxu0 %v1028
        %1783 = vmatpush.bf16.msra.mxu0 %v1026
        %1784 = vmatpush.bf16.msra.mxu0 %v1024
        %1785 = vmatmul.bf16.gmra.mxu0 %v1583
        %v1786 = vpop.f32.mrf.mxu0
        %v1787 = vadd.f32 %v1482, %v1786
        %v1788 = vpop.f32.mrf.mxu0
        %v1789 = vadd.f32 %v1487, %v1788
        %1790 = vmatmul.bf16.gmra.mxu0 %v1588
        %v1791 = vpop.f32.mrf.mxu0
        %v1792 = vadd.f32 %v1492, %v1791
        %v1793 = vpop.f32.mrf.mxu0
        %v1794 = vadd.f32 %v1497, %v1793
        %1795 = vmatmul.bf16.gmra.mxu0 %v1593
        %v1796 = vpop.f32.mrf.mxu0
        %v1797 = vadd.f32 %v1502, %v1796
        %v1798 = vpop.f32.mrf.mxu0
        %v1799 = vadd.f32 %v1507, %v1798
        %1800 = vmatmul.bf16.gmra.mxu0 %v1598
        %v1801 = vpop.f32.mrf.mxu0
        %v1802 = vadd.f32 %v1512, %v1801
        %v1803 = vpop.f32.mrf.mxu0
        %v1804 = vadd.f32 %v1517, %v1803
        %1805 = vdwg.mxu0
        %1806 = vmatpush.bf16.msra.mxu0 %v1234
        %1807 = vmatpush.bf16.msra.mxu0 %v1232
        %1808 = vmatpush.bf16.msra.mxu0 %v1230
        %1809 = vmatpush.bf16.msra.mxu0 %v1228
        %1810 = vmatpush.bf16.msra.mxu0 %v1182
        %1811 = vmatpush.bf16.msra.mxu0 %v1180
        %1812 = vmatpush.bf16.msra.mxu0 %v1178
        %1813 = vmatpush.bf16.msra.mxu0 %v1176
        %1814 = vmatmul.bf16.gmra.mxu0 %v1584
        %v1815 = vpop.f32.mrf.mxu0
        %v1816 = vadd.f32 %v1787, %v1815
        %v1817 = vpop.f32.mrf.mxu0
        %v1818 = vadd.f32 %v1789, %v1817
        %1819 = vmatmul.bf16.gmra.mxu0 %v1589
        %v1820 = vpop.f32.mrf.mxu0
        %v1821 = vadd.f32 %v1792, %v1820
        %v1822 = vpop.f32.mrf.mxu0
        %v1823 = vadd.f32 %v1794, %v1822
        %1824 = vmatmul.bf16.gmra.mxu0 %v1594
        %v1825 = vpop.f32.mrf.mxu0
        %v1826 = vadd.f32 %v1797, %v1825
        %v1827 = vpop.f32.mrf.mxu0
        %v1828 = vadd.f32 %v1799, %v1827
        %1829 = vmatmul.bf16.gmra.mxu0 %v1599
        %v1830 = vpop.f32.mrf.mxu0
        %v1831 = vadd.f32 %v1802, %v1830
        %v1832 = vpop.f32.mrf.mxu0
        %v1833 = vadd.f32 %v1804, %v1832
        %1834 = vdwg.mxu0
        %1835 = vmatpush.bf16.msra.mxu0 %v1326
        %1836 = vmatpush.bf16.msra.mxu0 %v1324
        %1837 = vmatpush.bf16.msra.mxu0 %v1322
        %1838 = vmatpush.bf16.msra.mxu0 %v1320
        %1839 = vmatpush.bf16.msra.mxu0 %v1274
        %1840 = vmatpush.bf16.msra.mxu0 %v1272
        %1841 = vmatpush.bf16.msra.mxu0 %v1270
        %1842 = vmatpush.bf16.msra.mxu0 %v1268
        %1843 = vmatmul.bf16.gmra.mxu0 %v1585
        %v1844 = vpop.f32.mrf.mxu0
        %v1845 = vadd.f32 %v1816, %v1844
        %v1846 = vpop.f32.mrf.mxu0
        %v1847 = vadd.f32 %v1818, %v1846
        %1848 = vmatmul.bf16.gmra.mxu0 %v1590
        %v1849 = vpop.f32.mrf.mxu0
        %v1850 = vadd.f32 %v1821, %v1849
        %v1851 = vpop.f32.mrf.mxu0
        %v1852 = vadd.f32 %v1823, %v1851
        %1853 = vmatmul.bf16.gmra.mxu0 %v1595
        %v1854 = vpop.f32.mrf.mxu0
        %v1855 = vadd.f32 %v1826, %v1854
        %v1856 = vpop.f32.mrf.mxu0
        %v1857 = vadd.f32 %v1828, %v1856
        %1858 = vmatmul.bf16.gmra.mxu0 %v1600
        %v1859 = vpop.f32.mrf.mxu0
        %v1860 = vadd.f32 %v1831, %v1859
        %v1861 = vpop.f32.mrf.mxu0
        %v1862 = vadd.f32 %v1833, %v1861
        %1863 = vdwg.mxu0
        %1864 = vmatpush.bf16.msra.mxu0 %v1418
        %1865 = vmatpush.bf16.msra.mxu0 %v1416
        %1866 = vmatpush.bf16.msra.mxu0 %v1414
        %1867 = vmatpush.bf16.msra.mxu0 %v1412
        %1868 = vmatpush.bf16.msra.mxu0 %v1378
        %1869 = vmatpush.bf16.msra.mxu0 %v1376
        %1870 = vmatpush.bf16.msra.mxu0 %v1374
        %1871 = vmatpush.bf16.msra.mxu0 %v1372
        %1872 = vmatmul.bf16.gmra.mxu0 %v1586
        %v1873 = vpop.f32.mrf.mxu0
        %v1874 = vadd.f32 %v1845, %v1873
        %v1875 = vpop.f32.mrf.mxu0
        %v1876 = vadd.f32 %v1847, %v1875
        %1877 = vmatmul.bf16.gmra.mxu0 %v1591
        %v1878 = vpop.f32.mrf.mxu0
        %v1879 = vadd.f32 %v1850, %v1878
        %v1880 = vpop.f32.mrf.mxu0
        %v1881 = vadd.f32 %v1852, %v1880
        %1882 = vmatmul.bf16.gmra.mxu0 %v1596
        %v1883 = vpop.f32.mrf.mxu0
        %v1884 = vadd.f32 %v1855, %v1883
        %v1885 = vpop.f32.mrf.mxu0
        %v1886 = vadd.f32 %v1857, %v1885
        %1887 = vmatmul.bf16.gmra.mxu0 %v1601
        %v1888 = vpop.f32.mrf.mxu0
        %v1889 = vadd.f32 %v1860, %v1888
        %v1890 = vpop.f32.mrf.mxu0
        %v1891 = vadd.f32 %v1862, %v1890
        %1892 = vdwg.mxu0
        %1893 = vmatpush.bf16.msra.mxu0 0
        %1894 = vmatpush.bf16.msra.mxu0 0
        %1895 = vmatpush.bf16.msra.mxu0 0
        %1896 = vmatpush.bf16.msra.mxu0 0
        %1897 = vmatpush.bf16.msra.mxu0 %v1470
        %1898 = vmatpush.bf16.msra.mxu0 %v1468
        %1899 = vmatpush.bf16.msra.mxu0 %v1466
        %1900 = vmatpush.bf16.msra.mxu0 %v1464
        %1901 = vmatmul.bf16.gmra.mxu0 %v1621
        %v1902 = vpop.f32.mrf.mxu0
        %v1903 = vadd.f32 %v1874, %v1902
        %v1904 = vpop.f32.mrf.mxu0
        %v1905 = vadd.f32 %v1876, %v1904
        %1906 = vmatmul.bf16.gmra.mxu0 %v1624
        %v1907 = vpop.f32.mrf.mxu0
        %v1908 = vadd.f32 %v1879, %v1907
        %v1909 = vpop.f32.mrf.mxu0
        %v1910 = vadd.f32 %v1881, %v1909
        %1911 = vmatmul.bf16.gmra.mxu0 %v1627
        %v1912 = vpop.f32.mrf.mxu0
        %v1913 = vadd.f32 %v1884, %v1912
        %v1914 = vpop.f32.mrf.mxu0
        %v1915 = vadd.f32 %v1886, %v1914
        %1916 = vmatmul.bf16.gmra.mxu0 %v1630
        %v1917 = vpop.f32.mrf.mxu0
        %v1918 = vadd.f32 %v1889, %v1917
        %v1919 = vpop.f32.mrf.mxu0
        %v1920 = vadd.f32 %v1891, %v1919
        %1921 = vdwg.mxu0
        %v1922 = vmax.f32 %v1758, 0.0
        %v1923 = vmax.f32 %v1903, 0.0
        %v1924 = vmax.f32 %v1760, 0.0
        %v1925 = vmax.f32 %v1905, 0.0
        %v1926 = vmax.f32 %v1763, 0.0
        %v1927 = vmax.f32 %v1908, 0.0
        %v1928 = vmax.f32 %v1765, 0.0
        %v1929 = vmax.f32 %v1910, 0.0
        %v1930 = vmax.f32 %v1768, 0.0
        %v1931 = vmax.f32 %v1913, 0.0
        %v1932 = vmax.f32 %v1770, 0.0
        %v1933 = vmax.f32 %v1915, 0.0
        %v1934 = vmax.f32 %v1773, 0.0
        %v1935 = vmax.f32 %v1918, 0.0
        %v1936 = vmax.f32 %v1775, 0.0
        %v1937 = vmax.f32 %v1920, 0.0
        %v1938 = vpack.c.bf16 %v1923, %v1922
        %v1939 = vpack.c.bf16 %v1925, %v1924
        %v1940 = vpack.c.bf16 %v1927, %v1926
        %v1941 = vpack.c.bf16 %v1929, %v1928
        %v1942 = vpack.c.bf16 %v1931, %v1930
        %v1943 = vpack.c.bf16 %v1933, %v1932
        %v1944 = vpack.c.bf16 %v1935, %v1934
        %v1945 = vpack.c.bf16 %v1937, %v1936
        %v1946 = vld [vmem:[#allocation2] sm:$0xff]
        %v1947 = vld [vmem:[#allocation2 + $0x8] sm:$0xff]
        %v1948 = vld [vmem:[#allocation2 + $0x10] sm:$0xf]
        %v1949 = vld [vmem:[#allocation2 + $0x14] sm:$0xff]
        %v1950 = vld [vmem:[#allocation2 + $0x1c] sm:$0xff]
        %v1951 = vld [vmem:[#allocation2 + $0x24] sm:$0xf]
        %v1952 = vld [vmem:[#allocation2 + $0x28] sm:$0xff]
        %v1953 = vld [vmem:[#allocation2 + $0x30] sm:$0xff]
        %v1954 = vld [vmem:[#allocation2 + $0x38] sm:$0xf]
        %v1955 = vld [vmem:[#allocation2 + $0x3c] sm:$0xff]
        %v1956 = vld [vmem:[#allocation2 + $0x44] sm:$0xff]
        %v1957 = vld [vmem:[#allocation2 + $0x4c] sm:$0xf]
        %v1958 = vld [vmem:[#allocation2 + $0x50] sm:$0xff]
        %v1959 = vld [vmem:[#allocation2 + $0x58] sm:$0xff]
        %v1960 = vld [vmem:[#allocation2 + $0x60] sm:$0xf]
        %v1961 = vld [vmem:[#allocation2 + $0x64] sm:$0xff]
        %v1962 = vld [vmem:[#allocation2 + $0x6c] sm:$0xff]
        %v1963 = vld [vmem:[#allocation2 + $0x74] sm:$0xf]
        %v1964 = vld [vmem:[#allocation2 + $0x78] sm:$0xff]
        %v1965 = vld [vmem:[#allocation2 + $0x80] sm:$0xff]
        %v1966 = vld [vmem:[#allocation2 + $0x88] sm:$0xf]
        %v1967 = vld [vmem:[#allocation2 + $0x8c] sm:$0xff]
        %v1968 = vld [vmem:[#allocation2 + $0x94] sm:$0xff]
        %v1969 = vld [vmem:[#allocation2 + $0x9c] sm:$0xf]
        %v1970 = vld [vmem:[%s6] sm:$0xff]
        %v1971 = vld [vmem:[%s6 + $0x8] sm:$0xff]
        %v1972 = vld [vmem:[%s6 + $0x10] sm:$0xff]
        %v1973 = vld [vmem:[%s6 + $0x18] sm:$0xff]
        %v1974 = vld [vmem:[%s6 + $0x20] sm:$0xff]
        %v1975 = vld [vmem:[%s6 + $0x28] sm:$0xff]
        %v1976 = vld [vmem:[%s6 + $0x30] sm:$0xff]
        %v1977 = vld [vmem:[%s6 + $0x38] sm:$0xff]
        %v1986 = vunpack.c.l.b16 %v1938
        %v1987 = vunpack.c.h.b16 %v1938
        %v1988 = vunpack.c.l.b16 %v1939
        %v1989 = vunpack.c.h.b16 %v1939
        %v1990 = vunpack.c.l.b16 %v1940
        %v1991 = vunpack.c.h.b16 %v1940
        %v1992 = vunpack.c.l.b16 %v1941
        %v1993 = vunpack.c.h.b16 %v1941
        %v1994 = vunpack.c.l.b16 %v1942
        %v1995 = vunpack.c.h.b16 %v1942
        %v1996 = vunpack.c.l.b16 %v1943
        %v1997 = vunpack.c.h.b16 %v1943
        %v1998 = vunpack.c.l.b16 %v1944
        %v1999 = vunpack.c.h.b16 %v1944
        %v2000 = vunpack.c.l.b16 %v1945
        %v2001 = vunpack.c.h.b16 %v1945
        %v2002 = vpack.c.b16 %v1988, %v1986
        %v2003 = vpack.c.b16 %v1989, %v1987
        %v2004 = vpack.c.b16 %v1992, %v1990
        %v2005 = vpack.c.b16 %v1993, %v1991
        %v2006 = vpack.c.b16 %v1996, %v1994
        %v2007 = vpack.c.b16 %v1997, %v1995
        %v2008 = vpack.c.b16 %v2000, %v1998
        %v2009 = vpack.c.b16 %v2001, %v1999
        %2010 = vrot.lane.b32.xlu0 %v2002, 17
        %v2011 = vpop.permute.xlu0 %2010
        %2012 = vrot.lane.b32.xlu0 %v2003, 17
        %v2013 = vpop.permute.xlu0 %2012
        %2014 = vrot.lane.b32.xlu0 %v2004, 17
        %v2015 = vpop.permute.xlu0 %2014
        %2016 = vrot.lane.b32.xlu0 %v2005, 17
        %v2017 = vpop.permute.xlu0 %2016
        %2018 = vrot.lane.b32.xlu0 %v2006, 17
        %v2019 = vpop.permute.xlu0 %2018
        %2020 = vrot.lane.b32.xlu0 %v2007, 17
        %v2021 = vpop.permute.xlu0 %2020
        %2022 = vrot.lane.b32.xlu0 %v2008, 17
        %v2023 = vpop.permute.xlu0 %2022
        %2024 = vrot.lane.b32.xlu0 %v2009, 17
        %v2025 = vpop.permute.xlu0 %2024
        %v2026 = vsel %vm426, %v2011, %v2013
        %v2027 = vsel %vm426, %v2015, %v2017
        %v2028 = vsel %vm426, %v2019, %v2021
        %v2029 = vsel %vm426, %v2023, %v2025
        %v2035 = vsel %vm429, 0, %v2011
        %v2038 = vsel %vm429, 0, %v2015
        %v2041 = vsel %vm429, 0, %v2019
        %v2044 = vsel %vm429, 0, %v2023
        %v2047 = vsel %vm429, %v2013, 0
        %v2050 = vsel %vm429, %v2017, 0
        %v2053 = vsel %vm429, %v2021, 0
        %v2056 = vsel %vm429, %v2025, 0
        %v2058 = vsel %vm451, 0, %v2035
        %v2059 = vsel %vm458, 0, %v2026
        %v2060 = vsel %vm451, 0, %v2038
        %v2061 = vsel %vm458, 0, %v2027
        %v2062 = vsel %vm451, 0, %v2041
        %v2063 = vsel %vm458, 0, %v2028
        %v2064 = vsel %vm451, 0, %v2044
        %v2065 = vsel %vm458, 0, %v2029
        %v2066 = vsel %vm481, 0, %v2035
        %v2067 = vsel %vm488, 0, %v2026
        %v2068 = vsel %vm495, 0, %v2047
        %v2069 = vsel %vm481, 0, %v2038
        %v2070 = vsel %vm488, 0, %v2027
        %v2071 = vsel %vm495, 0, %v2050
        %v2072 = vsel %vm481, 0, %v2041
        %v2073 = vsel %vm488, 0, %v2028
        %v2074 = vsel %vm495, 0, %v2053
        %v2075 = vsel %vm481, 0, %v2044
        %v2076 = vsel %vm488, 0, %v2029
        %v2077 = vsel %vm495, 0, %v2056
        %v2078 = vsel %vm511, 0, %v2035
        %v2079 = vsel %vm518, 0, %v2026
        %v2080 = vsel %vm525, 0, %v2047
        %v2081 = vsel %vm511, 0, %v2038
        %v2082 = vsel %vm518, 0, %v2027
        %v2083 = vsel %vm525, 0, %v2050
        %v2084 = vsel %vm511, 0, %v2041
        %v2085 = vsel %vm518, 0, %v2028
        %v2086 = vsel %vm525, 0, %v2053
        %v2087 = vsel %vm511, 0, %v2044
        %v2088 = vsel %vm518, 0, %v2029
        %v2089 = vsel %vm525, 0, %v2056
        %v2090 = vsel %vm541, 0, %v2035
        %v2091 = vsel %vm548, 0, %v2026
        %v2092 = vsel %vm555, 0, %v2047
        %v2093 = vsel %vm541, 0, %v2038
        %v2094 = vsel %vm548, 0, %v2027
        %v2095 = vsel %vm555, 0, %v2050
        %v2096 = vsel %vm541, 0, %v2041
        %v2097 = vsel %vm548, 0, %v2028
        %v2098 = vsel %vm555, 0, %v2053
        %v2099 = vsel %vm541, 0, %v2044
        %v2100 = vsel %vm548, 0, %v2029
        %v2101 = vsel %vm555, 0, %v2056
        %v2102 = vsel %vm571, 0, %v2035
        %v2103 = vsel %vm578, 0, %v2026
        %v2104 = vsel %vm585, 0, %v2047
        %v2105 = vsel %vm571, 0, %v2038
        %v2106 = vsel %vm578, 0, %v2027
        %v2107 = vsel %vm585, 0, %v2050
        %v2108 = vsel %vm571, 0, %v2041
        %v2109 = vsel %vm578, 0, %v2028
        %v2110 = vsel %vm585, 0, %v2053
        %v2111 = vsel %vm571, 0, %v2044
        %v2112 = vsel %vm578, 0, %v2029
        %v2113 = vsel %vm585, 0, %v2056
        %v2114 = vsel %vm601, 0, %v2035
        %v2115 = vsel %vm608, 0, %v2026
        %v2116 = vsel %vm615, 0, %v2047
        %v2117 = vsel %vm601, 0, %v2038
        %v2118 = vsel %vm608, 0, %v2027
        %v2119 = vsel %vm615, 0, %v2050
        %v2120 = vsel %vm601, 0, %v2041
        %v2121 = vsel %vm608, 0, %v2028
        %v2122 = vsel %vm615, 0, %v2053
        %v2123 = vsel %vm601, 0, %v2044
        %v2124 = vsel %vm608, 0, %v2029
        %v2125 = vsel %vm615, 0, %v2056
        %2134 = vrot.lane.b32.xlu0 %v2035, 127
        %v2135 = vpop.permute.xlu0 %2134
        %2136 = vrot.lane.b32.xlu0 %v2026, 127
        %v2137 = vpop.permute.xlu0 %2136
        %2138 = vrot.lane.b32.xlu0 %v2047, 127
        %v2139 = vpop.permute.xlu0 %2138
        %2140 = vrot.lane.b32.xlu0 %v2038, 127
        %v2141 = vpop.permute.xlu0 %2140
        %2142 = vrot.lane.b32.xlu0 %v2027, 127
        %v2143 = vpop.permute.xlu0 %2142
        %2144 = vrot.lane.b32.xlu0 %v2050, 127
        %v2145 = vpop.permute.xlu0 %2144
        %2146 = vrot.lane.b32.xlu0 %v2041, 127
        %v2147 = vpop.permute.xlu0 %2146
        %2148 = vrot.lane.b32.xlu0 %v2028, 127
        %v2149 = vpop.permute.xlu0 %2148
        %2150 = vrot.lane.b32.xlu0 %v2053, 127
        %v2151 = vpop.permute.xlu0 %2150
        %2152 = vrot.lane.b32.xlu0 %v2044, 127
        %v2153 = vpop.permute.xlu0 %2152
        %2154 = vrot.lane.b32.xlu0 %v2029, 127
        %v2155 = vpop.permute.xlu0 %2154
        %2156 = vrot.lane.b32.xlu0 %v2056, 127
        %v2157 = vpop.permute.xlu0 %2156
        %v2158 = vsel %vm630, %v2135, %v2137
        %v2159 = vsel %vm630, %v2137, %v2139
        %v2160 = vsel %vm630, %v2141, %v2143
        %v2161 = vsel %vm630, %v2143, %v2145
        %v2162 = vsel %vm630, %v2147, %v2149
        %v2163 = vsel %vm630, %v2149, %v2151
        %v2164 = vsel %vm630, %v2153, %v2155
        %v2165 = vsel %vm630, %v2155, %v2157
        %2186 = vrot.lane.b32.xlu0 %v2066, 126
        %v2187 = vpop.permute.xlu0 %2186
        %2188 = vrot.lane.b32.xlu0 %v2067, 126
        %v2189 = vpop.permute.xlu0 %2188
        %2190 = vrot.lane.b32.xlu0 %v2068, 126
        %v2191 = vpop.permute.xlu0 %2190
        %2192 = vrot.lane.b32.xlu0 %v2069, 126
        %v2193 = vpop.permute.xlu0 %2192
        %2194 = vrot.lane.b32.xlu0 %v2070, 126
        %v2195 = vpop.permute.xlu0 %2194
        %2196 = vrot.lane.b32.xlu0 %v2071, 126
        %v2197 = vpop.permute.xlu0 %2196
        %2198 = vrot.lane.b32.xlu0 %v2072, 126
        %v2199 = vpop.permute.xlu0 %2198
        %2200 = vrot.lane.b32.xlu0 %v2073, 126
        %v2201 = vpop.permute.xlu0 %2200
        %2202 = vrot.lane.b32.xlu0 %v2074, 126
        %v2203 = vpop.permute.xlu0 %2202
        %2204 = vrot.lane.b32.xlu0 %v2075, 126
        %v2205 = vpop.permute.xlu0 %2204
        %2206 = vrot.lane.b32.xlu0 %v2076, 126
        %v2207 = vpop.permute.xlu0 %2206
        %2208 = vrot.lane.b32.xlu0 %v2077, 126
        %v2209 = vpop.permute.xlu0 %2208
        %v2210 = vsel %vm642, %v2187, %v2189
        %v2211 = vsel %vm642, %v2189, %v2191
        %v2212 = vsel %vm642, %v2193, %v2195
        %v2213 = vsel %vm642, %v2195, %v2197
        %v2214 = vsel %vm642, %v2199, %v2201
        %v2215 = vsel %vm642, %v2201, %v2203
        %v2216 = vsel %vm642, %v2205, %v2207
        %v2217 = vsel %vm642, %v2207, %v2209
        %2238 = vrot.lane.b32.xlu0 %v2078, 112
        %v2239 = vpop.permute.xlu0 %2238
        %2240 = vrot.lane.b32.xlu0 %v2079, 112
        %v2241 = vpop.permute.xlu0 %2240
        %2242 = vrot.lane.b32.xlu0 %v2080, 112
        %v2243 = vpop.permute.xlu0 %2242
        %2244 = vrot.lane.b32.xlu0 %v2081, 112
        %v2245 = vpop.permute.xlu0 %2244
        %2246 = vrot.lane.b32.xlu0 %v2082, 112
        %v2247 = vpop.permute.xlu0 %2246
        %2248 = vrot.lane.b32.xlu0 %v2083, 112
        %v2249 = vpop.permute.xlu0 %2248
        %2250 = vrot.lane.b32.xlu0 %v2084, 112
        %v2251 = vpop.permute.xlu0 %2250
        %2252 = vrot.lane.b32.xlu0 %v2085, 112
        %v2253 = vpop.permute.xlu0 %2252
        %2254 = vrot.lane.b32.xlu0 %v2086, 112
        %v2255 = vpop.permute.xlu0 %2254
        %2256 = vrot.lane.b32.xlu0 %v2087, 112
        %v2257 = vpop.permute.xlu0 %2256
        %2258 = vrot.lane.b32.xlu0 %v2088, 112
        %v2259 = vpop.permute.xlu0 %2258
        %2260 = vrot.lane.b32.xlu0 %v2089, 112
        %v2261 = vpop.permute.xlu0 %2260
        %v2262 = vsel %vm657, %v2239, %v2241
        %v2263 = vsel %vm657, %v2241, %v2243
        %v2264 = vsel %vm657, %v2245, %v2247
        %v2265 = vsel %vm657, %v2247, %v2249
        %v2266 = vsel %vm657, %v2251, %v2253
        %v2267 = vsel %vm657, %v2253, %v2255
        %v2268 = vsel %vm657, %v2257, %v2259
        %v2269 = vsel %vm657, %v2259, %v2261
        %2278 = vrot.lane.b32.xlu0 %v2035, 111
        %v2279 = vpop.permute.xlu0 %2278
        %2280 = vrot.lane.b32.xlu0 %v2026, 111
        %v2281 = vpop.permute.xlu0 %2280
        %2282 = vrot.lane.b32.xlu0 %v2047, 111
        %v2283 = vpop.permute.xlu0 %2282
        %2284 = vrot.lane.b32.xlu0 %v2038, 111
        %v2285 = vpop.permute.xlu0 %2284
        %2286 = vrot.lane.b32.xlu0 %v2027, 111
        %v2287 = vpop.permute.xlu0 %2286
        %2288 = vrot.lane.b32.xlu0 %v2050, 111
        %v2289 = vpop.permute.xlu0 %2288
        %2290 = vrot.lane.b32.xlu0 %v2041, 111
        %v2291 = vpop.permute.xlu0 %2290
        %2292 = vrot.lane.b32.xlu0 %v2028, 111
        %v2293 = vpop.permute.xlu0 %2292
        %2294 = vrot.lane.b32.xlu0 %v2053, 111
        %v2295 = vpop.permute.xlu0 %2294
        %2296 = vrot.lane.b32.xlu0 %v2044, 111
        %v2297 = vpop.permute.xlu0 %2296
        %2298 = vrot.lane.b32.xlu0 %v2029, 111
        %v2299 = vpop.permute.xlu0 %2298
        %2300 = vrot.lane.b32.xlu0 %v2056, 111
        %v2301 = vpop.permute.xlu0 %2300
        %v2302 = vsel %vm666, %v2279, %v2281
        %v2303 = vsel %vm666, %v2281, %v2283
        %v2304 = vsel %vm666, %v2285, %v2287
        %v2305 = vsel %vm666, %v2287, %v2289
        %v2306 = vsel %vm666, %v2291, %v2293
        %v2307 = vsel %vm666, %v2293, %v2295
        %v2308 = vsel %vm666, %v2297, %v2299
        %v2309 = vsel %vm666, %v2299, %v2301
        %2330 = vrot.lane.b32.xlu0 %v2090, 110
        %v2331 = vpop.permute.xlu0 %2330
        %2332 = vrot.lane.b32.xlu0 %v2091, 110
        %v2333 = vpop.permute.xlu0 %2332
        %2334 = vrot.lane.b32.xlu0 %v2092, 110
        %v2335 = vpop.permute.xlu0 %2334
        %2336 = vrot.lane.b32.xlu0 %v2093, 110
        %v2337 = vpop.permute.xlu0 %2336
        %2338 = vrot.lane.b32.xlu0 %v2094, 110
        %v2339 = vpop.permute.xlu0 %2338
        %2340 = vrot.lane.b32.xlu0 %v2095, 110
        %v2341 = vpop.permute.xlu0 %2340
        %2342 = vrot.lane.b32.xlu0 %v2096, 110
        %v2343 = vpop.permute.xlu0 %2342
        %2344 = vrot.lane.b32.xlu0 %v2097, 110
        %v2345 = vpop.permute.xlu0 %2344
        %2346 = vrot.lane.b32.xlu0 %v2098, 110
        %v2347 = vpop.permute.xlu0 %2346
        %2348 = vrot.lane.b32.xlu0 %v2099, 110
        %v2349 = vpop.permute.xlu0 %2348
        %2350 = vrot.lane.b32.xlu0 %v2100, 110
        %v2351 = vpop.permute.xlu0 %2350
        %2352 = vrot.lane.b32.xlu0 %v2101, 110
        %v2353 = vpop.permute.xlu0 %2352
        %v2354 = vsel %vm681, %v2331, %v2333
        %v2355 = vsel %vm681, %v2333, %v2335
        %v2356 = vsel %vm681, %v2337, %v2339
        %v2357 = vsel %vm681, %v2339, %v2341
        %v2358 = vsel %vm681, %v2343, %v2345
        %v2359 = vsel %vm681, %v2345, %v2347
        %v2360 = vsel %vm681, %v2349, %v2351
        %v2361 = vsel %vm681, %v2351, %v2353
        %2382 = vrot.lane.b32.xlu0 %v2102, 96
        %v2383 = vpop.permute.xlu0 %2382
        %2384 = vrot.lane.b32.xlu0 %v2103, 96
        %v2385 = vpop.permute.xlu0 %2384
        %2386 = vrot.lane.b32.xlu0 %v2104, 96
        %v2387 = vpop.permute.xlu0 %2386
        %2388 = vrot.lane.b32.xlu0 %v2105, 96
        %v2389 = vpop.permute.xlu0 %2388
        %2390 = vrot.lane.b32.xlu0 %v2106, 96
        %v2391 = vpop.permute.xlu0 %2390
        %2392 = vrot.lane.b32.xlu0 %v2107, 96
        %v2393 = vpop.permute.xlu0 %2392
        %2394 = vrot.lane.b32.xlu0 %v2108, 96
        %v2395 = vpop.permute.xlu0 %2394
        %2396 = vrot.lane.b32.xlu0 %v2109, 96
        %v2397 = vpop.permute.xlu0 %2396
        %2398 = vrot.lane.b32.xlu0 %v2110, 96
        %v2399 = vpop.permute.xlu0 %2398
        %2400 = vrot.lane.b32.xlu0 %v2111, 96
        %v2401 = vpop.permute.xlu0 %2400
        %2402 = vrot.lane.b32.xlu0 %v2112, 96
        %v2403 = vpop.permute.xlu0 %2402
        %2404 = vrot.lane.b32.xlu0 %v2113, 96
        %v2405 = vpop.permute.xlu0 %2404
        %v2406 = vsel %vm693, %v2383, %v2385
        %v2407 = vsel %vm693, %v2385, %v2387
        %v2408 = vsel %vm693, %v2389, %v2391
        %v2409 = vsel %vm693, %v2391, %v2393
        %v2410 = vsel %vm693, %v2395, %v2397
        %v2411 = vsel %vm693, %v2397, %v2399
        %v2412 = vsel %vm693, %v2401, %v2403
        %v2413 = vsel %vm693, %v2403, %v2405
        %2422 = vrot.lane.b32.xlu0 %v2035, 95
        %v2423 = vpop.permute.xlu0 %2422
        %2424 = vrot.lane.b32.xlu0 %v2026, 95
        %v2425 = vpop.permute.xlu0 %2424
        %2426 = vrot.lane.b32.xlu0 %v2047, 95
        %v2427 = vpop.permute.xlu0 %2426
        %2428 = vrot.lane.b32.xlu0 %v2038, 95
        %v2429 = vpop.permute.xlu0 %2428
        %2430 = vrot.lane.b32.xlu0 %v2027, 95
        %v2431 = vpop.permute.xlu0 %2430
        %2432 = vrot.lane.b32.xlu0 %v2050, 95
        %v2433 = vpop.permute.xlu0 %2432
        %2434 = vrot.lane.b32.xlu0 %v2041, 95
        %v2435 = vpop.permute.xlu0 %2434
        %2436 = vrot.lane.b32.xlu0 %v2028, 95
        %v2437 = vpop.permute.xlu0 %2436
        %2438 = vrot.lane.b32.xlu0 %v2053, 95
        %v2439 = vpop.permute.xlu0 %2438
        %2440 = vrot.lane.b32.xlu0 %v2044, 95
        %v2441 = vpop.permute.xlu0 %2440
        %2442 = vrot.lane.b32.xlu0 %v2029, 95
        %v2443 = vpop.permute.xlu0 %2442
        %2444 = vrot.lane.b32.xlu0 %v2056, 95
        %v2445 = vpop.permute.xlu0 %2444
        %v2446 = vsel %vm702, %v2423, %v2425
        %v2447 = vsel %vm702, %v2425, %v2427
        %v2448 = vsel %vm702, %v2429, %v2431
        %v2449 = vsel %vm702, %v2431, %v2433
        %v2450 = vsel %vm702, %v2435, %v2437
        %v2451 = vsel %vm702, %v2437, %v2439
        %v2452 = vsel %vm702, %v2441, %v2443
        %v2453 = vsel %vm702, %v2443, %v2445
        %2474 = vrot.lane.b32.xlu0 %v2114, 94
        %v2475 = vpop.permute.xlu0 %2474
        %2476 = vrot.lane.b32.xlu0 %v2115, 94
        %v2477 = vpop.permute.xlu0 %2476
        %2478 = vrot.lane.b32.xlu0 %v2116, 94
        %v2479 = vpop.permute.xlu0 %2478
        %2480 = vrot.lane.b32.xlu0 %v2117, 94
        %v2481 = vpop.permute.xlu0 %2480
        %2482 = vrot.lane.b32.xlu0 %v2118, 94
        %v2483 = vpop.permute.xlu0 %2482
        %2484 = vrot.lane.b32.xlu0 %v2119, 94
        %v2485 = vpop.permute.xlu0 %2484
        %2486 = vrot.lane.b32.xlu0 %v2120, 94
        %v2487 = vpop.permute.xlu0 %2486
        %2488 = vrot.lane.b32.xlu0 %v2121, 94
        %v2489 = vpop.permute.xlu0 %2488
        %2490 = vrot.lane.b32.xlu0 %v2122, 94
        %v2491 = vpop.permute.xlu0 %2490
        %2492 = vrot.lane.b32.xlu0 %v2123, 94
        %v2493 = vpop.permute.xlu0 %2492
        %2494 = vrot.lane.b32.xlu0 %v2124, 94
        %v2495 = vpop.permute.xlu0 %2494
        %2496 = vrot.lane.b32.xlu0 %v2125, 94
        %v2497 = vpop.permute.xlu0 %2496
        %v2498 = vsel %vm714, %v2475, %v2477
        %v2499 = vsel %vm714, %v2477, %v2479
        %v2500 = vsel %vm714, %v2481, %v2483
        %v2501 = vsel %vm714, %v2483, %v2485
        %v2502 = vsel %vm714, %v2487, %v2489
        %v2503 = vsel %vm714, %v2489, %v2491
        %v2504 = vsel %vm714, %v2493, %v2495
        %v2505 = vsel %vm714, %v2495, %v2497
        %2515 = vset.pattern.permute.xlu0 0
        %2516 = vperm.xlu0 %2515, %v1970
        %v2517 = vpop.permute.xlu0 %2516
        %2520 = vset.pattern.permute.xlu0 0
        %2521 = vperm.xlu0 %2520, %v1971
        %v2522 = vpop.permute.xlu0 %2521
        %2525 = vset.pattern.permute.xlu0 0
        %2526 = vperm.xlu0 %2525, %v1972
        %v2527 = vpop.permute.xlu0 %2526
        %2530 = vset.pattern.permute.xlu0 0
        %2531 = vperm.xlu0 %2530, %v1973
        %v2532 = vpop.permute.xlu0 %2531
        %2535 = vset.pattern.permute.xlu0 0
        %2536 = vperm.xlu0 %2535, %v1974
        %v2537 = vpop.permute.xlu0 %2536
        %2540 = vset.pattern.permute.xlu0 0
        %2541 = vperm.xlu0 %2540, %v1975
        %v2542 = vpop.permute.xlu0 %2541
        %2545 = vset.pattern.permute.xlu0 0
        %2546 = vperm.xlu0 %2545, %v1976
        %v2547 = vpop.permute.xlu0 %2546
        %2550 = vset.pattern.permute.xlu0 0
        %2551 = vperm.xlu0 %2550, %v1977
        %v2552 = vpop.permute.xlu0 %2551
        %v2578 = vunpack.c.l.b16 %v1946
        %v2579 = vunpack.c.h.b16 %v1946
        %v2580 = vunpack.c.l.b16 %v1947
        %v2581 = vunpack.c.h.b16 %v1947
        %v2582 = vunpack.c.l.b16 %v1948
        %v2583 = vunpack.c.l.b16 %v1949
        %v2584 = vunpack.c.h.b16 %v1949
        %v2585 = vunpack.c.l.b16 %v1950
        %v2586 = vunpack.c.h.b16 %v1950
        %v2587 = vunpack.c.l.b16 %v1951
        %v2588 = vunpack.c.l.b16 %v1952
        %v2589 = vunpack.c.h.b16 %v1952
        %v2590 = vunpack.c.l.b16 %v1953
        %v2591 = vunpack.c.h.b16 %v1953
        %v2592 = vunpack.c.l.b16 %v1954
        %v2593 = vunpack.c.l.b16 %v1955
        %v2594 = vunpack.c.h.b16 %v1955
        %v2595 = vunpack.c.l.b16 %v1956
        %v2596 = vunpack.c.h.b16 %v1956
        %v2597 = vunpack.c.l.b16 %v1957
        %v2598 = vunpack.c.l.b16 %v1958
        %v2599 = vunpack.c.h.b16 %v1958
        %v2600 = vunpack.c.l.b16 %v1959
        %v2601 = vunpack.c.h.b16 %v1959
        %v2602 = vunpack.c.l.b16 %v1960
        %v2603 = vunpack.c.l.b16 %v1961
        %v2604 = vunpack.c.h.b16 %v1961
        %v2605 = vunpack.c.l.b16 %v1962
        %v2606 = vunpack.c.h.b16 %v1962
        %v2607 = vunpack.c.l.b16 %v1963
        %v2608 = vunpack.c.l.b16 %v1964
        %v2609 = vunpack.c.h.b16 %v1964
        %v2610 = vunpack.c.l.b16 %v1965
        %v2611 = vunpack.c.h.b16 %v1965
        %v2612 = vunpack.c.l.b16 %v1966
        %v2613 = vunpack.c.l.b16 %v1967
        %v2614 = vunpack.c.h.b16 %v1967
        %v2615 = vunpack.c.l.b16 %v1968
        %v2616 = vunpack.c.h.b16 %v1968
        %v2617 = vunpack.c.l.b16 %v1969
        %v2618 = vpack.c.b16 %v2583, %v2578
        %v2619 = vpack.c.b16 %v2584, %v2579
        %v2620 = vpack.c.b16 %v2585, %v2580
        %v2621 = vpack.c.b16 %v2586, %v2581
        %v2622 = vpack.c.b16 %v2587, %v2582
        %v2623 = vpack.c.b16 %v2593, %v2588
        %v2624 = vpack.c.b16 %v2594, %v2589
        %v2625 = vpack.c.b16 %v2595, %v2590
        %v2626 = vpack.c.b16 %v2596, %v2591
        %v2627 = vpack.c.b16 %v2597, %v2592
        %v2628 = vpack.c.b16 %v2603, %v2598
        %v2629 = vpack.c.b16 %v2604, %v2599
        %v2630 = vpack.c.b16 %v2605, %v2600
        %v2631 = vpack.c.b16 %v2606, %v2601
        %v2632 = vpack.c.b16 %v2607, %v2602
        %v2633 = vpack.c.b16 %v2613, %v2608
        %v2634 = vpack.c.b16 %v2614, %v2609
        %v2635 = vpack.c.b16 %v2615, %v2610
        %v2636 = vpack.c.b16 %v2616, %v2611
        %v2637 = vpack.c.b16 %v2617, %v2612
        %v2655 = vsel %vm1619, %v2622, 0
        %v2658 = vsel %vm1619, %v2627, 0
        %v2661 = vsel %vm1619, %v2632, 0
        %v2664 = vsel %vm1619, %v2637, 0
        %2666 = vmatpush.bf16.msra.mxu0 %v2164
        %2667 = vmatpush.bf16.msra.mxu0 %v2162
        %2668 = vmatpush.bf16.msra.mxu0 %v2160
        %2669 = vmatpush.bf16.msra.mxu0 %v2158
        %2670 = vmatpush.bf16.msra.mxu0 %v2064
        %2671 = vmatpush.bf16.msra.mxu0 %v2062
        %2672 = vmatpush.bf16.msra.mxu0 %v2060
        %2673 = vmatpush.bf16.msra.mxu0 %v2058
        %2674 = vmatmul.bf16.gmra.mxu0 %v2618
        %v2675 = vpop.f32.mrf.mxu0
        %v2676 = vadd.f32 %v2517, %v2675
        %v2677 = vpop.f32.mrf.mxu0
        %v2678 = vadd.f32 %v2522, %v2677
        %2679 = vmatmul.bf16.gmra.mxu0 %v2623
        %v2680 = vpop.f32.mrf.mxu0
        %v2681 = vadd.f32 %v2527, %v2680
        %v2682 = vpop.f32.mrf.mxu0
        %v2683 = vadd.f32 %v2532, %v2682
        %2684 = vmatmul.bf16.gmra.mxu0 %v2628
        %v2685 = vpop.f32.mrf.mxu0
        %v2686 = vadd.f32 %v2537, %v2685
        %v2687 = vpop.f32.mrf.mxu0
        %v2688 = vadd.f32 %v2542, %v2687
        %2689 = vmatmul.bf16.gmra.mxu0 %v2633
        %v2690 = vpop.f32.mrf.mxu0
        %v2691 = vadd.f32 %v2547, %v2690
        %v2692 = vpop.f32.mrf.mxu0
        %v2693 = vadd.f32 %v2552, %v2692
        %2694 = vdwg.mxu0
        %2695 = vmatpush.bf16.msra.mxu0 %v2268
        %2696 = vmatpush.bf16.msra.mxu0 %v2266
        %2697 = vmatpush.bf16.msra.mxu0 %v2264
        %2698 = vmatpush.bf16.msra.mxu0 %v2262
        %2699 = vmatpush.bf16.msra.mxu0 %v2216
        %2700 = vmatpush.bf16.msra.mxu0 %v2214
        %2701 = vmatpush.bf16.msra.mxu0 %v2212
        %2702 = vmatpush.bf16.msra.mxu0 %v2210
        %2703 = vmatmul.bf16.gmra.mxu0 %v2619
        %v2704 = vpop.f32.mrf.mxu0
        %v2705 = vadd.f32 %v2676, %v2704
        %v2706 = vpop.f32.mrf.mxu0
        %v2707 = vadd.f32 %v2678, %v2706
        %2708 = vmatmul.bf16.gmra.mxu0 %v2624
        %v2709 = vpop.f32.mrf.mxu0
        %v2710 = vadd.f32 %v2681, %v2709
        %v2711 = vpop.f32.mrf.mxu0
        %v2712 = vadd.f32 %v2683, %v2711
        %2713 = vmatmul.bf16.gmra.mxu0 %v2629
        %v2714 = vpop.f32.mrf.mxu0
        %v2715 = vadd.f32 %v2686, %v2714
        %v2716 = vpop.f32.mrf.mxu0
        %v2717 = vadd.f32 %v2688, %v2716
        %2718 = vmatmul.bf16.gmra.mxu0 %v2634
        %v2719 = vpop.f32.mrf.mxu0
        %v2720 = vadd.f32 %v2691, %v2719
        %v2721 = vpop.f32.mrf.mxu0
        %v2722 = vadd.f32 %v2693, %v2721
        %2723 = vdwg.mxu0
        %2724 = vmatpush.bf16.msra.mxu0 %v2360
        %2725 = vmatpush.bf16.msra.mxu0 %v2358
        %2726 = vmatpush.bf16.msra.mxu0 %v2356
        %2727 = vmatpush.bf16.msra.mxu0 %v2354
        %2728 = vmatpush.bf16.msra.mxu0 %v2308
        %2729 = vmatpush.bf16.msra.mxu0 %v2306
        %2730 = vmatpush.bf16.msra.mxu0 %v2304
        %2731 = vmatpush.bf16.msra.mxu0 %v2302
        %2732 = vmatmul.bf16.gmra.mxu0 %v2620
        %v2733 = vpop.f32.mrf.mxu0
        %v2734 = vadd.f32 %v2705, %v2733
        %v2735 = vpop.f32.mrf.mxu0
        %v2736 = vadd.f32 %v2707, %v2735
        %2737 = vmatmul.bf16.gmra.mxu0 %v2625
        %v2738 = vpop.f32.mrf.mxu0
        %v2739 = vadd.f32 %v2710, %v2738
        %v2740 = vpop.f32.mrf.mxu0
        %v2741 = vadd.f32 %v2712, %v2740
        %2742 = vmatmul.bf16.gmra.mxu0 %v2630
        %v2743 = vpop.f32.mrf.mxu0
        %v2744 = vadd.f32 %v2715, %v2743
        %v2745 = vpop.f32.mrf.mxu0
        %v2746 = vadd.f32 %v2717, %v2745
        %2747 = vmatmul.bf16.gmra.mxu0 %v2635
        %v2748 = vpop.f32.mrf.mxu0
        %v2749 = vadd.f32 %v2720, %v2748
        %v2750 = vpop.f32.mrf.mxu0
        %v2751 = vadd.f32 %v2722, %v2750
        %2752 = vdwg.mxu0
        %2753 = vmatpush.bf16.msra.mxu0 %v2452
        %2754 = vmatpush.bf16.msra.mxu0 %v2450
        %2755 = vmatpush.bf16.msra.mxu0 %v2448
        %2756 = vmatpush.bf16.msra.mxu0 %v2446
        %2757 = vmatpush.bf16.msra.mxu0 %v2412
        %2758 = vmatpush.bf16.msra.mxu0 %v2410
        %2759 = vmatpush.bf16.msra.mxu0 %v2408
        %2760 = vmatpush.bf16.msra.mxu0 %v2406
        %2761 = vmatmul.bf16.gmra.mxu0 %v2621
        %v2762 = vpop.f32.mrf.mxu0
        %v2763 = vadd.f32 %v2734, %v2762
        %v2764 = vpop.f32.mrf.mxu0
        %v2765 = vadd.f32 %v2736, %v2764
        %2766 = vmatmul.bf16.gmra.mxu0 %v2626
        %v2767 = vpop.f32.mrf.mxu0
        %v2768 = vadd.f32 %v2739, %v2767
        %v2769 = vpop.f32.mrf.mxu0
        %v2770 = vadd.f32 %v2741, %v2769
        %2771 = vmatmul.bf16.gmra.mxu0 %v2631
        %v2772 = vpop.f32.mrf.mxu0
        %v2773 = vadd.f32 %v2744, %v2772
        %v2774 = vpop.f32.mrf.mxu0
        %v2775 = vadd.f32 %v2746, %v2774
        %2776 = vmatmul.bf16.gmra.mxu0 %v2636
        %v2777 = vpop.f32.mrf.mxu0
        %v2778 = vadd.f32 %v2749, %v2777
        %v2779 = vpop.f32.mrf.mxu0
        %v2780 = vadd.f32 %v2751, %v2779
        %2781 = vdwg.mxu0
        %2782 = vmatpush.bf16.msra.mxu0 0
        %2783 = vmatpush.bf16.msra.mxu0 0
        %2784 = vmatpush.bf16.msra.mxu0 0
        %2785 = vmatpush.bf16.msra.mxu0 0
        %2786 = vmatpush.bf16.msra.mxu0 %v2504
        %2787 = vmatpush.bf16.msra.mxu0 %v2502
        %2788 = vmatpush.bf16.msra.mxu0 %v2500
        %2789 = vmatpush.bf16.msra.mxu0 %v2498
        %2790 = vmatmul.bf16.gmra.mxu0 %v2655
        %v2791 = vpop.f32.mrf.mxu0
        %v2792 = vadd.f32 %v2763, %v2791
        %v2793 = vpop.f32.mrf.mxu0
        %v2794 = vadd.f32 %v2765, %v2793
        %2795 = vmatmul.bf16.gmra.mxu0 %v2658
        %v2796 = vpop.f32.mrf.mxu0
        %v2797 = vadd.f32 %v2768, %v2796
        %v2798 = vpop.f32.mrf.mxu0
        %v2799 = vadd.f32 %v2770, %v2798
        %2800 = vmatmul.bf16.gmra.mxu0 %v2661
        %v2801 = vpop.f32.mrf.mxu0
        %v2802 = vadd.f32 %v2773, %v2801
        %v2803 = vpop.f32.mrf.mxu0
        %v2804 = vadd.f32 %v2775, %v2803
        %2805 = vmatmul.bf16.gmra.mxu0 %v2664
        %v2806 = vpop.f32.mrf.mxu0
        %v2807 = vadd.f32 %v2778, %v2806
        %v2808 = vpop.f32.mrf.mxu0
        %v2809 = vadd.f32 %v2780, %v2808
        %2810 = vdwg.mxu0
        %2811 = vmatpush.bf16.msra.mxu0 %v2165
        %2812 = vmatpush.bf16.msra.mxu0 %v2163
        %2813 = vmatpush.bf16.msra.mxu0 %v2161
        %2814 = vmatpush.bf16.msra.mxu0 %v2159
        %2815 = vmatpush.bf16.msra.mxu0 %v2065
        %2816 = vmatpush.bf16.msra.mxu0 %v2063
        %2817 = vmatpush.bf16.msra.mxu0 %v2061
        %2818 = vmatpush.bf16.msra.mxu0 %v2059
        %2819 = vmatmul.bf16.gmra.mxu0 %v2618
        %v2820 = vpop.f32.mrf.mxu0
        %v2821 = vadd.f32 %v2517, %v2820
        %v2822 = vpop.f32.mrf.mxu0
        %v2823 = vadd.f32 %v2522, %v2822
        %2824 = vmatmul.bf16.gmra.mxu0 %v2623
        %v2825 = vpop.f32.mrf.mxu0
        %v2826 = vadd.f32 %v2527, %v2825
        %v2827 = vpop.f32.mrf.mxu0
        %v2828 = vadd.f32 %v2532, %v2827
        %2829 = vmatmul.bf16.gmra.mxu0 %v2628
        %v2830 = vpop.f32.mrf.mxu0
        %v2831 = vadd.f32 %v2537, %v2830
        %v2832 = vpop.f32.mrf.mxu0
        %v2833 = vadd.f32 %v2542, %v2832
        %2834 = vmatmul.bf16.gmra.mxu0 %v2633
        %v2835 = vpop.f32.mrf.mxu0
        %v2836 = vadd.f32 %v2547, %v2835
        %v2837 = vpop.f32.mrf.mxu0
        %v2838 = vadd.f32 %v2552, %v2837
        %2839 = vdwg.mxu0
        %2840 = vmatpush.bf16.msra.mxu0 %v2269
        %2841 = vmatpush.bf16.msra.mxu0 %v2267
        %2842 = vmatpush.bf16.msra.mxu0 %v2265
        %2843 = vmatpush.bf16.msra.mxu0 %v2263
        %2844 = vmatpush.bf16.msra.mxu0 %v2217
        %2845 = vmatpush.bf16.msra.mxu0 %v2215
        %2846 = vmatpush.bf16.msra.mxu0 %v2213
        %2847 = vmatpush.bf16.msra.mxu0 %v2211
        %2848 = vmatmul.bf16.gmra.mxu0 %v2619
        %v2849 = vpop.f32.mrf.mxu0
        %v2850 = vadd.f32 %v2821, %v2849
        %v2851 = vpop.f32.mrf.mxu0
        %v2852 = vadd.f32 %v2823, %v2851
        %2853 = vmatmul.bf16.gmra.mxu0 %v2624
        %v2854 = vpop.f32.mrf.mxu0
        %v2855 = vadd.f32 %v2826, %v2854
        %v2856 = vpop.f32.mrf.mxu0
        %v2857 = vadd.f32 %v2828, %v2856
        %2858 = vmatmul.bf16.gmra.mxu0 %v2629
        %v2859 = vpop.f32.mrf.mxu0
        %v2860 = vadd.f32 %v2831, %v2859
        %v2861 = vpop.f32.mrf.mxu0
        %v2862 = vadd.f32 %v2833, %v2861
        %2863 = vmatmul.bf16.gmra.mxu0 %v2634
        %v2864 = vpop.f32.mrf.mxu0
        %v2865 = vadd.f32 %v2836, %v2864
        %v2866 = vpop.f32.mrf.mxu0
        %v2867 = vadd.f32 %v2838, %v2866
        %2868 = vdwg.mxu0
        %2869 = vmatpush.bf16.msra.mxu0 %v2361
        %2870 = vmatpush.bf16.msra.mxu0 %v2359
        %2871 = vmatpush.bf16.msra.mxu0 %v2357
        %2872 = vmatpush.bf16.msra.mxu0 %v2355
        %2873 = vmatpush.bf16.msra.mxu0 %v2309
        %2874 = vmatpush.bf16.msra.mxu0 %v2307
        %2875 = vmatpush.bf16.msra.mxu0 %v2305
        %2876 = vmatpush.bf16.msra.mxu0 %v2303
        %2877 = vmatmul.bf16.gmra.mxu0 %v2620
        %v2878 = vpop.f32.mrf.mxu0
        %v2879 = vadd.f32 %v2850, %v2878
        %v2880 = vpop.f32.mrf.mxu0
        %v2881 = vadd.f32 %v2852, %v2880
        %2882 = vmatmul.bf16.gmra.mxu0 %v2625
        %v2883 = vpop.f32.mrf.mxu0
        %v2884 = vadd.f32 %v2855, %v2883
        %v2885 = vpop.f32.mrf.mxu0
        %v2886 = vadd.f32 %v2857, %v2885
        %2887 = vmatmul.bf16.gmra.mxu0 %v2630
        %v2888 = vpop.f32.mrf.mxu0
        %v2889 = vadd.f32 %v2860, %v2888
        %v2890 = vpop.f32.mrf.mxu0
        %v2891 = vadd.f32 %v2862, %v2890
        %2892 = vmatmul.bf16.gmra.mxu0 %v2635
        %v2893 = vpop.f32.mrf.mxu0
        %v2894 = vadd.f32 %v2865, %v2893
        %v2895 = vpop.f32.mrf.mxu0
        %v2896 = vadd.f32 %v2867, %v2895
        %2897 = vdwg.mxu0
        %2898 = vmatpush.bf16.msra.mxu0 %v2453
        %2899 = vmatpush.bf16.msra.mxu0 %v2451
        %2900 = vmatpush.bf16.msra.mxu0 %v2449
        %2901 = vmatpush.bf16.msra.mxu0 %v2447
        %2902 = vmatpush.bf16.msra.mxu0 %v2413
        %2903 = vmatpush.bf16.msra.mxu0 %v2411
        %2904 = vmatpush.bf16.msra.mxu0 %v2409
        %2905 = vmatpush.bf16.msra.mxu0 %v2407
        %2906 = vmatmul.bf16.gmra.mxu0 %v2621
        %v2907 = vpop.f32.mrf.mxu0
        %v2908 = vadd.f32 %v2879, %v2907
        %v2909 = vpop.f32.mrf.mxu0
        %v2910 = vadd.f32 %v2881, %v2909
        %2911 = vmatmul.bf16.gmra.mxu0 %v2626
        %v2912 = vpop.f32.mrf.mxu0
        %v2913 = vadd.f32 %v2884, %v2912
        %v2914 = vpop.f32.mrf.mxu0
        %v2915 = vadd.f32 %v2886, %v2914
        %2916 = vmatmul.bf16.gmra.mxu0 %v2631
        %v2917 = vpop.f32.mrf.mxu0
        %v2918 = vadd.f32 %v2889, %v2917
        %v2919 = vpop.f32.mrf.mxu0
        %v2920 = vadd.f32 %v2891, %v2919
        %2921 = vmatmul.bf16.gmra.mxu0 %v2636
        %v2922 = vpop.f32.mrf.mxu0
        %v2923 = vadd.f32 %v2894, %v2922
        %v2924 = vpop.f32.mrf.mxu0
        %v2925 = vadd.f32 %v2896, %v2924
        %2926 = vdwg.mxu0
        %2927 = vmatpush.bf16.msra.mxu0 0
        %2928 = vmatpush.bf16.msra.mxu0 0
        %2929 = vmatpush.bf16.msra.mxu0 0
        %2930 = vmatpush.bf16.msra.mxu0 0
        %2931 = vmatpush.bf16.msra.mxu0 %v2505
        %2932 = vmatpush.bf16.msra.mxu0 %v2503
        %2933 = vmatpush.bf16.msra.mxu0 %v2501
        %2934 = vmatpush.bf16.msra.mxu0 %v2499
        %2935 = vmatmul.bf16.gmra.mxu0 %v2655
        %v2936 = vpop.f32.mrf.mxu0
        %v2937 = vadd.f32 %v2908, %v2936
        %v2938 = vpop.f32.mrf.mxu0
        %v2939 = vadd.f32 %v2910, %v2938
        %2940 = vmatmul.bf16.gmra.mxu0 %v2658
        %v2941 = vpop.f32.mrf.mxu0
        %v2942 = vadd.f32 %v2913, %v2941
        %v2943 = vpop.f32.mrf.mxu0
        %v2944 = vadd.f32 %v2915, %v2943
        %2945 = vmatmul.bf16.gmra.mxu0 %v2661
        %v2946 = vpop.f32.mrf.mxu0
        %v2947 = vadd.f32 %v2918, %v2946
        %v2948 = vpop.f32.mrf.mxu0
        %v2949 = vadd.f32 %v2920, %v2948
        %2950 = vmatmul.bf16.gmra.mxu0 %v2664
        %v2951 = vpop.f32.mrf.mxu0
        %v2952 = vadd.f32 %v2923, %v2951
        %v2953 = vpop.f32.mrf.mxu0
        %v2954 = vadd.f32 %v2925, %v2953
        %2955 = vdwg.mxu0
        %v2956 = vmax.f32 %v2792, 0.0
        %v2957 = vmax.f32 %v2937, 0.0
        %v2958 = vmax.f32 %v2794, 0.0
        %v2959 = vmax.f32 %v2939, 0.0
        %v2960 = vmax.f32 %v2797, 0.0
        %v2961 = vmax.f32 %v2942, 0.0
        %v2962 = vmax.f32 %v2799, 0.0
        %v2963 = vmax.f32 %v2944, 0.0
        %v2964 = vmax.f32 %v2802, 0.0
        %v2965 = vmax.f32 %v2947, 0.0
        %v2966 = vmax.f32 %v2804, 0.0
        %v2967 = vmax.f32 %v2949, 0.0
        %v2968 = vmax.f32 %v2807, 0.0
        %v2969 = vmax.f32 %v2952, 0.0
        %v2970 = vmax.f32 %v2809, 0.0
        %v2971 = vmax.f32 %v2954, 0.0
        %v2972 = vpack.c.bf16 %v2957, %v2956
        %v2973 = vpack.c.bf16 %v2959, %v2958
        %v2974 = vpack.c.bf16 %v2961, %v2960
        %v2975 = vpack.c.bf16 %v2963, %v2962
        %v2976 = vpack.c.bf16 %v2965, %v2964
        %v2977 = vpack.c.bf16 %v2967, %v2966
        %v2978 = vpack.c.bf16 %v2969, %v2968
        %v2979 = vpack.c.bf16 %v2971, %v2970
        %v2980 = vld [vmem:[%s7] sm:$0xff]
        %v2981 = vld [vmem:[%s7 + $0x8] sm:$0xff]
        %v2982 = vld [vmem:[%s7 + $0x10] sm:$0xf]
        %v2983 = vld [vmem:[%s8] sm:$0xff]
        %v2992 = vunpack.c.l.b16 %v2972
        %v2993 = vunpack.c.h.b16 %v2972
        %v2994 = vunpack.c.l.b16 %v2973
        %v2995 = vunpack.c.h.b16 %v2973
        %v2996 = vunpack.c.l.b16 %v2974
        %v2997 = vunpack.c.h.b16 %v2974
        %v2998 = vunpack.c.l.b16 %v2975
        %v2999 = vunpack.c.h.b16 %v2975
        %v3000 = vunpack.c.l.b16 %v2976
        %v3001 = vunpack.c.h.b16 %v2976
        %v3002 = vunpack.c.l.b16 %v2977
        %v3003 = vunpack.c.h.b16 %v2977
        %v3004 = vunpack.c.l.b16 %v2978
        %v3005 = vunpack.c.h.b16 %v2978
        %v3006 = vunpack.c.l.b16 %v2979
        %v3007 = vunpack.c.h.b16 %v2979
        %v3008 = vpack.c.b16 %v2994, %v2992
        %v3009 = vpack.c.b16 %v2995, %v2993
        %v3010 = vpack.c.b16 %v2998, %v2996
        %v3011 = vpack.c.b16 %v2999, %v2997
        %v3012 = vpack.c.b16 %v3002, %v3000
        %v3013 = vpack.c.b16 %v3003, %v3001
        %v3014 = vpack.c.b16 %v3006, %v3004
        %v3015 = vpack.c.b16 %v3007, %v3005
        %3016 = vrot.lane.b32.xlu0 %v3008, 17
        %v3017 = vpop.permute.xlu0 %3016
        %3018 = vrot.lane.b32.xlu0 %v3009, 17
        %v3019 = vpop.permute.xlu0 %3018
        %3020 = vrot.lane.b32.xlu0 %v3010, 17
        %v3021 = vpop.permute.xlu0 %3020
        %3022 = vrot.lane.b32.xlu0 %v3011, 17
        %v3023 = vpop.permute.xlu0 %3022
        %3024 = vrot.lane.b32.xlu0 %v3012, 17
        %v3025 = vpop.permute.xlu0 %3024
        %3026 = vrot.lane.b32.xlu0 %v3013, 17
        %v3027 = vpop.permute.xlu0 %3026
        %3028 = vrot.lane.b32.xlu0 %v3014, 17
        %v3029 = vpop.permute.xlu0 %3028
        %3030 = vrot.lane.b32.xlu0 %v3015, 17
        %v3031 = vpop.permute.xlu0 %3030
        %v3032 = vsel %vm426, %v3017, %v3019
        %v3033 = vsel %vm426, %v3021, %v3023
        %v3034 = vsel %vm426, %v3025, %v3027
        %v3035 = vsel %vm426, %v3029, %v3031
        %v3041 = vsel %vm429, 0, %v3017
        %v3044 = vsel %vm429, 0, %v3021
        %v3047 = vsel %vm429, 0, %v3025
        %v3050 = vsel %vm429, 0, %v3029
        %v3053 = vsel %vm429, %v3019, 0
        %v3056 = vsel %vm429, %v3023, 0
        %v3059 = vsel %vm429, %v3027, 0
        %v3062 = vsel %vm429, %v3031, 0
        %v3064 = vsel %vm451, 0, %v3041
        %v3065 = vsel %vm458, 0, %v3032
        %v3066 = vsel %vm451, 0, %v3044
        %v3067 = vsel %vm458, 0, %v3033
        %v3068 = vsel %vm451, 0, %v3047
        %v3069 = vsel %vm458, 0, %v3034
        %v3070 = vsel %vm451, 0, %v3050
        %v3071 = vsel %vm458, 0, %v3035
        %v3072 = vsel %vm481, 0, %v3041
        %v3073 = vsel %vm488, 0, %v3032
        %v3074 = vsel %vm495, 0, %v3053
        %v3075 = vsel %vm481, 0, %v3044
        %v3076 = vsel %vm488, 0, %v3033
        %v3077 = vsel %vm495, 0, %v3056
        %v3078 = vsel %vm481, 0, %v3047
        %v3079 = vsel %vm488, 0, %v3034
        %v3080 = vsel %vm495, 0, %v3059
        %v3081 = vsel %vm481, 0, %v3050
        %v3082 = vsel %vm488, 0, %v3035
        %v3083 = vsel %vm495, 0, %v3062
        %v3084 = vsel %vm511, 0, %v3041
        %v3085 = vsel %vm518, 0, %v3032
        %v3086 = vsel %vm525, 0, %v3053
        %v3087 = vsel %vm511, 0, %v3044
        %v3088 = vsel %vm518, 0, %v3033
        %v3089 = vsel %vm525, 0, %v3056
        %v3090 = vsel %vm511, 0, %v3047
        %v3091 = vsel %vm518, 0, %v3034
        %v3092 = vsel %vm525, 0, %v3059
        %v3093 = vsel %vm511, 0, %v3050
        %v3094 = vsel %vm518, 0, %v3035
        %v3095 = vsel %vm525, 0, %v3062
        %v3096 = vsel %vm541, 0, %v3041
        %v3097 = vsel %vm548, 0, %v3032
        %v3098 = vsel %vm555, 0, %v3053
        %v3099 = vsel %vm541, 0, %v3044
        %v3100 = vsel %vm548, 0, %v3033
        %v3101 = vsel %vm555, 0, %v3056
        %v3102 = vsel %vm541, 0, %v3047
        %v3103 = vsel %vm548, 0, %v3034
        %v3104 = vsel %vm555, 0, %v3059
        %v3105 = vsel %vm541, 0, %v3050
        %v3106 = vsel %vm548, 0, %v3035
        %v3107 = vsel %vm555, 0, %v3062
        %v3108 = vsel %vm571, 0, %v3041
        %v3109 = vsel %vm578, 0, %v3032
        %v3110 = vsel %vm585, 0, %v3053
        %v3111 = vsel %vm571, 0, %v3044
        %v3112 = vsel %vm578, 0, %v3033
        %v3113 = vsel %vm585, 0, %v3056
        %v3114 = vsel %vm571, 0, %v3047
        %v3115 = vsel %vm578, 0, %v3034
        %v3116 = vsel %vm585, 0, %v3059
        %v3117 = vsel %vm571, 0, %v3050
        %v3118 = vsel %vm578, 0, %v3035
        %v3119 = vsel %vm585, 0, %v3062
        %v3120 = vsel %vm601, 0, %v3041
        %v3121 = vsel %vm608, 0, %v3032
        %v3122 = vsel %vm615, 0, %v3053
        %v3123 = vsel %vm601, 0, %v3044
        %v3124 = vsel %vm608, 0, %v3033
        %v3125 = vsel %vm615, 0, %v3056
        %v3126 = vsel %vm601, 0, %v3047
        %v3127 = vsel %vm608, 0, %v3034
        %v3128 = vsel %vm615, 0, %v3059
        %v3129 = vsel %vm601, 0, %v3050
        %v3130 = vsel %vm608, 0, %v3035
        %v3131 = vsel %vm615, 0, %v3062
        %3140 = vrot.lane.b32.xlu0 %v3041, 127
        %v3141 = vpop.permute.xlu0 %3140
        %3142 = vrot.lane.b32.xlu0 %v3032, 127
        %v3143 = vpop.permute.xlu0 %3142
        %3144 = vrot.lane.b32.xlu0 %v3053, 127
        %v3145 = vpop.permute.xlu0 %3144
        %3146 = vrot.lane.b32.xlu0 %v3044, 127
        %v3147 = vpop.permute.xlu0 %3146
        %3148 = vrot.lane.b32.xlu0 %v3033, 127
        %v3149 = vpop.permute.xlu0 %3148
        %3150 = vrot.lane.b32.xlu0 %v3056, 127
        %v3151 = vpop.permute.xlu0 %3150
        %3152 = vrot.lane.b32.xlu0 %v3047, 127
        %v3153 = vpop.permute.xlu0 %3152
        %3154 = vrot.lane.b32.xlu0 %v3034, 127
        %v3155 = vpop.permute.xlu0 %3154
        %3156 = vrot.lane.b32.xlu0 %v3059, 127
        %v3157 = vpop.permute.xlu0 %3156
        %3158 = vrot.lane.b32.xlu0 %v3050, 127
        %v3159 = vpop.permute.xlu0 %3158
        %3160 = vrot.lane.b32.xlu0 %v3035, 127
        %v3161 = vpop.permute.xlu0 %3160
        %3162 = vrot.lane.b32.xlu0 %v3062, 127
        %v3163 = vpop.permute.xlu0 %3162
        %v3164 = vsel %vm630, %v3141, %v3143
        %v3165 = vsel %vm630, %v3143, %v3145
        %v3166 = vsel %vm630, %v3147, %v3149
        %v3167 = vsel %vm630, %v3149, %v3151
        %v3168 = vsel %vm630, %v3153, %v3155
        %v3169 = vsel %vm630, %v3155, %v3157
        %v3170 = vsel %vm630, %v3159, %v3161
        %v3171 = vsel %vm630, %v3161, %v3163
        %3192 = vrot.lane.b32.xlu0 %v3072, 126
        %v3193 = vpop.permute.xlu0 %3192
        %3194 = vrot.lane.b32.xlu0 %v3073, 126
        %v3195 = vpop.permute.xlu0 %3194
        %3196 = vrot.lane.b32.xlu0 %v3074, 126
        %v3197 = vpop.permute.xlu0 %3196
        %3198 = vrot.lane.b32.xlu0 %v3075, 126
        %v3199 = vpop.permute.xlu0 %3198
        %3200 = vrot.lane.b32.xlu0 %v3076, 126
        %v3201 = vpop.permute.xlu0 %3200
        %3202 = vrot.lane.b32.xlu0 %v3077, 126
        %v3203 = vpop.permute.xlu0 %3202
        %3204 = vrot.lane.b32.xlu0 %v3078, 126
        %v3205 = vpop.permute.xlu0 %3204
        %3206 = vrot.lane.b32.xlu0 %v3079, 126
        %v3207 = vpop.permute.xlu0 %3206
        %3208 = vrot.lane.b32.xlu0 %v3080, 126
        %v3209 = vpop.permute.xlu0 %3208
        %3210 = vrot.lane.b32.xlu0 %v3081, 126
        %v3211 = vpop.permute.xlu0 %3210
        %3212 = vrot.lane.b32.xlu0 %v3082, 126
        %v3213 = vpop.permute.xlu0 %3212
        %3214 = vrot.lane.b32.xlu0 %v3083, 126
        %v3215 = vpop.permute.xlu0 %3214
        %v3216 = vsel %vm642, %v3193, %v3195
        %v3217 = vsel %vm642, %v3195, %v3197
        %v3218 = vsel %vm642, %v3199, %v3201
        %v3219 = vsel %vm642, %v3201, %v3203
        %v3220 = vsel %vm642, %v3205, %v3207
        %v3221 = vsel %vm642, %v3207, %v3209
        %v3222 = vsel %vm642, %v3211, %v3213
        %v3223 = vsel %vm642, %v3213, %v3215
        %3244 = vrot.lane.b32.xlu0 %v3084, 112
        %v3245 = vpop.permute.xlu0 %3244
        %3246 = vrot.lane.b32.xlu0 %v3085, 112
        %v3247 = vpop.permute.xlu0 %3246
        %3248 = vrot.lane.b32.xlu0 %v3086, 112
        %v3249 = vpop.permute.xlu0 %3248
        %3250 = vrot.lane.b32.xlu0 %v3087, 112
        %v3251 = vpop.permute.xlu0 %3250
        %3252 = vrot.lane.b32.xlu0 %v3088, 112
        %v3253 = vpop.permute.xlu0 %3252
        %3254 = vrot.lane.b32.xlu0 %v3089, 112
        %v3255 = vpop.permute.xlu0 %3254
        %3256 = vrot.lane.b32.xlu0 %v3090, 112
        %v3257 = vpop.permute.xlu0 %3256
        %3258 = vrot.lane.b32.xlu0 %v3091, 112
        %v3259 = vpop.permute.xlu0 %3258
        %3260 = vrot.lane.b32.xlu0 %v3092, 112
        %v3261 = vpop.permute.xlu0 %3260
        %3262 = vrot.lane.b32.xlu0 %v3093, 112
        %v3263 = vpop.permute.xlu0 %3262
        %3264 = vrot.lane.b32.xlu0 %v3094, 112
        %v3265 = vpop.permute.xlu0 %3264
        %3266 = vrot.lane.b32.xlu0 %v3095, 112
        %v3267 = vpop.permute.xlu0 %3266
        %v3268 = vsel %vm657, %v3245, %v3247
        %v3269 = vsel %vm657, %v3247, %v3249
        %v3270 = vsel %vm657, %v3251, %v3253
        %v3271 = vsel %vm657, %v3253, %v3255
        %v3272 = vsel %vm657, %v3257, %v3259
        %v3273 = vsel %vm657, %v3259, %v3261
        %v3274 = vsel %vm657, %v3263, %v3265
        %v3275 = vsel %vm657, %v3265, %v3267
        %3284 = vrot.lane.b32.xlu0 %v3041, 111
        %v3285 = vpop.permute.xlu0 %3284
        %3286 = vrot.lane.b32.xlu0 %v3032, 111
        %v3287 = vpop.permute.xlu0 %3286
        %3288 = vrot.lane.b32.xlu0 %v3053, 111
        %v3289 = vpop.permute.xlu0 %3288
        %3290 = vrot.lane.b32.xlu0 %v3044, 111
        %v3291 = vpop.permute.xlu0 %3290
        %3292 = vrot.lane.b32.xlu0 %v3033, 111
        %v3293 = vpop.permute.xlu0 %3292
        %3294 = vrot.lane.b32.xlu0 %v3056, 111
        %v3295 = vpop.permute.xlu0 %3294
        %3296 = vrot.lane.b32.xlu0 %v3047, 111
        %v3297 = vpop.permute.xlu0 %3296
        %3298 = vrot.lane.b32.xlu0 %v3034, 111
        %v3299 = vpop.permute.xlu0 %3298
        %3300 = vrot.lane.b32.xlu0 %v3059, 111
        %v3301 = vpop.permute.xlu0 %3300
        %3302 = vrot.lane.b32.xlu0 %v3050, 111
        %v3303 = vpop.permute.xlu0 %3302
        %3304 = vrot.lane.b32.xlu0 %v3035, 111
        %v3305 = vpop.permute.xlu0 %3304
        %3306 = vrot.lane.b32.xlu0 %v3062, 111
        %v3307 = vpop.permute.xlu0 %3306
        %v3308 = vsel %vm666, %v3285, %v3287
        %v3309 = vsel %vm666, %v3287, %v3289
        %v3310 = vsel %vm666, %v3291, %v3293
        %v3311 = vsel %vm666, %v3293, %v3295
        %v3312 = vsel %vm666, %v3297, %v3299
        %v3313 = vsel %vm666, %v3299, %v3301
        %v3314 = vsel %vm666, %v3303, %v3305
        %v3315 = vsel %vm666, %v3305, %v3307
        %3336 = vrot.lane.b32.xlu0 %v3096, 110
        %v3337 = vpop.permute.xlu0 %3336
        %3338 = vrot.lane.b32.xlu0 %v3097, 110
        %v3339 = vpop.permute.xlu0 %3338
        %3340 = vrot.lane.b32.xlu0 %v3098, 110
        %v3341 = vpop.permute.xlu0 %3340
        %3342 = vrot.lane.b32.xlu0 %v3099, 110
        %v3343 = vpop.permute.xlu0 %3342
        %3344 = vrot.lane.b32.xlu0 %v3100, 110
        %v3345 = vpop.permute.xlu0 %3344
        %3346 = vrot.lane.b32.xlu0 %v3101, 110
        %v3347 = vpop.permute.xlu0 %3346
        %3348 = vrot.lane.b32.xlu0 %v3102, 110
        %v3349 = vpop.permute.xlu0 %3348
        %3350 = vrot.lane.b32.xlu0 %v3103, 110
        %v3351 = vpop.permute.xlu0 %3350
        %3352 = vrot.lane.b32.xlu0 %v3104, 110
        %v3353 = vpop.permute.xlu0 %3352
        %3354 = vrot.lane.b32.xlu0 %v3105, 110
        %v3355 = vpop.permute.xlu0 %3354
        %3356 = vrot.lane.b32.xlu0 %v3106, 110
        %v3357 = vpop.permute.xlu0 %3356
        %3358 = vrot.lane.b32.xlu0 %v3107, 110
        %v3359 = vpop.permute.xlu0 %3358
        %v3360 = vsel %vm681, %v3337, %v3339
        %v3361 = vsel %vm681, %v3339, %v3341
        %v3362 = vsel %vm681, %v3343, %v3345
        %v3363 = vsel %vm681, %v3345, %v3347
        %v3364 = vsel %vm681, %v3349, %v3351
        %v3365 = vsel %vm681, %v3351, %v3353
        %v3366 = vsel %vm681, %v3355, %v3357
        %v3367 = vsel %vm681, %v3357, %v3359
        %3388 = vrot.lane.b32.xlu0 %v3108, 96
        %v3389 = vpop.permute.xlu0 %3388
        %3390 = vrot.lane.b32.xlu0 %v3109, 96
        %v3391 = vpop.permute.xlu0 %3390
        %3392 = vrot.lane.b32.xlu0 %v3110, 96
        %v3393 = vpop.permute.xlu0 %3392
        %3394 = vrot.lane.b32.xlu0 %v3111, 96
        %v3395 = vpop.permute.xlu0 %3394
        %3396 = vrot.lane.b32.xlu0 %v3112, 96
        %v3397 = vpop.permute.xlu0 %3396
        %3398 = vrot.lane.b32.xlu0 %v3113, 96
        %v3399 = vpop.permute.xlu0 %3398
        %3400 = vrot.lane.b32.xlu0 %v3114, 96
        %v3401 = vpop.permute.xlu0 %3400
        %3402 = vrot.lane.b32.xlu0 %v3115, 96
        %v3403 = vpop.permute.xlu0 %3402
        %3404 = vrot.lane.b32.xlu0 %v3116, 96
        %v3405 = vpop.permute.xlu0 %3404
        %3406 = vrot.lane.b32.xlu0 %v3117, 96
        %v3407 = vpop.permute.xlu0 %3406
        %3408 = vrot.lane.b32.xlu0 %v3118, 96
        %v3409 = vpop.permute.xlu0 %3408
        %3410 = vrot.lane.b32.xlu0 %v3119, 96
        %v3411 = vpop.permute.xlu0 %3410
        %v3412 = vsel %vm693, %v3389, %v3391
        %v3413 = vsel %vm693, %v3391, %v3393
        %v3414 = vsel %vm693, %v3395, %v3397
        %v3415 = vsel %vm693, %v3397, %v3399
        %v3416 = vsel %vm693, %v3401, %v3403
        %v3417 = vsel %vm693, %v3403, %v3405
        %v3418 = vsel %vm693, %v3407, %v3409
        %v3419 = vsel %vm693, %v3409, %v3411
        %3428 = vrot.lane.b32.xlu0 %v3041, 95
        %v3429 = vpop.permute.xlu0 %3428
        %3430 = vrot.lane.b32.xlu0 %v3032, 95
        %v3431 = vpop.permute.xlu0 %3430
        %3432 = vrot.lane.b32.xlu0 %v3053, 95
        %v3433 = vpop.permute.xlu0 %3432
        %3434 = vrot.lane.b32.xlu0 %v3044, 95
        %v3435 = vpop.permute.xlu0 %3434
        %3436 = vrot.lane.b32.xlu0 %v3033, 95
        %v3437 = vpop.permute.xlu0 %3436
        %3438 = vrot.lane.b32.xlu0 %v3056, 95
        %v3439 = vpop.permute.xlu0 %3438
        %3440 = vrot.lane.b32.xlu0 %v3047, 95
        %v3441 = vpop.permute.xlu0 %3440
        %3442 = vrot.lane.b32.xlu0 %v3034, 95
        %v3443 = vpop.permute.xlu0 %3442
        %3444 = vrot.lane.b32.xlu0 %v3059, 95
        %v3445 = vpop.permute.xlu0 %3444
        %3446 = vrot.lane.b32.xlu0 %v3050, 95
        %v3447 = vpop.permute.xlu0 %3446
        %3448 = vrot.lane.b32.xlu0 %v3035, 95
        %v3449 = vpop.permute.xlu0 %3448
        %3450 = vrot.lane.b32.xlu0 %v3062, 95
        %v3451 = vpop.permute.xlu0 %3450
        %v3452 = vsel %vm702, %v3429, %v3431
        %v3453 = vsel %vm702, %v3431, %v3433
        %v3454 = vsel %vm702, %v3435, %v3437
        %v3455 = vsel %vm702, %v3437, %v3439
        %v3456 = vsel %vm702, %v3441, %v3443
        %v3457 = vsel %vm702, %v3443, %v3445
        %v3458 = vsel %vm702, %v3447, %v3449
        %v3459 = vsel %vm702, %v3449, %v3451
        %3480 = vrot.lane.b32.xlu0 %v3120, 94
        %v3481 = vpop.permute.xlu0 %3480
        %3482 = vrot.lane.b32.xlu0 %v3121, 94
        %v3483 = vpop.permute.xlu0 %3482
        %3484 = vrot.lane.b32.xlu0 %v3122, 94
        %v3485 = vpop.permute.xlu0 %3484
        %3486 = vrot.lane.b32.xlu0 %v3123, 94
        %v3487 = vpop.permute.xlu0 %3486
        %3488 = vrot.lane.b32.xlu0 %v3124, 94
        %v3489 = vpop.permute.xlu0 %3488
        %3490 = vrot.lane.b32.xlu0 %v3125, 94
        %v3491 = vpop.permute.xlu0 %3490
        %3492 = vrot.lane.b32.xlu0 %v3126, 94
        %v3493 = vpop.permute.xlu0 %3492
        %3494 = vrot.lane.b32.xlu0 %v3127, 94
        %v3495 = vpop.permute.xlu0 %3494
        %3496 = vrot.lane.b32.xlu0 %v3128, 94
        %v3497 = vpop.permute.xlu0 %3496
        %3498 = vrot.lane.b32.xlu0 %v3129, 94
        %v3499 = vpop.permute.xlu0 %3498
        %3500 = vrot.lane.b32.xlu0 %v3130, 94
        %v3501 = vpop.permute.xlu0 %3500
        %3502 = vrot.lane.b32.xlu0 %v3131, 94
        %v3503 = vpop.permute.xlu0 %3502
        %v3504 = vsel %vm714, %v3481, %v3483
        %v3505 = vsel %vm714, %v3483, %v3485
        %v3506 = vsel %vm714, %v3487, %v3489
        %v3507 = vsel %vm714, %v3489, %v3491
        %v3508 = vsel %vm714, %v3493, %v3495
        %v3509 = vsel %vm714, %v3495, %v3497
        %v3510 = vsel %vm714, %v3499, %v3501
        %v3511 = vsel %vm714, %v3501, %v3503
        %3521 = vset.pattern.permute.xlu0 0
        %3522 = vperm.xlu0 %3521, %v2983
        %v3523 = vpop.permute.xlu0 %3522
        %v3528 = vunpack.c.l.b16 %v2980
        %v3529 = vunpack.c.h.b16 %v2980
        %v3530 = vunpack.c.l.b16 %v2981
        %v3531 = vunpack.c.h.b16 %v2981
        %v3532 = vunpack.c.l.b16 %v2982
        %v3533 = vpack.c.b16 %v3528, %v3528
        %v3534 = vpack.c.b16 %v3529, %v3529
        %v3535 = vpack.c.b16 %v3530, %v3530
        %v3536 = vpack.c.b16 %v3531, %v3531
        %v3537 = vpack.c.b16 %v3532, %v3532
        %v3543 = vsel %vm1619, %v3537, 0
        %3545 = vmatpush.bf16.msra.mxu0 %v3170
        %3546 = vmatpush.bf16.msra.mxu0 %v3168
        %3547 = vmatpush.bf16.msra.mxu0 %v3166
        %3548 = vmatpush.bf16.msra.mxu0 %v3164
        %3549 = vmatpush.bf16.msra.mxu0 %v3070
        %3550 = vmatpush.bf16.msra.mxu0 %v3068
        %3551 = vmatpush.bf16.msra.mxu0 %v3066
        %3552 = vmatpush.bf16.msra.mxu0 %v3064
        %3553 = vmatmul.bf16.gmra.mxu0 %v3533
        %v3554 = vpop.f32.mrf.mxu0
        %v3555 = vadd.f32 %v3523, %v3554
        %v3556 = vpop.f32.mrf.mxu0
        %3557 = vdwg.mxu0
        %3558 = vmatpush.bf16.msra.mxu0 %v3274
        %3559 = vmatpush.bf16.msra.mxu0 %v3272
        %3560 = vmatpush.bf16.msra.mxu0 %v3270
        %3561 = vmatpush.bf16.msra.mxu0 %v3268
        %3562 = vmatpush.bf16.msra.mxu0 %v3222
        %3563 = vmatpush.bf16.msra.mxu0 %v3220
        %3564 = vmatpush.bf16.msra.mxu0 %v3218
        %3565 = vmatpush.bf16.msra.mxu0 %v3216
        %3566 = vmatmul.bf16.gmra.mxu0 %v3534
        %v3567 = vpop.f32.mrf.mxu0
        %v3568 = vadd.f32 %v3555, %v3567
        %v3569 = vpop.f32.mrf.mxu0
        %3570 = vdwg.mxu0
        %3571 = vmatpush.bf16.msra.mxu0 %v3366
        %3572 = vmatpush.bf16.msra.mxu0 %v3364
        %3573 = vmatpush.bf16.msra.mxu0 %v3362
        %3574 = vmatpush.bf16.msra.mxu0 %v3360
        %3575 = vmatpush.bf16.msra.mxu0 %v3314
        %3576 = vmatpush.bf16.msra.mxu0 %v3312
        %3577 = vmatpush.bf16.msra.mxu0 %v3310
        %3578 = vmatpush.bf16.msra.mxu0 %v3308
        %3579 = vmatmul.bf16.gmra.mxu0 %v3535
        %v3580 = vpop.f32.mrf.mxu0
        %v3581 = vadd.f32 %v3568, %v3580
        %v3582 = vpop.f32.mrf.mxu0
        %3583 = vdwg.mxu0
        %3584 = vmatpush.bf16.msra.mxu0 %v3458
        %3585 = vmatpush.bf16.msra.mxu0 %v3456
        %3586 = vmatpush.bf16.msra.mxu0 %v3454
        %3587 = vmatpush.bf16.msra.mxu0 %v3452
        %3588 = vmatpush.bf16.msra.mxu0 %v3418
        %3589 = vmatpush.bf16.msra.mxu0 %v3416
        %3590 = vmatpush.bf16.msra.mxu0 %v3414
        %3591 = vmatpush.bf16.msra.mxu0 %v3412
        %3592 = vmatmul.bf16.gmra.mxu0 %v3536
        %v3593 = vpop.f32.mrf.mxu0
        %v3594 = vadd.f32 %v3581, %v3593
        %v3595 = vpop.f32.mrf.mxu0
        %3596 = vdwg.mxu0
        %3597 = vmatpush.bf16.msra.mxu0 0
        %3598 = vmatpush.bf16.msra.mxu0 0
        %3599 = vmatpush.bf16.msra.mxu0 0
        %3600 = vmatpush.bf16.msra.mxu0 0
        %3601 = vmatpush.bf16.msra.mxu0 %v3510
        %3602 = vmatpush.bf16.msra.mxu0 %v3508
        %3603 = vmatpush.bf16.msra.mxu0 %v3506
        %3604 = vmatpush.bf16.msra.mxu0 %v3504
        %3605 = vmatmul.bf16.gmra.mxu0 %v3543
        %v3606 = vpop.f32.mrf.mxu0
        %v3607 = vadd.f32 %v3594, %v3606
        %v3608 = vpop.f32.mrf.mxu0
        %3609 = vdwg.mxu0
        %3610 = vmatpush.bf16.msra.mxu0 %v3171
        %3611 = vmatpush.bf16.msra.mxu0 %v3169
        %3612 = vmatpush.bf16.msra.mxu0 %v3167
        %3613 = vmatpush.bf16.msra.mxu0 %v3165
        %3614 = vmatpush.bf16.msra.mxu0 %v3071
        %3615 = vmatpush.bf16.msra.mxu0 %v3069
        %3616 = vmatpush.bf16.msra.mxu0 %v3067
        %3617 = vmatpush.bf16.msra.mxu0 %v3065
        %3618 = vmatmul.bf16.gmra.mxu0 %v3533
        %v3619 = vpop.f32.mrf.mxu0
        %v3620 = vadd.f32 %v3523, %v3619
        %v3621 = vpop.f32.mrf.mxu0
        %3622 = vdwg.mxu0
        %3623 = vmatpush.bf16.msra.mxu0 %v3275
        %3624 = vmatpush.bf16.msra.mxu0 %v3273
        %3625 = vmatpush.bf16.msra.mxu0 %v3271
        %3626 = vmatpush.bf16.msra.mxu0 %v3269
        %3627 = vmatpush.bf16.msra.mxu0 %v3223
        %3628 = vmatpush.bf16.msra.mxu0 %v3221
        %3629 = vmatpush.bf16.msra.mxu0 %v3219
        %3630 = vmatpush.bf16.msra.mxu0 %v3217
        %3631 = vmatmul.bf16.gmra.mxu0 %v3534
        %v3632 = vpop.f32.mrf.mxu0
        %v3633 = vadd.f32 %v3620, %v3632
        %v3634 = vpop.f32.mrf.mxu0
        %3635 = vdwg.mxu0
        %3636 = vmatpush.bf16.msra.mxu0 %v3367
        %3637 = vmatpush.bf16.msra.mxu0 %v3365
        %3638 = vmatpush.bf16.msra.mxu0 %v3363
        %3639 = vmatpush.bf16.msra.mxu0 %v3361
        %3640 = vmatpush.bf16.msra.mxu0 %v3315
        %3641 = vmatpush.bf16.msra.mxu0 %v3313
        %3642 = vmatpush.bf16.msra.mxu0 %v3311
        %3643 = vmatpush.bf16.msra.mxu0 %v3309
        %3644 = vmatmul.bf16.gmra.mxu0 %v3535
        %v3645 = vpop.f32.mrf.mxu0
        %v3646 = vadd.f32 %v3633, %v3645
        %v3647 = vpop.f32.mrf.mxu0
        %3648 = vdwg.mxu0
        %3649 = vmatpush.bf16.msra.mxu0 %v3459
        %3650 = vmatpush.bf16.msra.mxu0 %v3457
        %3651 = vmatpush.bf16.msra.mxu0 %v3455
        %3652 = vmatpush.bf16.msra.mxu0 %v3453
        %3653 = vmatpush.bf16.msra.mxu0 %v3419
        %3654 = vmatpush.bf16.msra.mxu0 %v3417
        %3655 = vmatpush.bf16.msra.mxu0 %v3415
        %3656 = vmatpush.bf16.msra.mxu0 %v3413
        %3657 = vmatmul.bf16.gmra.mxu0 %v3536
        %v3658 = vpop.f32.mrf.mxu0
        %v3659 = vadd.f32 %v3646, %v3658
        %v3660 = vpop.f32.mrf.mxu0
        %3661 = vdwg.mxu0
        %3662 = vmatpush.bf16.msra.mxu0 0
        %3663 = vmatpush.bf16.msra.mxu0 0
        %3664 = vmatpush.bf16.msra.mxu0 0
        %3665 = vmatpush.bf16.msra.mxu0 0
        %3666 = vmatpush.bf16.msra.mxu0 %v3511
        %3667 = vmatpush.bf16.msra.mxu0 %v3509
        %3668 = vmatpush.bf16.msra.mxu0 %v3507
        %3669 = vmatpush.bf16.msra.mxu0 %v3505
        %3670 = vmatmul.bf16.gmra.mxu0 %v3543
        %v3671 = vpop.f32.mrf.mxu0
        %v3672 = vadd.f32 %v3659, %v3671
        %v3673 = vpop.f32.mrf.mxu0
        %3674 = vdwg.mxu0
        %v3677 = vrot.slane %v3672, 4
        %v3678 = vsel %vm717, %v3607, %v3677
        %3680 = vst [vmem:[%s349] sm:$0x77] %v3678
        %p3681 = scmp.lt.s32.totalorder %s21, 1
        %s3682 = scalar_select %p3681, %s21, 1
        %s3683 = smul.addr %s3682, 2
        %s3684 = smul.addr %s3683, 4
        %s3685 = scalar_lea.vmem %s9, %s3684
        // Predicated region
        $region61: #{image_restoration_forward.1} parent=55 // pred_check
          %p3686 = pneg %p233
        $region62: #{image_restoration_forward.1} parent=55 // pred_check_branch
          %3688 = sbr.rel (%p3686) target = $region64
        $region63: #{image_restoration_forward.1} parent=55 // pred_region
          _
        $region64: #{image_restoration_forward.1} parent=55 // pred_fallthru
          _
      $region56: #{image_restoration_forward.1} parent=5 // pred_fallthru
        _
      %p3689 = scmp.le.s32.totalorder 2, %s16
      // Predicated region
      $region65: #{image_restoration_forward.1} parent=5 // pred_check
        %p3690 = pneg %p3689
      $region66: #{image_restoration_forward.1} parent=5 // pred_check_branch
        %3692 = sbr.rel (%p3690) target = $region68
      $region67: #{image_restoration_forward.1} parent=5 // pred_region
        %s3693 = ssub.s32 %s16, 2
        // Predicated region
        $region69: #{image_restoration_forward.1} parent=67 // pred_check
          %p3694 = pneg %p239
        $region70: #{image_restoration_forward.1} parent=67 // pred_check_branch
          %3696 = sbr.rel (%p3694) target = $region72
        $region71: #{image_restoration_forward.1} parent=67 // pred_region
          %p3697 = scmp.lt.s32.totalorder %s22, 1
          %s3698 = scalar_select %p3697, %s22, 1
          %s3699 = smul.addr %s3698, 2
          %s3700 = smul.addr %s3699, 4
          %s3701 = scalar_lea.vmem %s9, %s3700
        $region72: #{image_restoration_forward.1} parent=67 // pred_fallthru
          _
      $region68: #{image_restoration_forward.1} parent=5 // pred_fallthru
        _
    $region6: #{image_restoration_forward.1} parent=1 // loop_footer
      %s20 = sadd.s32 1, %s16
    $region7: #{image_restoration_forward.1} parent=1 // loop_footer_branch
      %15 = sbr.rel target = $region3
    $region8: #{image_restoration_forward.1} parent=1 // loop_exit
      _
    %3702 = vsyncpa [#allocation3], 1
    %s3703 = scalar_lea.sflag [#allocation3], 1
    %3704 = vsyncpa %s3703, 1

</llo_original>
